<compile_context>
chip_gen: v6e
topology: v6e:2x2x1
jax: 0.10.0
libtpu: 0.0.40
codegen_flags: <defaults>
</compile_context>

<pallas_src>
import math

import jax
import jax.numpy as jnp
from jax.experimental import pallas as pl
from jax.experimental.pallas import tpu as pltpu

WIDTH = 100    # hidden width of FCMethod
DEPTH = 6      # number of hidden Linear+ReLU blocks
IN_DIM = 2
OUT_DIM = 2

# lane-dense padded sizes (multiples of 128 -> aligned MXU matmuls, unmasked stores)
WIDTH_P = 128
IN_P = 128
OUT_P = 128

_PREC = jax.lax.Precision.HIGHEST  # full-f32 matmul passes on the MXU


def fc_mlp_kernel(x_ref, w0_ref, b0_ref, wmid_ref, bmid_ref, wl_ref, bl_ref, o_ref):
    """x_ref: (tm, IN_P) batch tile. All weights fully resident in VMEM."""
    h = jnp.dot(x_ref[...], w0_ref[...],
                preferred_element_type=jnp.float32, precision=_PREC)
    h = jnp.maximum(h + b0_ref[...], 0.0)
    for i in range(DEPTH):  # static unroll: 6 (tm,128)x(128,128) MXU matmuls
        h = jnp.dot(h, wmid_ref[i],
                    preferred_element_type=jnp.float32, precision=_PREC)
        h = jnp.maximum(h + bmid_ref[i], 0.0)
    o = jnp.dot(h, wl_ref[...],
                preferred_element_type=jnp.float32, precision=_PREC) + bl_ref[...]
    o_ref[...] = o.astype(o_ref.dtype)


def _choose_tile(bs, tm_max=512):
    """Large tiles to amortize per-step overhead; >=2 steps when possible (v7x)."""
    if bs > tm_max:
        return tm_max
    if bs >= 16 and bs % 16 == 0:
        return bs // 2  # keep two (or more) grid steps for the second TensorCore
    return bs           # small batch: single full-batch tile


def _pad_to(a, shape):
    pads = [(0, t - s) for s, t in zip(a.shape, shape)]
    return jnp.pad(a, pads)


def fc_method_forward(x, w0, b0, wmid, bmid, wl, bl, tm=None):
    """Pallas forward of FCMethod.

    x: (bs, 2); w0: (2, 100); b0: (100,); wmid: (6, 100, 100); bmid: (6, 100);
    wl: (100, 2); bl: (2,).  Returns (bs, 2).
    """
    bs = x.shape[0]
    tm = _choose_tile(bs) if tm is None else min(tm, bs)
    grid = (pl.cdiv(bs, tm),)

    f32 = jnp.float32
    x_p = _pad_to(x.astype(f32), (bs, IN_P))
    w0_p = _pad_to(w0.astype(f32), (IN_P, WIDTH_P))
    b0_p = _pad_to(b0.astype(f32).reshape(1, -1), (1, WIDTH_P))
    wmid_p = _pad_to(wmid.astype(f32), (DEPTH, WIDTH_P, WIDTH_P))
    bmid_p = _pad_to(bmid.astype(f32).reshape(DEPTH, 1, -1), (DEPTH, 1, WIDTH_P))
    wl_p = _pad_to(wl.astype(f32), (WIDTH_P, OUT_P))
    bl_p = _pad_to(bl.astype(f32).reshape(1, -1), (1, OUT_P))

    out_p = pl.pallas_call(
        fc_mlp_kernel,
        out_shape=jax.ShapeDtypeStruct((bs, OUT_P), f32),
        grid=grid,
        in_specs=[
            pl.BlockSpec((tm, IN_P), lambda i: (i, 0)),                    # x tile
            pl.BlockSpec((IN_P, WIDTH_P), lambda i: (0, 0)),               # w0 (resident)
            pl.BlockSpec((1, WIDTH_P), lambda i: (0, 0)),                  # b0
            pl.BlockSpec((DEPTH, WIDTH_P, WIDTH_P), lambda i: (0, 0, 0)),  # wmid stack
            pl.BlockSpec((DEPTH, 1, WIDTH_P), lambda i: (0, 0, 0)),        # bmid stack
            pl.BlockSpec((WIDTH_P, OUT_P), lambda i: (0, 0)),              # wl
            pl.BlockSpec((1, OUT_P), lambda i: (0, 0)),                    # bl
        ],
        out_specs=pl.BlockSpec((tm, OUT_P), lambda i: (i, 0)),
        compiler_params=pltpu.CompilerParams(
            dimension_semantics=("parallel",),
        ),
    )(x_p, w0_p, b0_p, wmid_p, bmid_p, wl_p, bl_p)

    return out_p[:, :OUT_DIM]


if __name__ == "__main__":
    key = jax.random.PRNGKey(0)
    k = jax.random.split(key, 4)
    bs = 8  # small batch for the smoke test

    x = jax.random.normal(k[0], (bs, IN_DIM), dtype=jnp.float32)
    # Xavier-normal weights, zero biases (matches FCMethod._init_weight)
    w0 = jax.random.normal(k[1], (IN_DIM, WIDTH), dtype=jnp.float32) * math.sqrt(
        2.0 / (IN_DIM + WIDTH))
    b0 = jnp.zeros((WIDTH,), jnp.float32)
    wmid = jax.random.normal(k[2], (DEPTH, WIDTH, WIDTH), dtype=jnp.float32) * math.sqrt(
        2.0 / (WIDTH + WIDTH))
    bmid = jnp.zeros((DEPTH, WIDTH), jnp.float32)
    wl = jax.random.normal(k[3], (WIDTH, OUT_DIM), dtype=jnp.float32) * math.sqrt(
        2.0 / (WIDTH + OUT_DIM))
    bl = jnp.zeros((OUT_DIM,), jnp.float32)

    y = fc_method_forward(x, w0, b0, wmid, bmid, wl, bl)
    y = jax.block_until_ready(y)

    # pure-JAX reference (same math as the PyTorch forward)
    h = jnp.maximum(jnp.dot(x, w0, precision=_PREC) + b0, 0.0)
    for i in range(DEPTH):
        h = jnp.maximum(jnp.dot(h, wmid[i], precision=_PREC) + bmid[i], 0.0)
    ref = jnp.dot(h, wl, precision=_PREC) + bl

    assert y.shape == (bs, OUT_DIM)
    assert jnp.allclose(y, ref, atol=2e-3, rtol=2e-3), (y, ref)

    print("KERNEL_OK")
</pallas_src>

<mosaic_0001>
module attributes {stable_mosaic.version = 11 : i64} {
  func.func @fc_mlp_kernel(%arg0: i32, %arg1: memref<8x128xf32, #tpu.memory_space<vmem>>, %arg2: memref<128x128xf32, #tpu.memory_space<vmem>>, %arg3: memref<1x128xf32, #tpu.memory_space<vmem>>, %arg4: memref<6x128x128xf32, #tpu.memory_space<vmem>>, %arg5: memref<6x1x128xf32, #tpu.memory_space<vmem>>, %arg6: memref<128x128xf32, #tpu.memory_space<vmem>>, %arg7: memref<1x128xf32, #tpu.memory_space<vmem>>, %arg8: memref<8x128xf32, #tpu.memory_space<vmem>>) attributes {dimension_semantics = [#tpu.dimension_semantics<parallel>], iteration_bounds = array<i64: 1>, scalar_prefetch = 0 : i64, scratch_operands = 0 : i64, tpu.core_type = #tpu.core_type<tc>, window_params = [{transform_indices = @transform_0, window_bounds = array<i64: 8, 128>}, {pipeline_mode = #tpu.pipeline_mode<synchronous>, transform_indices = @transform_1, window_bounds = array<i64: 128, 128>}, {pipeline_mode = #tpu.pipeline_mode<synchronous>, transform_indices = @transform_2, window_bounds = array<i64: 1, 128>}, {pipeline_mode = #tpu.pipeline_mode<synchronous>, transform_indices = @transform_3, window_bounds = array<i64: 6, 128, 128>}, {pipeline_mode = #tpu.pipeline_mode<synchronous>, transform_indices = @transform_4, window_bounds = array<i64: 6, 1, 128>}, {pipeline_mode = #tpu.pipeline_mode<synchronous>, transform_indices = @transform_5, window_bounds = array<i64: 128, 128>}, {pipeline_mode = #tpu.pipeline_mode<synchronous>, transform_indices = @transform_6, window_bounds = array<i64: 1, 128>}, {transform_indices = @transform_7, window_bounds = array<i64: 8, 128>}]} {
    %c0 = arith.constant 0 : index
    %c0_0 = arith.constant 0 : index
    %0 = vector.load %arg1[%c0, %c0_0] : memref<8x128xf32, #tpu.memory_space<vmem>>, vector<8x128xf32>
    %c0_1 = arith.constant 0 : index
    %c0_2 = arith.constant 0 : index
    %1 = vector.load %arg2[%c0_1, %c0_2] : memref<128x128xf32, #tpu.memory_space<vmem>>, vector<128x128xf32>
    %cst = arith.constant dense<0.000000e+00> : vector<8x128xf32>
    %2 = tpu.matmul %0, %1, %cst {dimension_numbers = #tpu.dot_dimension_numbers<[1], [0], [0], [1], [0, 0, 1, 1], [], []>, precision = #tpu.contract_precision<fp32>} : vector<8x128xf32>, vector<128x128xf32>, vector<8x128xf32> -> vector<8x128xf32>
    %c0_3 = arith.constant 0 : index
    %c0_4 = arith.constant 0 : index
    %3 = vector.load %arg3[%c0_3, %c0_4] : memref<1x128xf32, #tpu.memory_space<vmem>>, vector<1x128xf32>
    %4 = vector.broadcast %3 : vector<1x128xf32> to vector<8x128xf32>
    %5 = arith.addf %2, %4 : vector<8x128xf32>
    %cst_5 = arith.constant 0.000000e+00 : f32
    %6 = vector.broadcast %cst_5 : f32 to vector<8x128xf32>
    %7 = arith.maximumf %5, %6 : vector<8x128xf32>
    %c0_6 = arith.constant 0 : index
    %c0_7 = arith.constant 0 : index
    %c0_8 = arith.constant 0 : index
    %8 = vector.load %arg4[%c0_6, %c0_7, %c0_8] : memref<6x128x128xf32, #tpu.memory_space<vmem>>, vector<1x128x128xf32>
    %9 = vector.shape_cast %8 : vector<1x128x128xf32> to vector<128x128xf32>
    %cst_9 = arith.constant dense<0.000000e+00> : vector<8x128xf32>
    %10 = tpu.matmul %7, %9, %cst_9 {dimension_numbers = #tpu.dot_dimension_numbers<[1], [0], [0], [1], [0, 0, 1, 1], [], []>, precision = #tpu.contract_precision<fp32>} : vector<8x128xf32>, vector<128x128xf32>, vector<8x128xf32> -> vector<8x128xf32>
    %c0_10 = arith.constant 0 : index
    %c0_11 = arith.constant 0 : index
    %c0_12 = arith.constant 0 : index
    %11 = vector.load %arg5[%c0_10, %c0_11, %c0_12] : memref<6x1x128xf32, #tpu.memory_space<vmem>>, vector<1x1x128xf32>
    %12 = vector.shape_cast %11 : vector<1x1x128xf32> to vector<1x128xf32>
    %13 = vector.broadcast %12 : vector<1x128xf32> to vector<8x128xf32>
    %14 = arith.addf %10, %13 : vector<8x128xf32>
    %cst_13 = arith.constant 0.000000e+00 : f32
    %15 = vector.broadcast %cst_13 : f32 to vector<8x128xf32>
    %16 = arith.maximumf %14, %15 : vector<8x128xf32>
    %c1 = arith.constant 1 : index
    %c0_14 = arith.constant 0 : index
    %c0_15 = arith.constant 0 : index
    %17 = vector.load %arg4[%c1, %c0_14, %c0_15] : memref<6x128x128xf32, #tpu.memory_space<vmem>>, vector<1x128x128xf32>
    %18 = vector.shape_cast %17 : vector<1x128x128xf32> to vector<128x128xf32>
    %cst_16 = arith.constant dense<0.000000e+00> : vector<8x128xf32>
    %19 = tpu.matmul %16, %18, %cst_16 {dimension_numbers = #tpu.dot_dimension_numbers<[1], [0], [0], [1], [0, 0, 1, 1], [], []>, precision = #tpu.contract_precision<fp32>} : vector<8x128xf32>, vector<128x128xf32>, vector<8x128xf32> -> vector<8x128xf32>
    %c1_17 = arith.constant 1 : index
    %c0_18 = arith.constant 0 : index
    %c0_19 = arith.constant 0 : index
    %20 = vector.load %arg5[%c1_17, %c0_18, %c0_19] : memref<6x1x128xf32, #tpu.memory_space<vmem>>, vector<1x1x128xf32>
    %21 = vector.shape_cast %20 : vector<1x1x128xf32> to vector<1x128xf32>
    %22 = vector.broadcast %21 : vector<1x128xf32> to vector<8x128xf32>
    %23 = arith.addf %19, %22 : vector<8x128xf32>
    %cst_20 = arith.constant 0.000000e+00 : f32
    %24 = vector.broadcast %cst_20 : f32 to vector<8x128xf32>
    %25 = arith.maximumf %23, %24 : vector<8x128xf32>
    %c2 = arith.constant 2 : index
    %c0_21 = arith.constant 0 : index
    %c0_22 = arith.constant 0 : index
    %26 = vector.load %arg4[%c2, %c0_21, %c0_22] : memref<6x128x128xf32, #tpu.memory_space<vmem>>, vector<1x128x128xf32>
    %27 = vector.shape_cast %26 : vector<1x128x128xf32> to vector<128x128xf32>
    %cst_23 = arith.constant dense<0.000000e+00> : vector<8x128xf32>
    %28 = tpu.matmul %25, %27, %cst_23 {dimension_numbers = #tpu.dot_dimension_numbers<[1], [0], [0], [1], [0, 0, 1, 1], [], []>, precision = #tpu.contract_precision<fp32>} : vector<8x128xf32>, vector<128x128xf32>, vector<8x128xf32> -> vector<8x128xf32>
    %c2_24 = arith.constant 2 : index
    %c0_25 = arith.constant 0 : index
    %c0_26 = arith.constant 0 : index
    %29 = vector.load %arg5[%c2_24, %c0_25, %c0_26] : memref<6x1x128xf32, #tpu.memory_space<vmem>>, vector<1x1x128xf32>
    %30 = vector.shape_cast %29 : vector<1x1x128xf32> to vector<1x128xf32>
    %31 = vector.broadcast %30 : vector<1x128xf32> to vector<8x128xf32>
    %32 = arith.addf %28, %31 : vector<8x128xf32>
    %cst_27 = arith.constant 0.000000e+00 : f32
    %33 = vector.broadcast %cst_27 : f32 to vector<8x128xf32>
    %34 = arith.maximumf %32, %33 : vector<8x128xf32>
    %c3 = arith.constant 3 : index
    %c0_28 = arith.constant 0 : index
    %c0_29 = arith.constant 0 : index
    %35 = vector.load %arg4[%c3, %c0_28, %c0_29] : memref<6x128x128xf32, #tpu.memory_space<vmem>>, vector<1x128x128xf32>
    %36 = vector.shape_cast %35 : vector<1x128x128xf32> to vector<128x128xf32>
    %cst_30 = arith.constant dense<0.000000e+00> : vector<8x128xf32>
    %37 = tpu.matmul %34, %36, %cst_30 {dimension_numbers = #tpu.dot_dimension_numbers<[1], [0], [0], [1], [0, 0, 1, 1], [], []>, precision = #tpu.contract_precision<fp32>} : vector<8x128xf32>, vector<128x128xf32>, vector<8x128xf32> -> vector<8x128xf32>
    %c3_31 = arith.constant 3 : index
    %c0_32 = arith.constant 0 : index
    %c0_33 = arith.constant 0 : index
    %38 = vector.load %arg5[%c3_31, %c0_32, %c0_33] : memref<6x1x128xf32, #tpu.memory_space<vmem>>, vector<1x1x128xf32>
    %39 = vector.shape_cast %38 : vector<1x1x128xf32> to vector<1x128xf32>
    %40 = vector.broadcast %39 : vector<1x128xf32> to vector<8x128xf32>
    %41 = arith.addf %37, %40 : vector<8x128xf32>
    %cst_34 = arith.constant 0.000000e+00 : f32
    %42 = vector.broadcast %cst_34 : f32 to vector<8x128xf32>
    %43 = arith.maximumf %41, %42 : vector<8x128xf32>
    %c4 = arith.constant 4 : index
    %c0_35 = arith.constant 0 : index
    %c0_36 = arith.constant 0 : index
    %44 = vector.load %arg4[%c4, %c0_35, %c0_36] : memref<6x128x128xf32, #tpu.memory_space<vmem>>, vector<1x128x128xf32>
    %45 = vector.shape_cast %44 : vector<1x128x128xf32> to vector<128x128xf32>
    %cst_37 = arith.constant dense<0.000000e+00> : vector<8x128xf32>
    %46 = tpu.matmul %43, %45, %cst_37 {dimension_numbers = #tpu.dot_dimension_numbers<[1], [0], [0], [1], [0, 0, 1, 1], [], []>, precision = #tpu.contract_precision<fp32>} : vector<8x128xf32>, vector<128x128xf32>, vector<8x128xf32> -> vector<8x128xf32>
    %c4_38 = arith.constant 4 : index
    %c0_39 = arith.constant 0 : index
    %c0_40 = arith.constant 0 : index
    %47 = vector.load %arg5[%c4_38, %c0_39, %c0_40] : memref<6x1x128xf32, #tpu.memory_space<vmem>>, vector<1x1x128xf32>
    %48 = vector.shape_cast %47 : vector<1x1x128xf32> to vector<1x128xf32>
    %49 = vector.broadcast %48 : vector<1x128xf32> to vector<8x128xf32>
    %50 = arith.addf %46, %49 : vector<8x128xf32>
    %cst_41 = arith.constant 0.000000e+00 : f32
    %51 = vector.broadcast %cst_41 : f32 to vector<8x128xf32>
    %52 = arith.maximumf %50, %51 : vector<8x128xf32>
    %c5 = arith.constant 5 : index
    %c0_42 = arith.constant 0 : index
    %c0_43 = arith.constant 0 : index
    %53 = vector.load %arg4[%c5, %c0_42, %c0_43] : memref<6x128x128xf32, #tpu.memory_space<vmem>>, vector<1x128x128xf32>
    %54 = vector.shape_cast %53 : vector<1x128x128xf32> to vector<128x128xf32>
    %cst_44 = arith.constant dense<0.000000e+00> : vector<8x128xf32>
    %55 = tpu.matmul %52, %54, %cst_44 {dimension_numbers = #tpu.dot_dimension_numbers<[1], [0], [0], [1], [0, 0, 1, 1], [], []>, precision = #tpu.contract_precision<fp32>} : vector<8x128xf32>, vector<128x128xf32>, vector<8x128xf32> -> vector<8x128xf32>
    %c5_45 = arith.constant 5 : index
    %c0_46 = arith.constant 0 : index
    %c0_47 = arith.constant 0 : index
    %56 = vector.load %arg5[%c5_45, %c0_46, %c0_47] : memref<6x1x128xf32, #tpu.memory_space<vmem>>, vector<1x1x128xf32>
    %57 = vector.shape_cast %56 : vector<1x1x128xf32> to vector<1x128xf32>
    %58 = vector.broadcast %57 : vector<1x128xf32> to vector<8x128xf32>
    %59 = arith.addf %55, %58 : vector<8x128xf32>
    %cst_48 = arith.constant 0.000000e+00 : f32
    %60 = vector.broadcast %cst_48 : f32 to vector<8x128xf32>
    %61 = arith.maximumf %59, %60 : vector<8x128xf32>
    %c0_49 = arith.constant 0 : index
    %c0_50 = arith.constant 0 : index
    %62 = vector.load %arg6[%c0_49, %c0_50] : memref<128x128xf32, #tpu.memory_space<vmem>>, vector<128x128xf32>
    %cst_51 = arith.constant dense<0.000000e+00> : vector<8x128xf32>
    %63 = tpu.matmul %61, %62, %cst_51 {dimension_numbers = #tpu.dot_dimension_numbers<[1], [0], [0], [1], [0, 0, 1, 1], [], []>, precision = #tpu.contract_precision<fp32>} : vector<8x128xf32>, vector<128x128xf32>, vector<8x128xf32> -> vector<8x128xf32>
    %c0_52 = arith.constant 0 : index
    %c0_53 = arith.constant 0 : index
    %64 = vector.load %arg7[%c0_52, %c0_53] : memref<1x128xf32, #tpu.memory_space<vmem>>, vector<1x128xf32>
    %65 = vector.broadcast %64 : vector<1x128xf32> to vector<8x128xf32>
    %66 = arith.addf %63, %65 : vector<8x128xf32>
    %c0_54 = arith.constant 0 : index
    %c0_55 = arith.constant 0 : index
    %67 = vector.load %arg8[%c0_54, %c0_55] : memref<8x128xf32, #tpu.memory_space<vmem>>, vector<8x128xf32>
    tpu.vector_store %arg8[%c0_54, %c0_55], %66 {strides = array<i32>} : memref<8x128xf32, #tpu.memory_space<vmem>>, vector<8x128xf32>,
    return
  }
  func.func @transform_0(%arg0: i32) -> (i32, i32) {
    %c0_i32 = arith.constant 0 : i32
    %c0_i32_0 = arith.constant 0 : i32
    return %arg0, %c0_i32 : i32, i32
  }
  func.func @transform_1(%arg0: i32) -> (i32, i32) {
    %c0_i32 = arith.constant 0 : i32
    %c0_i32_0 = arith.constant 0 : i32
    %c0_i32_1 = arith.constant 0 : i32
    return %c0_i32, %c0_i32_0 : i32, i32
  }
  func.func @transform_2(%arg0: i32) -> (i32, i32) {
    %c0_i32 = arith.constant 0 : i32
    %c0_i32_0 = arith.constant 0 : i32
    %c0_i32_1 = arith.constant 0 : i32
    return %c0_i32, %c0_i32_0 : i32, i32
  }
  func.func @transform_3(%arg0: i32) -> (i32, i32, i32) {
    %c0_i32 = arith.constant 0 : i32
    %c0_i32_0 = arith.constant 0 : i32
    %c0_i32_1 = arith.constant 0 : i32
    %c0_i32_2 = arith.constant 0 : i32
    return %c0_i32, %c0_i32_0, %c0_i32_1 : i32, i32, i32
  }
  func.func @transform_4(%arg0: i32) -> (i32, i32, i32) {
    %c0_i32 = arith.constant 0 : i32
    %c0_i32_0 = arith.constant 0 : i32
    %c0_i32_1 = arith.constant 0 : i32
    %c0_i32_2 = arith.constant 0 : i32
    return %c0_i32, %c0_i32_0, %c0_i32_1 : i32, i32, i32
  }
  func.func @transform_5(%arg0: i32) -> (i32, i32) {
    %c0_i32 = arith.constant 0 : i32
    %c0_i32_0 = arith.constant 0 : i32
    %c0_i32_1 = arith.constant 0 : i32
    return %c0_i32, %c0_i32_0 : i32, i32
  }
  func.func @transform_6(%arg0: i32) -> (i32, i32) {
    %c0_i32 = arith.constant 0 : i32
    %c0_i32_0 = arith.constant 0 : i32
    %c0_i32_1 = arith.constant 0 : i32
    return %c0_i32, %c0_i32_0 : i32, i32
  }
  func.func @transform_7(%arg0: i32) -> (i32, i32) {
    %c0_i32 = arith.constant 0 : i32
    %c0_i32_0 = arith.constant 0 : i32
    return %arg0, %c0_i32 : i32, i32
  }
}

</mosaic_0001>

<llo_original>
// kernel: tpu_custom_call.1
$region0: #{tpu_custom_call.1}
  #allocation0 [shape = 'u32[]', space=smem, size = 0x4, offset = 0x4, fixed_abs, tag = 'smem constant byte address 0x4 - core index']
  #allocation1 [shape = 'u32[144,128]{1,0:T(1,128)}', space=vmem, size = 0x12000, scoped, tag = 'internal scratch']
  %s0 = inlined_call_operand.hbm [shape: f32[8,128], index: 0, kind: input, shape index: {}]
  %s1 = inlined_call_operand.hbm [shape: f32[128,128], index: 1, kind: input, shape index: {}]
  %s2 = inlined_call_operand.vmem [shape: f32[1,128], index: 2, kind: input, shape index: {}]
  %s3 = inlined_call_operand.hbm [shape: f32[6,128,128], index: 3, kind: input, shape index: {}]
  %s4 = inlined_call_operand.vmem [shape: f32[6,1,128], index: 4, kind: input, shape index: {}]
  %s5 = inlined_call_operand.hbm [shape: f32[128,128], index: 5, kind: input, shape index: {}]
  %s6 = inlined_call_operand.vmem [shape: f32[1,128], index: 6, kind: input, shape index: {}]
  %s7 = inlined_call_operand.hbm [shape: f32[8,128], index: 7, kind: output, shape index: {}]
  %s8 = sld [smem:[#allocation0]]
  $region54: #{tpu_custom_call.1} parent=0
    _
  %s10 = ssub.s32 1, %s8
  %s11 = scalar_select 0, %s10, %s8
  $region1: #{tpu_custom_call.1} parent=0
    #allocation2 [shape = 'u8[4096]{0}', space=vmem, size = 0x1000, scoped, tag = 'input window, operand 0, single buffered']
    #allocation3 [shape = 's32[1]{0}', space=sflag, size = 0x4, scoped, tag = 'scoped memory for tpu_custom_call.1']
    #allocation4 [shape = 's32[1]{0}', space=sflag, size = 0x4, scoped, tag = 'scoped memory for tpu_custom_call.1']
    #allocation5 [shape = 'u8[65536]{0}', space=vmem, size = 0x10000, scoped, tag = 'input window, operand 1, single buffered']
    #allocation6 [shape = 's32[1]{0}', space=sflag, size = 0x4, scoped, tag = 'scoped memory for tpu_custom_call.1']
    #allocation7 [shape = 'u8[393216]{0}', space=vmem, size = 0x60000, scoped, tag = 'input window, operand 3, single buffered']
    #allocation8 [shape = 'u8[65536]{0}', space=vmem, size = 0x10000, scoped, tag = 'input window, operand 5, single buffered']
    #allocation9 [shape = 's32[1]{0}', space=sflag, size = 0x4, scoped, tag = 'scoped memory for tpu_custom_call.1']
    #allocation10 [shape = 'u8[4096]{0}', space=vmem, size = 0x1000, scoped, tag = 'output window, operand 0, single buffered']
    %12 = vsyncpa [#allocation3], 0
    %13 = vsyncpa [#allocation6], 0
    %14 = vsyncpa [#allocation9], 0
    %15 = vsyncpa [#allocation4], 0
    // Predicated region
    $region2: #{tpu_custom_call.1} parent=1 // pred_check
      _
    $region3: #{tpu_custom_call.1} parent=1 // pred_check_branch
      %17 = sbr.rel (0) target = $region5
    $region4: #{tpu_custom_call.1} parent=1 // pred_region
      %s19 = ssub.s32 128, 128
      %20 = vsyncadd [#allocation3], %s19
      %s22 = sshll.u32 [#allocation2], 4
      %s23 = int_to_ptr.vmem [resolvable:$true] %s22
      %25 = dma.hbm_to_vmem [thread:$0]  %s0, 128, %s23, [#allocation3]
    $region5: #{tpu_custom_call.1} parent=1 // pred_fallthru
      _
    // Predicated region
    $region6: #{tpu_custom_call.1} parent=1 // pred_check
      _
    $region7: #{tpu_custom_call.1} parent=1 // pred_check_branch
      %27 = sbr.rel (0) target = $region9
    $region8: #{tpu_custom_call.1} parent=1 // pred_region
      %s29 = ssub.s32 2048, 2048
      %30 = vsyncadd [#allocation6], %s29
      %s31 = sshll.u32 [#allocation5], 4
      %s32 = int_to_ptr.vmem [resolvable:$true] %s31
      %37 = dma.hbm_to_vmem [thread:$0]  %s1, 2048, %s32, [#allocation6], 128, 128, 8
    $region9: #{tpu_custom_call.1} parent=1 // pred_fallthru
      _
    // Predicated region
    $region10: #{tpu_custom_call.1} parent=1 // pred_check
      _
    $region11: #{tpu_custom_call.1} parent=1 // pred_check_branch
      %39 = sbr.rel (0) target = $region13
    $region12: #{tpu_custom_call.1} parent=1 // pred_region
      _
    $region13: #{tpu_custom_call.1} parent=1 // pred_fallthru
      _
    // Predicated region
    $region14: #{tpu_custom_call.1} parent=1 // pred_check
      _
    $region15: #{tpu_custom_call.1} parent=1 // pred_check_branch
      %41 = sbr.rel (0) target = $region17
    $region16: #{tpu_custom_call.1} parent=1 // pred_region
      %s43 = ssub.s32 12288, 12288
      %44 = vsyncadd [#allocation6], %s43
      %s45 = sshll.u32 [#allocation7], 4
      %s46 = int_to_ptr.vmem [resolvable:$true] %s45
      %51 = dma.hbm_to_vmem [thread:$0]  %s3, 12288, %s46, [#allocation6], 128, 128, 8
    $region17: #{tpu_custom_call.1} parent=1 // pred_fallthru
      _
    // Predicated region
    $region18: #{tpu_custom_call.1} parent=1 // pred_check
      _
    $region19: #{tpu_custom_call.1} parent=1 // pred_check_branch
      %53 = sbr.rel (0) target = $region21
    $region20: #{tpu_custom_call.1} parent=1 // pred_region
      _
    $region21: #{tpu_custom_call.1} parent=1 // pred_fallthru
      _
    // Predicated region
    $region22: #{tpu_custom_call.1} parent=1 // pred_check
      _
    $region23: #{tpu_custom_call.1} parent=1 // pred_check_branch
      %55 = sbr.rel (0) target = $region25
    $region24: #{tpu_custom_call.1} parent=1 // pred_region
      %s57 = ssub.s32 2048, 2048
      %58 = vsyncadd [#allocation9], %s57
      %s59 = sshll.u32 [#allocation8], 4
      %s60 = int_to_ptr.vmem [resolvable:$true] %s59
      %65 = dma.hbm_to_vmem [thread:$0]  %s5, 2048, %s60, [#allocation9], 128, 128, 8
    $region25: #{tpu_custom_call.1} parent=1 // pred_fallthru
      _
    // Predicated region
    $region26: #{tpu_custom_call.1} parent=1 // pred_check
      _
    $region27: #{tpu_custom_call.1} parent=1 // pred_check_branch
      %67 = sbr.rel (0) target = $region29
    $region28: #{tpu_custom_call.1} parent=1 // pred_region
      _
    $region29: #{tpu_custom_call.1} parent=1 // pred_fallthru
      _
    // Predicated region
    $region30: #{tpu_custom_call.1} parent=1 // pred_check
      _
    $region31: #{tpu_custom_call.1} parent=1 // pred_check_branch
      %69 = sbr.rel (0) target = $region33
    $region32: #{tpu_custom_call.1} parent=1 // pred_region
      %70 = dma.done [#allocation3], 128
    $region33: #{tpu_custom_call.1} parent=1 // pred_fallthru
      _
    // Predicated region
    $region34: #{tpu_custom_call.1} parent=1 // pred_check
      _
    $region35: #{tpu_custom_call.1} parent=1 // pred_check_branch
      %72 = sbr.rel (0) target = $region37
    $region36: #{tpu_custom_call.1} parent=1 // pred_region
      %73 = dma.done [#allocation6], 2048
    $region37: #{tpu_custom_call.1} parent=1 // pred_fallthru
      _
    // Predicated region
    $region38: #{tpu_custom_call.1} parent=1 // pred_check
      _
    $region39: #{tpu_custom_call.1} parent=1 // pred_check_branch
      %75 = sbr.rel (0) target = $region41
    $region40: #{tpu_custom_call.1} parent=1 // pred_region
      %76 = dma.done [#allocation6], 12288
    $region41: #{tpu_custom_call.1} parent=1 // pred_fallthru
      _
    // Predicated region
    $region42: #{tpu_custom_call.1} parent=1 // pred_check
      _
    $region43: #{tpu_custom_call.1} parent=1 // pred_check_branch
      %78 = sbr.rel (0) target = $region45
    $region44: #{tpu_custom_call.1} parent=1 // pred_region
      %79 = dma.done [#allocation9], 2048
    $region45: #{tpu_custom_call.1} parent=1 // pred_fallthru
      _
    %v80 = vld [vmem:[#allocation2] sm:$0xff]
    %v81 = vld [vmem:[#allocation5] sm:$0xff]
    %v82 = vld [vmem:[#allocation5 + $0x8] sm:$0xff]
    %v83 = vld [vmem:[#allocation5 + $0x10] sm:$0xff]
    %v84 = vld [vmem:[#allocation5 + $0x18] sm:$0xff]
    %v85 = vld [vmem:[#allocation5 + $0x20] sm:$0xff]
    %v86 = vld [vmem:[#allocation5 + $0x28] sm:$0xff]
    %v87 = vld [vmem:[#allocation5 + $0x30] sm:$0xff]
    %v88 = vld [vmem:[#allocation5 + $0x38] sm:$0xff]
    %v89 = vld [vmem:[#allocation5 + $0x40] sm:$0xff]
    %v90 = vld [vmem:[#allocation5 + $0x48] sm:$0xff]
    %v91 = vld [vmem:[#allocation5 + $0x50] sm:$0xff]
    %v92 = vld [vmem:[#allocation5 + $0x58] sm:$0xff]
    %v93 = vld [vmem:[#allocation5 + $0x60] sm:$0xff]
    %v94 = vld [vmem:[#allocation5 + $0x68] sm:$0xff]
    %v95 = vld [vmem:[#allocation5 + $0x70] sm:$0xff]
    %v96 = vld [vmem:[#allocation5 + $0x78] sm:$0xff]
    %v97 = vld [vmem:[%s2] sm:$0x1]
    %v99 = vlaneseq
    %v100 = vshrl.u32 %v99, 7
    %v101 = vsub.s32 0, %v100
    %v102 = vrot.slane %v97, %v101
    %104 = vmatprep.subr.mxu0 0.0
    %v105 = vand.u32 %v96, 4294901760
    %106 = vmatpush1.msra.mxu0 %v105
    %107 = vmatprep.subr.mxu0 0.0
    %v108 = vand.u32 %v95, 4294901760
    %109 = vmatpush1.msra.mxu0 %v108
    %110 = vmatprep.subr.mxu0 0.0
    %v111 = vand.u32 %v94, 4294901760
    %112 = vmatpush1.msra.mxu0 %v111
    %113 = vmatprep.subr.mxu0 0.0
    %v114 = vand.u32 %v93, 4294901760
    %115 = vmatpush1.msra.mxu0 %v114
    %116 = vmatprep.subr.mxu0 0.0
    %v117 = vand.u32 %v92, 4294901760
    %118 = vmatpush1.msra.mxu0 %v117
    %119 = vmatprep.subr.mxu0 0.0
    %v120 = vand.u32 %v91, 4294901760
    %121 = vmatpush1.msra.mxu0 %v120
    %122 = vmatprep.subr.mxu0 0.0
    %v123 = vand.u32 %v90, 4294901760
    %124 = vmatpush1.msra.mxu0 %v123
    %125 = vmatprep.subr.mxu0 0.0
    %v126 = vand.u32 %v89, 4294901760
    %127 = vmatpush1.msra.mxu0 %v126
    %128 = vmatprep.subr.mxu0 0.0
    %v129 = vand.u32 %v88, 4294901760
    %130 = vmatpush1.msra.mxu0 %v129
    %131 = vmatprep.subr.mxu0 0.0
    %v132 = vand.u32 %v87, 4294901760
    %133 = vmatpush1.msra.mxu0 %v132
    %134 = vmatprep.subr.mxu0 0.0
    %v135 = vand.u32 %v86, 4294901760
    %136 = vmatpush1.msra.mxu0 %v135
    %137 = vmatprep.subr.mxu0 0.0
    %v138 = vand.u32 %v85, 4294901760
    %139 = vmatpush1.msra.mxu0 %v138
    %140 = vmatprep.subr.mxu0 0.0
    %v141 = vand.u32 %v84, 4294901760
    %142 = vmatpush1.msra.mxu0 %v141
    %143 = vmatprep.subr.mxu0 0.0
    %v144 = vand.u32 %v83, 4294901760
    %145 = vmatpush1.msra.mxu0 %v144
    %146 = vmatprep.subr.mxu0 0.0
    %v147 = vand.u32 %v82, 4294901760
    %148 = vmatpush1.msra.mxu0 %v147
    %149 = vmatprep.subr.mxu0 0.0
    %v150 = vand.u32 %v81, 4294901760
    %151 = vmatpush1.msra.mxu0 %v150
    %152 = vmatprep.subr.mxu0 0.0
    %153 = vmatpush2.msra.mxu0 0.0
    %154 = vmatprep.subr.mxu0 0.0
    %155 = vmatpush2.msra.mxu0 0.0
    %156 = vmatprep.subr.mxu0 0.0
    %157 = vmatpush2.msra.mxu0 0.0
    %158 = vmatprep.subr.mxu0 0.0
    %159 = vmatpush2.msra.mxu0 0.0
    %160 = vmatprep.subr.mxu0 0.0
    %161 = vmatpush2.msra.mxu0 0.0
    %162 = vmatprep.subr.mxu0 0.0
    %163 = vmatpush2.msra.mxu0 0.0
    %164 = vmatprep.subr.mxu0 0.0
    %165 = vmatpush2.msra.mxu0 0.0
    %166 = vmatprep.subr.mxu0 0.0
    %167 = vmatpush2.msra.mxu0 0.0
    %168 = vmatprep.subr.mxu0 0.0
    %169 = vmatpush2.msra.mxu0 0.0
    %170 = vmatprep.subr.mxu0 0.0
    %171 = vmatpush2.msra.mxu0 0.0
    %172 = vmatprep.subr.mxu0 0.0
    %173 = vmatpush2.msra.mxu0 0.0
    %174 = vmatprep.subr.mxu0 0.0
    %175 = vmatpush2.msra.mxu0 0.0
    %176 = vmatprep.subr.mxu0 0.0
    %177 = vmatpush2.msra.mxu0 0.0
    %178 = vmatprep.subr.mxu0 0.0
    %179 = vmatpush2.msra.mxu0 0.0
    %180 = vmatprep.subr.mxu0 0.0
    %181 = vmatpush2.msra.mxu0 0.0
    %182 = vmatprep.subr.mxu0 0.0
    %183 = vmatpush2.msra.mxu0 0.0
    %184 = vmatprep.mubr.f32.mxu0 0.0
    %v185 = vand.u32 %v80, 4294901760
    %v186 = vsub.f32 %v80, %v185
    %v187 = vand.u32 %v186, 4294901760
    %v188 = vsub.f32 %v186, %v187
    %v189 = vand.u32 %v188, 4294901760
    %190 = vmatmul.mubr.f32.gmra.mxu0 %v189
    %v191 = vpop.f32.mrf.mxu0
    %v192 = vadd.f32 %v102, %v191
    %v193 = vpop.f32.mrf.mxu0
    %194 = vdwg.mxu0
    %195 = vmatprep.subr.mxu0 0.0
    %v196 = vand.u32 %v96, 4294901760
    %v197 = vsub.f32 %v96, %v196
    %v198 = vand.u32 %v197, 4294901760
    %v199 = vsub.f32 %v197, %v198
    %v200 = vand.u32 %v199, 4294901760
    %201 = vmatpush1.msra.mxu0 %v200
    %202 = vmatprep.subr.mxu0 0.0
    %v203 = vand.u32 %v95, 4294901760
    %v204 = vsub.f32 %v95, %v203
    %v205 = vand.u32 %v204, 4294901760
    %v206 = vsub.f32 %v204, %v205
    %v207 = vand.u32 %v206, 4294901760
    %208 = vmatpush1.msra.mxu0 %v207
    %209 = vmatprep.subr.mxu0 0.0
    %v210 = vand.u32 %v94, 4294901760
    %v211 = vsub.f32 %v94, %v210
    %v212 = vand.u32 %v211, 4294901760
    %v213 = vsub.f32 %v211, %v212
    %v214 = vand.u32 %v213, 4294901760
    %215 = vmatpush1.msra.mxu0 %v214
    %216 = vmatprep.subr.mxu0 0.0
    %v217 = vand.u32 %v93, 4294901760
    %v218 = vsub.f32 %v93, %v217
    %v219 = vand.u32 %v218, 4294901760
    %v220 = vsub.f32 %v218, %v219
    %v221 = vand.u32 %v220, 4294901760
    %222 = vmatpush1.msra.mxu0 %v221
    %223 = vmatprep.subr.mxu0 0.0
    %v224 = vand.u32 %v92, 4294901760
    %v225 = vsub.f32 %v92, %v224
    %v226 = vand.u32 %v225, 4294901760
    %v227 = vsub.f32 %v225, %v226
    %v228 = vand.u32 %v227, 4294901760
    %229 = vmatpush1.msra.mxu0 %v228
    %230 = vmatprep.subr.mxu0 0.0
    %v231 = vand.u32 %v91, 4294901760
    %v232 = vsub.f32 %v91, %v231
    %v233 = vand.u32 %v232, 4294901760
    %v234 = vsub.f32 %v232, %v233
    %v235 = vand.u32 %v234, 4294901760
    %236 = vmatpush1.msra.mxu0 %v235
    %237 = vmatprep.subr.mxu0 0.0
    %v238 = vand.u32 %v90, 4294901760
    %v239 = vsub.f32 %v90, %v238
    %v240 = vand.u32 %v239, 4294901760
    %v241 = vsub.f32 %v239, %v240
    %v242 = vand.u32 %v241, 4294901760
    %243 = vmatpush1.msra.mxu0 %v242
    %244 = vmatprep.subr.mxu0 0.0
    %v245 = vand.u32 %v89, 4294901760
    %v246 = vsub.f32 %v89, %v245
    %v247 = vand.u32 %v246, 4294901760
    %v248 = vsub.f32 %v246, %v247
    %v249 = vand.u32 %v248, 4294901760
    %250 = vmatpush1.msra.mxu0 %v249
    %251 = vmatprep.subr.mxu0 0.0
    %v252 = vand.u32 %v88, 4294901760
    %v253 = vsub.f32 %v88, %v252
    %v254 = vand.u32 %v253, 4294901760
    %v255 = vsub.f32 %v253, %v254
    %v256 = vand.u32 %v255, 4294901760
    %257 = vmatpush1.msra.mxu0 %v256
    %258 = vmatprep.subr.mxu0 0.0
    %v259 = vand.u32 %v87, 4294901760
    %v260 = vsub.f32 %v87, %v259
    %v261 = vand.u32 %v260, 4294901760
    %v262 = vsub.f32 %v260, %v261
    %v263 = vand.u32 %v262, 4294901760
    %264 = vmatpush1.msra.mxu0 %v263
    %265 = vmatprep.subr.mxu0 0.0
    %v266 = vand.u32 %v86, 4294901760
    %v267 = vsub.f32 %v86, %v266
    %v268 = vand.u32 %v267, 4294901760
    %v269 = vsub.f32 %v267, %v268
    %v270 = vand.u32 %v269, 4294901760
    %271 = vmatpush1.msra.mxu0 %v270
    %272 = vmatprep.subr.mxu0 0.0
    %v273 = vand.u32 %v85, 4294901760
    %v274 = vsub.f32 %v85, %v273
    %v275 = vand.u32 %v274, 4294901760
    %v276 = vsub.f32 %v274, %v275
    %v277 = vand.u32 %v276, 4294901760
    %278 = vmatpush1.msra.mxu0 %v277
    %279 = vmatprep.subr.mxu0 0.0
    %v280 = vand.u32 %v84, 4294901760
    %v281 = vsub.f32 %v84, %v280
    %v282 = vand.u32 %v281, 4294901760
    %v283 = vsub.f32 %v281, %v282
    %v284 = vand.u32 %v283, 4294901760
    %285 = vmatpush1.msra.mxu0 %v284
    %286 = vmatprep.subr.mxu0 0.0
    %v287 = vand.u32 %v83, 4294901760
    %v288 = vsub.f32 %v83, %v287
    %v289 = vand.u32 %v288, 4294901760
    %v290 = vsub.f32 %v288, %v289
    %v291 = vand.u32 %v290, 4294901760
    %292 = vmatpush1.msra.mxu0 %v291
    %293 = vmatprep.subr.mxu0 0.0
    %v294 = vand.u32 %v82, 4294901760
    %v295 = vsub.f32 %v82, %v294
    %v296 = vand.u32 %v295, 4294901760
    %v297 = vsub.f32 %v295, %v296
    %v298 = vand.u32 %v297, 4294901760
    %299 = vmatpush1.msra.mxu0 %v298
    %300 = vmatprep.subr.mxu0 0.0
    %v301 = vand.u32 %v81, 4294901760
    %v302 = vsub.f32 %v81, %v301
    %v303 = vand.u32 %v302, 4294901760
    %v304 = vsub.f32 %v302, %v303
    %v305 = vand.u32 %v304, 4294901760
    %306 = vmatpush1.msra.mxu0 %v305
    %307 = vmatprep.subr.mxu0 0.0
    %308 = vmatpush2.msra.mxu0 0.0
    %309 = vmatprep.subr.mxu0 0.0
    %310 = vmatpush2.msra.mxu0 0.0
    %311 = vmatprep.subr.mxu0 0.0
    %312 = vmatpush2.msra.mxu0 0.0
    %313 = vmatprep.subr.mxu0 0.0
    %314 = vmatpush2.msra.mxu0 0.0
    %315 = vmatprep.subr.mxu0 0.0
    %316 = vmatpush2.msra.mxu0 0.0
    %317 = vmatprep.subr.mxu0 0.0
    %318 = vmatpush2.msra.mxu0 0.0
    %319 = vmatprep.subr.mxu0 0.0
    %320 = vmatpush2.msra.mxu0 0.0
    %321 = vmatprep.subr.mxu0 0.0
    %322 = vmatpush2.msra.mxu0 0.0
    %323 = vmatprep.subr.mxu0 0.0
    %324 = vmatpush2.msra.mxu0 0.0
    %325 = vmatprep.subr.mxu0 0.0
    %326 = vmatpush2.msra.mxu0 0.0
    %327 = vmatprep.subr.mxu0 0.0
    %328 = vmatpush2.msra.mxu0 0.0
    %329 = vmatprep.subr.mxu0 0.0
    %330 = vmatpush2.msra.mxu0 0.0
    %331 = vmatprep.subr.mxu0 0.0
    %332 = vmatpush2.msra.mxu0 0.0
    %333 = vmatprep.subr.mxu0 0.0
    %334 = vmatpush2.msra.mxu0 0.0
    %335 = vmatprep.subr.mxu0 0.0
    %336 = vmatpush2.msra.mxu0 0.0
    %337 = vmatprep.subr.mxu0 0.0
    %338 = vmatpush2.msra.mxu0 0.0
    %339 = vmatprep.mubr.f32.mxu0 0.0
    %v340 = vand.u32 %v80, 4294901760
    %341 = vmatmul.mubr.f32.gmra.mxu0 %v340
    %v342 = vpop.f32.mrf.mxu0
    %v343 = vadd.f32 %v192, %v342
    %v344 = vpop.f32.mrf.mxu0
    %345 = vdwg.mxu0
    %346 = vmatprep.subr.mxu0 0.0
    %v347 = vand.u32 %v96, 4294901760
    %v348 = vsub.f32 %v96, %v347
    %349 = vmatpush1.msra.mxu0 %v348
    %350 = vmatprep.subr.mxu0 0.0
    %v351 = vand.u32 %v95, 4294901760
    %v352 = vsub.f32 %v95, %v351
    %353 = vmatpush1.msra.mxu0 %v352
    %354 = vmatprep.subr.mxu0 0.0
    %v355 = vand.u32 %v94, 4294901760
    %v356 = vsub.f32 %v94, %v355
    %357 = vmatpush1.msra.mxu0 %v356
    %358 = vmatprep.subr.mxu0 0.0
    %v359 = vand.u32 %v93, 4294901760
    %v360 = vsub.f32 %v93, %v359
    %361 = vmatpush1.msra.mxu0 %v360
    %362 = vmatprep.subr.mxu0 0.0
    %v363 = vand.u32 %v92, 4294901760
    %v364 = vsub.f32 %v92, %v363
    %365 = vmatpush1.msra.mxu0 %v364
    %366 = vmatprep.subr.mxu0 0.0
    %v367 = vand.u32 %v91, 4294901760
    %v368 = vsub.f32 %v91, %v367
    %369 = vmatpush1.msra.mxu0 %v368
    %370 = vmatprep.subr.mxu0 0.0
    %v371 = vand.u32 %v90, 4294901760
    %v372 = vsub.f32 %v90, %v371
    %373 = vmatpush1.msra.mxu0 %v372
    %374 = vmatprep.subr.mxu0 0.0
    %v375 = vand.u32 %v89, 4294901760
    %v376 = vsub.f32 %v89, %v375
    %377 = vmatpush1.msra.mxu0 %v376
    %378 = vmatprep.subr.mxu0 0.0
    %v379 = vand.u32 %v88, 4294901760
    %v380 = vsub.f32 %v88, %v379
    %381 = vmatpush1.msra.mxu0 %v380
    %382 = vmatprep.subr.mxu0 0.0
    %v383 = vand.u32 %v87, 4294901760
    %v384 = vsub.f32 %v87, %v383
    %385 = vmatpush1.msra.mxu0 %v384
    %386 = vmatprep.subr.mxu0 0.0
    %v387 = vand.u32 %v86, 4294901760
    %v388 = vsub.f32 %v86, %v387
    %389 = vmatpush1.msra.mxu0 %v388
    %390 = vmatprep.subr.mxu0 0.0
    %v391 = vand.u32 %v85, 4294901760
    %v392 = vsub.f32 %v85, %v391
    %393 = vmatpush1.msra.mxu0 %v392
    %394 = vmatprep.subr.mxu0 0.0
    %v395 = vand.u32 %v84, 4294901760
    %v396 = vsub.f32 %v84, %v395
    %397 = vmatpush1.msra.mxu0 %v396
    %398 = vmatprep.subr.mxu0 0.0
    %v399 = vand.u32 %v83, 4294901760
    %v400 = vsub.f32 %v83, %v399
    %401 = vmatpush1.msra.mxu0 %v400
    %402 = vmatprep.subr.mxu0 0.0
    %v403 = vand.u32 %v82, 4294901760
    %v404 = vsub.f32 %v82, %v403
    %405 = vmatpush1.msra.mxu0 %v404
    %406 = vmatprep.subr.mxu0 0.0
    %v407 = vand.u32 %v81, 4294901760
    %v408 = vsub.f32 %v81, %v407
    %409 = vmatpush1.msra.mxu0 %v408
    %410 = vmatprep.subr.mxu0 0.0
    %411 = vmatpush2.msra.mxu0 0.0
    %412 = vmatprep.subr.mxu0 0.0
    %413 = vmatpush2.msra.mxu0 0.0
    %414 = vmatprep.subr.mxu0 0.0
    %415 = vmatpush2.msra.mxu0 0.0
    %416 = vmatprep.subr.mxu0 0.0
    %417 = vmatpush2.msra.mxu0 0.0
    %418 = vmatprep.subr.mxu0 0.0
    %419 = vmatpush2.msra.mxu0 0.0
    %420 = vmatprep.subr.mxu0 0.0
    %421 = vmatpush2.msra.mxu0 0.0
    %422 = vmatprep.subr.mxu0 0.0
    %423 = vmatpush2.msra.mxu0 0.0
    %424 = vmatprep.subr.mxu0 0.0
    %425 = vmatpush2.msra.mxu0 0.0
    %426 = vmatprep.subr.mxu0 0.0
    %427 = vmatpush2.msra.mxu0 0.0
    %428 = vmatprep.subr.mxu0 0.0
    %429 = vmatpush2.msra.mxu0 0.0
    %430 = vmatprep.subr.mxu0 0.0
    %431 = vmatpush2.msra.mxu0 0.0
    %432 = vmatprep.subr.mxu0 0.0
    %433 = vmatpush2.msra.mxu0 0.0
    %434 = vmatprep.subr.mxu0 0.0
    %435 = vmatpush2.msra.mxu0 0.0
    %436 = vmatprep.subr.mxu0 0.0
    %437 = vmatpush2.msra.mxu0 0.0
    %438 = vmatprep.subr.mxu0 0.0
    %439 = vmatpush2.msra.mxu0 0.0
    %440 = vmatprep.subr.mxu0 0.0
    %441 = vmatpush2.msra.mxu0 0.0
    %442 = vmatprep.mubr.f32.mxu0 0.0
    %v443 = vand.u32 %v80, 4294901760
    %v444 = vsub.f32 %v80, %v443
    %445 = vmatmul.mubr.f32.gmra.mxu0 %v444
    %v446 = vpop.f32.mrf.mxu0
    %v447 = vadd.f32 %v343, %v446
    %v448 = vpop.f32.mrf.mxu0
    %449 = vdwg.mxu0
    %450 = vmatprep.subr.mxu0 0.0
    %v451 = vand.u32 %v96, 4294901760
    %452 = vmatpush1.msra.mxu0 %v451
    %453 = vmatprep.subr.mxu0 0.0
    %v454 = vand.u32 %v95, 4294901760
    %455 = vmatpush1.msra.mxu0 %v454
    %456 = vmatprep.subr.mxu0 0.0
    %v457 = vand.u32 %v94, 4294901760
    %458 = vmatpush1.msra.mxu0 %v457
    %459 = vmatprep.subr.mxu0 0.0
    %v460 = vand.u32 %v93, 4294901760
    %461 = vmatpush1.msra.mxu0 %v460
    %462 = vmatprep.subr.mxu0 0.0
    %v463 = vand.u32 %v92, 4294901760
    %464 = vmatpush1.msra.mxu0 %v463
    %465 = vmatprep.subr.mxu0 0.0
    %v466 = vand.u32 %v91, 4294901760
    %467 = vmatpush1.msra.mxu0 %v466
    %468 = vmatprep.subr.mxu0 0.0
    %v469 = vand.u32 %v90, 4294901760
    %470 = vmatpush1.msra.mxu0 %v469
    %471 = vmatprep.subr.mxu0 0.0
    %v472 = vand.u32 %v89, 4294901760
    %473 = vmatpush1.msra.mxu0 %v472
    %474 = vmatprep.subr.mxu0 0.0
    %v475 = vand.u32 %v88, 4294901760
    %476 = vmatpush1.msra.mxu0 %v475
    %477 = vmatprep.subr.mxu0 0.0
    %v478 = vand.u32 %v87, 4294901760
    %479 = vmatpush1.msra.mxu0 %v478
    %480 = vmatprep.subr.mxu0 0.0
    %v481 = vand.u32 %v86, 4294901760
    %482 = vmatpush1.msra.mxu0 %v481
    %483 = vmatprep.subr.mxu0 0.0
    %v484 = vand.u32 %v85, 4294901760
    %485 = vmatpush1.msra.mxu0 %v484
    %486 = vmatprep.subr.mxu0 0.0
    %v487 = vand.u32 %v84, 4294901760
    %488 = vmatpush1.msra.mxu0 %v487
    %489 = vmatprep.subr.mxu0 0.0
    %v490 = vand.u32 %v83, 4294901760
    %491 = vmatpush1.msra.mxu0 %v490
    %492 = vmatprep.subr.mxu0 0.0
    %v493 = vand.u32 %v82, 4294901760
    %494 = vmatpush1.msra.mxu0 %v493
    %495 = vmatprep.subr.mxu0 0.0
    %v496 = vand.u32 %v81, 4294901760
    %497 = vmatpush1.msra.mxu0 %v496
    %498 = vmatprep.subr.mxu0 0.0
    %499 = vmatpush2.msra.mxu0 0.0
    %500 = vmatprep.subr.mxu0 0.0
    %501 = vmatpush2.msra.mxu0 0.0
    %502 = vmatprep.subr.mxu0 0.0
    %503 = vmatpush2.msra.mxu0 0.0
    %504 = vmatprep.subr.mxu0 0.0
    %505 = vmatpush2.msra.mxu0 0.0
    %506 = vmatprep.subr.mxu0 0.0
    %507 = vmatpush2.msra.mxu0 0.0
    %508 = vmatprep.subr.mxu0 0.0
    %509 = vmatpush2.msra.mxu0 0.0
    %510 = vmatprep.subr.mxu0 0.0
    %511 = vmatpush2.msra.mxu0 0.0
    %512 = vmatprep.subr.mxu0 0.0
    %513 = vmatpush2.msra.mxu0 0.0
    %514 = vmatprep.subr.mxu0 0.0
    %515 = vmatpush2.msra.mxu0 0.0
    %516 = vmatprep.subr.mxu0 0.0
    %517 = vmatpush2.msra.mxu0 0.0
    %518 = vmatprep.subr.mxu0 0.0
    %519 = vmatpush2.msra.mxu0 0.0
    %520 = vmatprep.subr.mxu0 0.0
    %521 = vmatpush2.msra.mxu0 0.0
    %522 = vmatprep.subr.mxu0 0.0
    %523 = vmatpush2.msra.mxu0 0.0
    %524 = vmatprep.subr.mxu0 0.0
    %525 = vmatpush2.msra.mxu0 0.0
    %526 = vmatprep.subr.mxu0 0.0
    %527 = vmatpush2.msra.mxu0 0.0
    %528 = vmatprep.subr.mxu0 0.0
    %529 = vmatpush2.msra.mxu0 0.0
    %530 = vmatprep.mubr.f32.mxu0 0.0
    %v531 = vand.u32 %v80, 4294901760
    %v532 = vsub.f32 %v80, %v531
    %v533 = vand.u32 %v532, 4294901760
    %534 = vmatmul.mubr.f32.gmra.mxu0 %v533
    %v535 = vpop.f32.mrf.mxu0
    %v536 = vadd.f32 %v447, %v535
    %v537 = vpop.f32.mrf.mxu0
    %538 = vdwg.mxu0
    %539 = vmatprep.subr.mxu0 0.0
    %v540 = vand.u32 %v96, 4294901760
    %v541 = vsub.f32 %v96, %v540
    %v542 = vand.u32 %v541, 4294901760
    %543 = vmatpush1.msra.mxu0 %v542
    %544 = vmatprep.subr.mxu0 0.0
    %v545 = vand.u32 %v95, 4294901760
    %v546 = vsub.f32 %v95, %v545
    %v547 = vand.u32 %v546, 4294901760
    %548 = vmatpush1.msra.mxu0 %v547
    %549 = vmatprep.subr.mxu0 0.0
    %v550 = vand.u32 %v94, 4294901760
    %v551 = vsub.f32 %v94, %v550
    %v552 = vand.u32 %v551, 4294901760
    %553 = vmatpush1.msra.mxu0 %v552
    %554 = vmatprep.subr.mxu0 0.0
    %v555 = vand.u32 %v93, 4294901760
    %v556 = vsub.f32 %v93, %v555
    %v557 = vand.u32 %v556, 4294901760
    %558 = vmatpush1.msra.mxu0 %v557
    %559 = vmatprep.subr.mxu0 0.0
    %v560 = vand.u32 %v92, 4294901760
    %v561 = vsub.f32 %v92, %v560
    %v562 = vand.u32 %v561, 4294901760
    %563 = vmatpush1.msra.mxu0 %v562
    %564 = vmatprep.subr.mxu0 0.0
    %v565 = vand.u32 %v91, 4294901760
    %v566 = vsub.f32 %v91, %v565
    %v567 = vand.u32 %v566, 4294901760
    %568 = vmatpush1.msra.mxu0 %v567
    %569 = vmatprep.subr.mxu0 0.0
    %v570 = vand.u32 %v90, 4294901760
    %v571 = vsub.f32 %v90, %v570
    %v572 = vand.u32 %v571, 4294901760
    %573 = vmatpush1.msra.mxu0 %v572
    %574 = vmatprep.subr.mxu0 0.0
    %v575 = vand.u32 %v89, 4294901760
    %v576 = vsub.f32 %v89, %v575
    %v577 = vand.u32 %v576, 4294901760
    %578 = vmatpush1.msra.mxu0 %v577
    %579 = vmatprep.subr.mxu0 0.0
    %v580 = vand.u32 %v88, 4294901760
    %v581 = vsub.f32 %v88, %v580
    %v582 = vand.u32 %v581, 4294901760
    %583 = vmatpush1.msra.mxu0 %v582
    %584 = vmatprep.subr.mxu0 0.0
    %v585 = vand.u32 %v87, 4294901760
    %v586 = vsub.f32 %v87, %v585
    %v587 = vand.u32 %v586, 4294901760
    %588 = vmatpush1.msra.mxu0 %v587
    %589 = vmatprep.subr.mxu0 0.0
    %v590 = vand.u32 %v86, 4294901760
    %v591 = vsub.f32 %v86, %v590
    %v592 = vand.u32 %v591, 4294901760
    %593 = vmatpush1.msra.mxu0 %v592
    %594 = vmatprep.subr.mxu0 0.0
    %v595 = vand.u32 %v85, 4294901760
    %v596 = vsub.f32 %v85, %v595
    %v597 = vand.u32 %v596, 4294901760
    %598 = vmatpush1.msra.mxu0 %v597
    %599 = vmatprep.subr.mxu0 0.0
    %v600 = vand.u32 %v84, 4294901760
    %v601 = vsub.f32 %v84, %v600
    %v602 = vand.u32 %v601, 4294901760
    %603 = vmatpush1.msra.mxu0 %v602
    %604 = vmatprep.subr.mxu0 0.0
    %v605 = vand.u32 %v83, 4294901760
    %v606 = vsub.f32 %v83, %v605
    %v607 = vand.u32 %v606, 4294901760
    %608 = vmatpush1.msra.mxu0 %v607
    %609 = vmatprep.subr.mxu0 0.0
    %v610 = vand.u32 %v82, 4294901760
    %v611 = vsub.f32 %v82, %v610
    %v612 = vand.u32 %v611, 4294901760
    %613 = vmatpush1.msra.mxu0 %v612
    %614 = vmatprep.subr.mxu0 0.0
    %v615 = vand.u32 %v81, 4294901760
    %v616 = vsub.f32 %v81, %v615
    %v617 = vand.u32 %v616, 4294901760
    %618 = vmatpush1.msra.mxu0 %v617
    %619 = vmatprep.subr.mxu0 0.0
    %620 = vmatpush2.msra.mxu0 0.0
    %621 = vmatprep.subr.mxu0 0.0
    %622 = vmatpush2.msra.mxu0 0.0
    %623 = vmatprep.subr.mxu0 0.0
    %624 = vmatpush2.msra.mxu0 0.0
    %625 = vmatprep.subr.mxu0 0.0
    %626 = vmatpush2.msra.mxu0 0.0
    %627 = vmatprep.subr.mxu0 0.0
    %628 = vmatpush2.msra.mxu0 0.0
    %629 = vmatprep.subr.mxu0 0.0
    %630 = vmatpush2.msra.mxu0 0.0
    %631 = vmatprep.subr.mxu0 0.0
    %632 = vmatpush2.msra.mxu0 0.0
    %633 = vmatprep.subr.mxu0 0.0
    %634 = vmatpush2.msra.mxu0 0.0
    %635 = vmatprep.subr.mxu0 0.0
    %636 = vmatpush2.msra.mxu0 0.0
    %637 = vmatprep.subr.mxu0 0.0
    %638 = vmatpush2.msra.mxu0 0.0
    %639 = vmatprep.subr.mxu0 0.0
    %640 = vmatpush2.msra.mxu0 0.0
    %641 = vmatprep.subr.mxu0 0.0
    %642 = vmatpush2.msra.mxu0 0.0
    %643 = vmatprep.subr.mxu0 0.0
    %644 = vmatpush2.msra.mxu0 0.0
    %645 = vmatprep.subr.mxu0 0.0
    %646 = vmatpush2.msra.mxu0 0.0
    %647 = vmatprep.subr.mxu0 0.0
    %648 = vmatpush2.msra.mxu0 0.0
    %649 = vmatprep.subr.mxu0 0.0
    %650 = vmatpush2.msra.mxu0 0.0
    %651 = vmatprep.mubr.f32.mxu0 0.0
    %v652 = vand.u32 %v80, 4294901760
    %653 = vmatmul.mubr.f32.gmra.mxu0 %v652
    %v654 = vpop.f32.mrf.mxu0
    %v655 = vadd.f32 %v536, %v654
    %v656 = vpop.f32.mrf.mxu0
    %657 = vdwg.mxu0
    %658 = vmatprep.subr.mxu0 0.0
    %v659 = vand.u32 %v96, 4294901760
    %660 = vmatpush1.msra.mxu0 %v659
    %661 = vmatprep.subr.mxu0 0.0
    %v662 = vand.u32 %v95, 4294901760
    %663 = vmatpush1.msra.mxu0 %v662
    %664 = vmatprep.subr.mxu0 0.0
    %v665 = vand.u32 %v94, 4294901760
    %666 = vmatpush1.msra.mxu0 %v665
    %667 = vmatprep.subr.mxu0 0.0
    %v668 = vand.u32 %v93, 4294901760
    %669 = vmatpush1.msra.mxu0 %v668
    %670 = vmatprep.subr.mxu0 0.0
    %v671 = vand.u32 %v92, 4294901760
    %672 = vmatpush1.msra.mxu0 %v671
    %673 = vmatprep.subr.mxu0 0.0
    %v674 = vand.u32 %v91, 4294901760
    %675 = vmatpush1.msra.mxu0 %v674
    %676 = vmatprep.subr.mxu0 0.0
    %v677 = vand.u32 %v90, 4294901760
    %678 = vmatpush1.msra.mxu0 %v677
    %679 = vmatprep.subr.mxu0 0.0
    %v680 = vand.u32 %v89, 4294901760
    %681 = vmatpush1.msra.mxu0 %v680
    %682 = vmatprep.subr.mxu0 0.0
    %v683 = vand.u32 %v88, 4294901760
    %684 = vmatpush1.msra.mxu0 %v683
    %685 = vmatprep.subr.mxu0 0.0
    %v686 = vand.u32 %v87, 4294901760
    %687 = vmatpush1.msra.mxu0 %v686
    %688 = vmatprep.subr.mxu0 0.0
    %v689 = vand.u32 %v86, 4294901760
    %690 = vmatpush1.msra.mxu0 %v689
    %691 = vmatprep.subr.mxu0 0.0
    %v692 = vand.u32 %v85, 4294901760
    %693 = vmatpush1.msra.mxu0 %v692
    %694 = vmatprep.subr.mxu0 0.0
    %v695 = vand.u32 %v84, 4294901760
    %696 = vmatpush1.msra.mxu0 %v695
    %697 = vmatprep.subr.mxu0 0.0
    %v698 = vand.u32 %v83, 4294901760
    %699 = vmatpush1.msra.mxu0 %v698
    %700 = vmatprep.subr.mxu0 0.0
    %v701 = vand.u32 %v82, 4294901760
    %702 = vmatpush1.msra.mxu0 %v701
    %703 = vmatprep.subr.mxu0 0.0
    %v704 = vand.u32 %v81, 4294901760
    %705 = vmatpush1.msra.mxu0 %v704
    %706 = vmatprep.subr.mxu0 0.0
    %707 = vmatpush2.msra.mxu0 0.0
    %708 = vmatprep.subr.mxu0 0.0
    %709 = vmatpush2.msra.mxu0 0.0
    %710 = vmatprep.subr.mxu0 0.0
    %711 = vmatpush2.msra.mxu0 0.0
    %712 = vmatprep.subr.mxu0 0.0
    %713 = vmatpush2.msra.mxu0 0.0
    %714 = vmatprep.subr.mxu0 0.0
    %715 = vmatpush2.msra.mxu0 0.0
    %716 = vmatprep.subr.mxu0 0.0
    %717 = vmatpush2.msra.mxu0 0.0
    %718 = vmatprep.subr.mxu0 0.0
    %719 = vmatpush2.msra.mxu0 0.0
    %720 = vmatprep.subr.mxu0 0.0
    %721 = vmatpush2.msra.mxu0 0.0
    %722 = vmatprep.subr.mxu0 0.0
    %723 = vmatpush2.msra.mxu0 0.0
    %724 = vmatprep.subr.mxu0 0.0
    %725 = vmatpush2.msra.mxu0 0.0
    %726 = vmatprep.subr.mxu0 0.0
    %727 = vmatpush2.msra.mxu0 0.0
    %728 = vmatprep.subr.mxu0 0.0
    %729 = vmatpush2.msra.mxu0 0.0
    %730 = vmatprep.subr.mxu0 0.0
    %731 = vmatpush2.msra.mxu0 0.0
    %732 = vmatprep.subr.mxu0 0.0
    %733 = vmatpush2.msra.mxu0 0.0
    %734 = vmatprep.subr.mxu0 0.0
    %735 = vmatpush2.msra.mxu0 0.0
    %736 = vmatprep.subr.mxu0 0.0
    %737 = vmatpush2.msra.mxu0 0.0
    %738 = vmatprep.mubr.f32.mxu0 0.0
    %v739 = vand.u32 %v80, 4294901760
    %740 = vmatmul.mubr.f32.gmra.mxu0 %v739
    %v741 = vpop.f32.mrf.mxu0
    %v742 = vadd.f32 %v655, %v741
    %v743 = vpop.f32.mrf.mxu0
    %744 = vdwg.mxu0
    %v745 = vmax.f32 %v742, 0.0
    %v746 = vld [vmem:[#allocation7] sm:$0xff]
    %v747 = vld [vmem:[#allocation7 + $0x8] sm:$0xff]
    %v748 = vld [vmem:[#allocation7 + $0x10] sm:$0xff]
    %v749 = vld [vmem:[#allocation7 + $0x18] sm:$0xff]
    %v750 = vld [vmem:[#allocation7 + $0x20] sm:$0xff]
    %v751 = vld [vmem:[#allocation7 + $0x28] sm:$0xff]
    %v752 = vld [vmem:[#allocation7 + $0x30] sm:$0xff]
    %v753 = vld [vmem:[#allocation7 + $0x38] sm:$0xff]
    %v754 = vld [vmem:[#allocation7 + $0x40] sm:$0xff]
    %v755 = vld [vmem:[#allocation7 + $0x48] sm:$0xff]
    %v756 = vld [vmem:[#allocation7 + $0x50] sm:$0xff]
    %v757 = vld [vmem:[#allocation7 + $0x58] sm:$0xff]
    %v758 = vld [vmem:[#allocation7 + $0x60] sm:$0xff]
    %v759 = vld [vmem:[#allocation7 + $0x68] sm:$0xff]
    %v760 = vld [vmem:[#allocation7 + $0x70] sm:$0xff]
    %v761 = vld [vmem:[#allocation7 + $0x78] sm:$0xff]
    %v762 = vld [vmem:[%s4] sm:$0x1]
    %v764 = vlaneseq
    %v765 = vshrl.u32 %v764, 7
    %v766 = vsub.s32 0, %v765
    %v767 = vrot.slane %v762, %v766
    %769 = vmatprep.subr.mxu0 0.0
    %v770 = vand.u32 %v761, 4294901760
    %771 = vmatpush1.msra.mxu0 %v770
    %772 = vmatprep.subr.mxu0 0.0
    %v773 = vand.u32 %v760, 4294901760
    %774 = vmatpush1.msra.mxu0 %v773
    %775 = vmatprep.subr.mxu0 0.0
    %v776 = vand.u32 %v759, 4294901760
    %777 = vmatpush1.msra.mxu0 %v776
    %778 = vmatprep.subr.mxu0 0.0
    %v779 = vand.u32 %v758, 4294901760
    %780 = vmatpush1.msra.mxu0 %v779
    %781 = vmatprep.subr.mxu0 0.0
    %v782 = vand.u32 %v757, 4294901760
    %783 = vmatpush1.msra.mxu0 %v782
    %784 = vmatprep.subr.mxu0 0.0
    %v785 = vand.u32 %v756, 4294901760
    %786 = vmatpush1.msra.mxu0 %v785
    %787 = vmatprep.subr.mxu0 0.0
    %v788 = vand.u32 %v755, 4294901760
    %789 = vmatpush1.msra.mxu0 %v788
    %790 = vmatprep.subr.mxu0 0.0
    %v791 = vand.u32 %v754, 4294901760
    %792 = vmatpush1.msra.mxu0 %v791
    %793 = vmatprep.subr.mxu0 0.0
    %v794 = vand.u32 %v753, 4294901760
    %795 = vmatpush1.msra.mxu0 %v794
    %796 = vmatprep.subr.mxu0 0.0
    %v797 = vand.u32 %v752, 4294901760
    %798 = vmatpush1.msra.mxu0 %v797
    %799 = vmatprep.subr.mxu0 0.0
    %v800 = vand.u32 %v751, 4294901760
    %801 = vmatpush1.msra.mxu0 %v800
    %802 = vmatprep.subr.mxu0 0.0
    %v803 = vand.u32 %v750, 4294901760
    %804 = vmatpush1.msra.mxu0 %v803
    %805 = vmatprep.subr.mxu0 0.0
    %v806 = vand.u32 %v749, 4294901760
    %807 = vmatpush1.msra.mxu0 %v806
    %808 = vmatprep.subr.mxu0 0.0
    %v809 = vand.u32 %v748, 4294901760
    %810 = vmatpush1.msra.mxu0 %v809
    %811 = vmatprep.subr.mxu0 0.0
    %v812 = vand.u32 %v747, 4294901760
    %813 = vmatpush1.msra.mxu0 %v812
    %814 = vmatprep.subr.mxu0 0.0
    %v815 = vand.u32 %v746, 4294901760
    %816 = vmatpush1.msra.mxu0 %v815
    %817 = vmatprep.subr.mxu0 0.0
    %818 = vmatpush2.msra.mxu0 0.0
    %819 = vmatprep.subr.mxu0 0.0
    %820 = vmatpush2.msra.mxu0 0.0
    %821 = vmatprep.subr.mxu0 0.0
    %822 = vmatpush2.msra.mxu0 0.0
    %823 = vmatprep.subr.mxu0 0.0
    %824 = vmatpush2.msra.mxu0 0.0
    %825 = vmatprep.subr.mxu0 0.0
    %826 = vmatpush2.msra.mxu0 0.0
    %827 = vmatprep.subr.mxu0 0.0
    %828 = vmatpush2.msra.mxu0 0.0
    %829 = vmatprep.subr.mxu0 0.0
    %830 = vmatpush2.msra.mxu0 0.0
    %831 = vmatprep.subr.mxu0 0.0
    %832 = vmatpush2.msra.mxu0 0.0
    %833 = vmatprep.subr.mxu0 0.0
    %834 = vmatpush2.msra.mxu0 0.0
    %835 = vmatprep.subr.mxu0 0.0
    %836 = vmatpush2.msra.mxu0 0.0
    %837 = vmatprep.subr.mxu0 0.0
    %838 = vmatpush2.msra.mxu0 0.0
    %839 = vmatprep.subr.mxu0 0.0
    %840 = vmatpush2.msra.mxu0 0.0
    %841 = vmatprep.subr.mxu0 0.0
    %842 = vmatpush2.msra.mxu0 0.0
    %843 = vmatprep.subr.mxu0 0.0
    %844 = vmatpush2.msra.mxu0 0.0
    %845 = vmatprep.subr.mxu0 0.0
    %846 = vmatpush2.msra.mxu0 0.0
    %847 = vmatprep.subr.mxu0 0.0
    %848 = vmatpush2.msra.mxu0 0.0
    %849 = vmatprep.mubr.f32.mxu0 0.0
    %v850 = vand.u32 %v745, 4294901760
    %v851 = vsub.f32 %v745, %v850
    %v852 = vand.u32 %v851, 4294901760
    %v853 = vsub.f32 %v851, %v852
    %v854 = vand.u32 %v853, 4294901760
    %855 = vmatmul.mubr.f32.gmra.mxu0 %v854
    %v856 = vpop.f32.mrf.mxu0
    %v857 = vadd.f32 %v767, %v856
    %v858 = vpop.f32.mrf.mxu0
    %859 = vdwg.mxu0
    %860 = vmatprep.subr.mxu0 0.0
    %v861 = vand.u32 %v761, 4294901760
    %v862 = vsub.f32 %v761, %v861
    %v863 = vand.u32 %v862, 4294901760
    %v864 = vsub.f32 %v862, %v863
    %v865 = vand.u32 %v864, 4294901760
    %866 = vmatpush1.msra.mxu0 %v865
    %867 = vmatprep.subr.mxu0 0.0
    %v868 = vand.u32 %v760, 4294901760
    %v869 = vsub.f32 %v760, %v868
    %v870 = vand.u32 %v869, 4294901760
    %v871 = vsub.f32 %v869, %v870
    %v872 = vand.u32 %v871, 4294901760
    %873 = vmatpush1.msra.mxu0 %v872
    %874 = vmatprep.subr.mxu0 0.0
    %v875 = vand.u32 %v759, 4294901760
    %v876 = vsub.f32 %v759, %v875
    %v877 = vand.u32 %v876, 4294901760
    %v878 = vsub.f32 %v876, %v877
    %v879 = vand.u32 %v878, 4294901760
    %880 = vmatpush1.msra.mxu0 %v879
    %881 = vmatprep.subr.mxu0 0.0
    %v882 = vand.u32 %v758, 4294901760
    %v883 = vsub.f32 %v758, %v882
    %v884 = vand.u32 %v883, 4294901760
    %v885 = vsub.f32 %v883, %v884
    %v886 = vand.u32 %v885, 4294901760
    %887 = vmatpush1.msra.mxu0 %v886
    %888 = vmatprep.subr.mxu0 0.0
    %v889 = vand.u32 %v757, 4294901760
    %v890 = vsub.f32 %v757, %v889
    %v891 = vand.u32 %v890, 4294901760
    %v892 = vsub.f32 %v890, %v891
    %v893 = vand.u32 %v892, 4294901760
    %894 = vmatpush1.msra.mxu0 %v893
    %895 = vmatprep.subr.mxu0 0.0
    %v896 = vand.u32 %v756, 4294901760
    %v897 = vsub.f32 %v756, %v896
    %v898 = vand.u32 %v897, 4294901760
    %v899 = vsub.f32 %v897, %v898
    %v900 = vand.u32 %v899, 4294901760
    %901 = vmatpush1.msra.mxu0 %v900
    %902 = vmatprep.subr.mxu0 0.0
    %v903 = vand.u32 %v755, 4294901760
    %v904 = vsub.f32 %v755, %v903
    %v905 = vand.u32 %v904, 4294901760
    %v906 = vsub.f32 %v904, %v905
    %v907 = vand.u32 %v906, 4294901760
    %908 = vmatpush1.msra.mxu0 %v907
    %909 = vmatprep.subr.mxu0 0.0
    %v910 = vand.u32 %v754, 4294901760
    %v911 = vsub.f32 %v754, %v910
    %v912 = vand.u32 %v911, 4294901760
    %v913 = vsub.f32 %v911, %v912
    %v914 = vand.u32 %v913, 4294901760
    %915 = vmatpush1.msra.mxu0 %v914
    %916 = vmatprep.subr.mxu0 0.0
    %v917 = vand.u32 %v753, 4294901760
    %v918 = vsub.f32 %v753, %v917
    %v919 = vand.u32 %v918, 4294901760
    %v920 = vsub.f32 %v918, %v919
    %v921 = vand.u32 %v920, 4294901760
    %922 = vmatpush1.msra.mxu0 %v921
    %923 = vmatprep.subr.mxu0 0.0
    %v924 = vand.u32 %v752, 4294901760
    %v925 = vsub.f32 %v752, %v924
    %v926 = vand.u32 %v925, 4294901760
    %v927 = vsub.f32 %v925, %v926
    %v928 = vand.u32 %v927, 4294901760
    %929 = vmatpush1.msra.mxu0 %v928
    %930 = vmatprep.subr.mxu0 0.0
    %v931 = vand.u32 %v751, 4294901760
    %v932 = vsub.f32 %v751, %v931
    %v933 = vand.u32 %v932, 4294901760
    %v934 = vsub.f32 %v932, %v933
    %v935 = vand.u32 %v934, 4294901760
    %936 = vmatpush1.msra.mxu0 %v935
    %937 = vmatprep.subr.mxu0 0.0
    %v938 = vand.u32 %v750, 4294901760
    %v939 = vsub.f32 %v750, %v938
    %v940 = vand.u32 %v939, 4294901760
    %v941 = vsub.f32 %v939, %v940
    %v942 = vand.u32 %v941, 4294901760
    %943 = vmatpush1.msra.mxu0 %v942
    %944 = vmatprep.subr.mxu0 0.0
    %v945 = vand.u32 %v749, 4294901760
    %v946 = vsub.f32 %v749, %v945
    %v947 = vand.u32 %v946, 4294901760
    %v948 = vsub.f32 %v946, %v947
    %v949 = vand.u32 %v948, 4294901760
    %950 = vmatpush1.msra.mxu0 %v949
    %951 = vmatprep.subr.mxu0 0.0
    %v952 = vand.u32 %v748, 4294901760
    %v953 = vsub.f32 %v748, %v952
    %v954 = vand.u32 %v953, 4294901760
    %v955 = vsub.f32 %v953, %v954
    %v956 = vand.u32 %v955, 4294901760
    %957 = vmatpush1.msra.mxu0 %v956
    %958 = vmatprep.subr.mxu0 0.0
    %v959 = vand.u32 %v747, 4294901760
    %v960 = vsub.f32 %v747, %v959
    %v961 = vand.u32 %v960, 4294901760
    %v962 = vsub.f32 %v960, %v961
    %v963 = vand.u32 %v962, 4294901760
    %964 = vmatpush1.msra.mxu0 %v963
    %965 = vmatprep.subr.mxu0 0.0
    %v966 = vand.u32 %v746, 4294901760
    %v967 = vsub.f32 %v746, %v966
    %v968 = vand.u32 %v967, 4294901760
    %v969 = vsub.f32 %v967, %v968
    %v970 = vand.u32 %v969, 4294901760
    %971 = vmatpush1.msra.mxu0 %v970
    %972 = vmatprep.subr.mxu0 0.0
    %973 = vmatpush2.msra.mxu0 0.0
    %974 = vmatprep.subr.mxu0 0.0
    %975 = vmatpush2.msra.mxu0 0.0
    %976 = vmatprep.subr.mxu0 0.0
    %977 = vmatpush2.msra.mxu0 0.0
    %978 = vmatprep.subr.mxu0 0.0
    %979 = vmatpush2.msra.mxu0 0.0
    %980 = vmatprep.subr.mxu0 0.0
    %981 = vmatpush2.msra.mxu0 0.0
    %982 = vmatprep.subr.mxu0 0.0
    %983 = vmatpush2.msra.mxu0 0.0
    %984 = vmatprep.subr.mxu0 0.0
    %985 = vmatpush2.msra.mxu0 0.0
    %986 = vmatprep.subr.mxu0 0.0
    %987 = vmatpush2.msra.mxu0 0.0
    %988 = vmatprep.subr.mxu0 0.0
    %989 = vmatpush2.msra.mxu0 0.0
    %990 = vmatprep.subr.mxu0 0.0
    %991 = vmatpush2.msra.mxu0 0.0
    %992 = vmatprep.subr.mxu0 0.0
    %993 = vmatpush2.msra.mxu0 0.0
    %994 = vmatprep.subr.mxu0 0.0
    %995 = vmatpush2.msra.mxu0 0.0
    %996 = vmatprep.subr.mxu0 0.0
    %997 = vmatpush2.msra.mxu0 0.0
    %998 = vmatprep.subr.mxu0 0.0
    %999 = vmatpush2.msra.mxu0 0.0
    %1000 = vmatprep.subr.mxu0 0.0
    %1001 = vmatpush2.msra.mxu0 0.0
    %1002 = vmatprep.subr.mxu0 0.0
    %1003 = vmatpush2.msra.mxu0 0.0
    %1004 = vmatprep.mubr.f32.mxu0 0.0
    %v1005 = vand.u32 %v745, 4294901760
    %1006 = vmatmul.mubr.f32.gmra.mxu0 %v1005
    %v1007 = vpop.f32.mrf.mxu0
    %v1008 = vadd.f32 %v857, %v1007
    %v1009 = vpop.f32.mrf.mxu0
    %1010 = vdwg.mxu0
    %1011 = vmatprep.subr.mxu0 0.0
    %v1012 = vand.u32 %v761, 4294901760
    %v1013 = vsub.f32 %v761, %v1012
    %1014 = vmatpush1.msra.mxu0 %v1013
    %1015 = vmatprep.subr.mxu0 0.0
    %v1016 = vand.u32 %v760, 4294901760
    %v1017 = vsub.f32 %v760, %v1016
    %1018 = vmatpush1.msra.mxu0 %v1017
    %1019 = vmatprep.subr.mxu0 0.0
    %v1020 = vand.u32 %v759, 4294901760
    %v1021 = vsub.f32 %v759, %v1020
    %1022 = vmatpush1.msra.mxu0 %v1021
    %1023 = vmatprep.subr.mxu0 0.0
    %v1024 = vand.u32 %v758, 4294901760
    %v1025 = vsub.f32 %v758, %v1024
    %1026 = vmatpush1.msra.mxu0 %v1025
    %1027 = vmatprep.subr.mxu0 0.0
    %v1028 = vand.u32 %v757, 4294901760
    %v1029 = vsub.f32 %v757, %v1028
    %1030 = vmatpush1.msra.mxu0 %v1029
    %1031 = vmatprep.subr.mxu0 0.0
    %v1032 = vand.u32 %v756, 4294901760
    %v1033 = vsub.f32 %v756, %v1032
    %1034 = vmatpush1.msra.mxu0 %v1033
    %1035 = vmatprep.subr.mxu0 0.0
    %v1036 = vand.u32 %v755, 4294901760
    %v1037 = vsub.f32 %v755, %v1036
    %1038 = vmatpush1.msra.mxu0 %v1037
    %1039 = vmatprep.subr.mxu0 0.0
    %v1040 = vand.u32 %v754, 4294901760
    %v1041 = vsub.f32 %v754, %v1040
    %1042 = vmatpush1.msra.mxu0 %v1041
    %1043 = vmatprep.subr.mxu0 0.0
    %v1044 = vand.u32 %v753, 4294901760
    %v1045 = vsub.f32 %v753, %v1044
    %1046 = vmatpush1.msra.mxu0 %v1045
    %1047 = vmatprep.subr.mxu0 0.0
    %v1048 = vand.u32 %v752, 4294901760
    %v1049 = vsub.f32 %v752, %v1048
    %1050 = vmatpush1.msra.mxu0 %v1049
    %1051 = vmatprep.subr.mxu0 0.0
    %v1052 = vand.u32 %v751, 4294901760
    %v1053 = vsub.f32 %v751, %v1052
    %1054 = vmatpush1.msra.mxu0 %v1053
    %1055 = vmatprep.subr.mxu0 0.0
    %v1056 = vand.u32 %v750, 4294901760
    %v1057 = vsub.f32 %v750, %v1056
    %1058 = vmatpush1.msra.mxu0 %v1057
    %1059 = vmatprep.subr.mxu0 0.0
    %v1060 = vand.u32 %v749, 4294901760
    %v1061 = vsub.f32 %v749, %v1060
    %1062 = vmatpush1.msra.mxu0 %v1061
    %1063 = vmatprep.subr.mxu0 0.0
    %v1064 = vand.u32 %v748, 4294901760
    %v1065 = vsub.f32 %v748, %v1064
    %1066 = vmatpush1.msra.mxu0 %v1065
    %1067 = vmatprep.subr.mxu0 0.0
    %v1068 = vand.u32 %v747, 4294901760
    %v1069 = vsub.f32 %v747, %v1068
    %1070 = vmatpush1.msra.mxu0 %v1069
    %1071 = vmatprep.subr.mxu0 0.0
    %v1072 = vand.u32 %v746, 4294901760
    %v1073 = vsub.f32 %v746, %v1072
    %1074 = vmatpush1.msra.mxu0 %v1073
    %1075 = vmatprep.subr.mxu0 0.0
    %1076 = vmatpush2.msra.mxu0 0.0
    %1077 = vmatprep.subr.mxu0 0.0
    %1078 = vmatpush2.msra.mxu0 0.0
    %1079 = vmatprep.subr.mxu0 0.0
    %1080 = vmatpush2.msra.mxu0 0.0
    %1081 = vmatprep.subr.mxu0 0.0
    %1082 = vmatpush2.msra.mxu0 0.0
    %1083 = vmatprep.subr.mxu0 0.0
    %1084 = vmatpush2.msra.mxu0 0.0
    %1085 = vmatprep.subr.mxu0 0.0
    %1086 = vmatpush2.msra.mxu0 0.0
    %1087 = vmatprep.subr.mxu0 0.0
    %1088 = vmatpush2.msra.mxu0 0.0
    %1089 = vmatprep.subr.mxu0 0.0
    %1090 = vmatpush2.msra.mxu0 0.0
    %1091 = vmatprep.subr.mxu0 0.0
    %1092 = vmatpush2.msra.mxu0 0.0
    %1093 = vmatprep.subr.mxu0 0.0
    %1094 = vmatpush2.msra.mxu0 0.0
    %1095 = vmatprep.subr.mxu0 0.0
    %1096 = vmatpush2.msra.mxu0 0.0
    %1097 = vmatprep.subr.mxu0 0.0
    %1098 = vmatpush2.msra.mxu0 0.0
    %1099 = vmatprep.subr.mxu0 0.0
    %1100 = vmatpush2.msra.mxu0 0.0
    %1101 = vmatprep.subr.mxu0 0.0
    %1102 = vmatpush2.msra.mxu0 0.0
    %1103 = vmatprep.subr.mxu0 0.0
    %1104 = vmatpush2.msra.mxu0 0.0
    %1105 = vmatprep.subr.mxu0 0.0
    %1106 = vmatpush2.msra.mxu0 0.0
    %1107 = vmatprep.mubr.f32.mxu0 0.0
    %v1108 = vand.u32 %v745, 4294901760
    %v1109 = vsub.f32 %v745, %v1108
    %1110 = vmatmul.mubr.f32.gmra.mxu0 %v1109
    %v1111 = vpop.f32.mrf.mxu0
    %v1112 = vadd.f32 %v1008, %v1111
    %v1113 = vpop.f32.mrf.mxu0
    %1114 = vdwg.mxu0
    %1115 = vmatprep.subr.mxu0 0.0
    %v1116 = vand.u32 %v761, 4294901760
    %1117 = vmatpush1.msra.mxu0 %v1116
    %1118 = vmatprep.subr.mxu0 0.0
    %v1119 = vand.u32 %v760, 4294901760
    %1120 = vmatpush1.msra.mxu0 %v1119
    %1121 = vmatprep.subr.mxu0 0.0
    %v1122 = vand.u32 %v759, 4294901760
    %1123 = vmatpush1.msra.mxu0 %v1122
    %1124 = vmatprep.subr.mxu0 0.0
    %v1125 = vand.u32 %v758, 4294901760
    %1126 = vmatpush1.msra.mxu0 %v1125
    %1127 = vmatprep.subr.mxu0 0.0
    %v1128 = vand.u32 %v757, 4294901760
    %1129 = vmatpush1.msra.mxu0 %v1128
    %1130 = vmatprep.subr.mxu0 0.0
    %v1131 = vand.u32 %v756, 4294901760
    %1132 = vmatpush1.msra.mxu0 %v1131
    %1133 = vmatprep.subr.mxu0 0.0
    %v1134 = vand.u32 %v755, 4294901760
    %1135 = vmatpush1.msra.mxu0 %v1134
    %1136 = vmatprep.subr.mxu0 0.0
    %v1137 = vand.u32 %v754, 4294901760
    %1138 = vmatpush1.msra.mxu0 %v1137
    %1139 = vmatprep.subr.mxu0 0.0
    %v1140 = vand.u32 %v753, 4294901760
    %1141 = vmatpush1.msra.mxu0 %v1140
    %1142 = vmatprep.subr.mxu0 0.0
    %v1143 = vand.u32 %v752, 4294901760
    %1144 = vmatpush1.msra.mxu0 %v1143
    %1145 = vmatprep.subr.mxu0 0.0
    %v1146 = vand.u32 %v751, 4294901760
    %1147 = vmatpush1.msra.mxu0 %v1146
    %1148 = vmatprep.subr.mxu0 0.0
    %v1149 = vand.u32 %v750, 4294901760
    %1150 = vmatpush1.msra.mxu0 %v1149
    %1151 = vmatprep.subr.mxu0 0.0
    %v1152 = vand.u32 %v749, 4294901760
    %1153 = vmatpush1.msra.mxu0 %v1152
    %1154 = vmatprep.subr.mxu0 0.0
    %v1155 = vand.u32 %v748, 4294901760
    %1156 = vmatpush1.msra.mxu0 %v1155
    %1157 = vmatprep.subr.mxu0 0.0
    %v1158 = vand.u32 %v747, 4294901760
    %1159 = vmatpush1.msra.mxu0 %v1158
    %1160 = vmatprep.subr.mxu0 0.0
    %v1161 = vand.u32 %v746, 4294901760
    %1162 = vmatpush1.msra.mxu0 %v1161
    %1163 = vmatprep.subr.mxu0 0.0
    %1164 = vmatpush2.msra.mxu0 0.0
    %1165 = vmatprep.subr.mxu0 0.0
    %1166 = vmatpush2.msra.mxu0 0.0
    %1167 = vmatprep.subr.mxu0 0.0
    %1168 = vmatpush2.msra.mxu0 0.0
    %1169 = vmatprep.subr.mxu0 0.0
    %1170 = vmatpush2.msra.mxu0 0.0
    %1171 = vmatprep.subr.mxu0 0.0
    %1172 = vmatpush2.msra.mxu0 0.0
    %1173 = vmatprep.subr.mxu0 0.0
    %1174 = vmatpush2.msra.mxu0 0.0
    %1175 = vmatprep.subr.mxu0 0.0
    %1176 = vmatpush2.msra.mxu0 0.0
    %1177 = vmatprep.subr.mxu0 0.0
    %1178 = vmatpush2.msra.mxu0 0.0
    %1179 = vmatprep.subr.mxu0 0.0
    %1180 = vmatpush2.msra.mxu0 0.0
    %1181 = vmatprep.subr.mxu0 0.0
    %1182 = vmatpush2.msra.mxu0 0.0
    %1183 = vmatprep.subr.mxu0 0.0
    %1184 = vmatpush2.msra.mxu0 0.0
    %1185 = vmatprep.subr.mxu0 0.0
    %1186 = vmatpush2.msra.mxu0 0.0
    %1187 = vmatprep.subr.mxu0 0.0
    %1188 = vmatpush2.msra.mxu0 0.0
    %1189 = vmatprep.subr.mxu0 0.0
    %1190 = vmatpush2.msra.mxu0 0.0
    %1191 = vmatprep.subr.mxu0 0.0
    %1192 = vmatpush2.msra.mxu0 0.0
    %1193 = vmatprep.subr.mxu0 0.0
    %1194 = vmatpush2.msra.mxu0 0.0
    %1195 = vmatprep.mubr.f32.mxu0 0.0
    %v1196 = vand.u32 %v745, 4294901760
    %v1197 = vsub.f32 %v745, %v1196
    %v1198 = vand.u32 %v1197, 4294901760
    %1199 = vmatmul.mubr.f32.gmra.mxu0 %v1198
    %v1200 = vpop.f32.mrf.mxu0
    %v1201 = vadd.f32 %v1112, %v1200
    %v1202 = vpop.f32.mrf.mxu0
    %1203 = vdwg.mxu0
    %1204 = vmatprep.subr.mxu0 0.0
    %v1205 = vand.u32 %v761, 4294901760
    %v1206 = vsub.f32 %v761, %v1205
    %v1207 = vand.u32 %v1206, 4294901760
    %1208 = vmatpush1.msra.mxu0 %v1207
    %1209 = vmatprep.subr.mxu0 0.0
    %v1210 = vand.u32 %v760, 4294901760
    %v1211 = vsub.f32 %v760, %v1210
    %v1212 = vand.u32 %v1211, 4294901760
    %1213 = vmatpush1.msra.mxu0 %v1212
    %1214 = vmatprep.subr.mxu0 0.0
    %v1215 = vand.u32 %v759, 4294901760
    %v1216 = vsub.f32 %v759, %v1215
    %v1217 = vand.u32 %v1216, 4294901760
    %1218 = vmatpush1.msra.mxu0 %v1217
    %1219 = vmatprep.subr.mxu0 0.0
    %v1220 = vand.u32 %v758, 4294901760
    %v1221 = vsub.f32 %v758, %v1220
    %v1222 = vand.u32 %v1221, 4294901760
    %1223 = vmatpush1.msra.mxu0 %v1222
    %1224 = vmatprep.subr.mxu0 0.0
    %v1225 = vand.u32 %v757, 4294901760
    %v1226 = vsub.f32 %v757, %v1225
    %v1227 = vand.u32 %v1226, 4294901760
    %1228 = vmatpush1.msra.mxu0 %v1227
    %1229 = vmatprep.subr.mxu0 0.0
    %v1230 = vand.u32 %v756, 4294901760
    %v1231 = vsub.f32 %v756, %v1230
    %v1232 = vand.u32 %v1231, 4294901760
    %1233 = vmatpush1.msra.mxu0 %v1232
    %1234 = vmatprep.subr.mxu0 0.0
    %v1235 = vand.u32 %v755, 4294901760
    %v1236 = vsub.f32 %v755, %v1235
    %v1237 = vand.u32 %v1236, 4294901760
    %1238 = vmatpush1.msra.mxu0 %v1237
    %1239 = vmatprep.subr.mxu0 0.0
    %v1240 = vand.u32 %v754, 4294901760
    %v1241 = vsub.f32 %v754, %v1240
    %v1242 = vand.u32 %v1241, 4294901760
    %1243 = vmatpush1.msra.mxu0 %v1242
    %1244 = vmatprep.subr.mxu0 0.0
    %v1245 = vand.u32 %v753, 4294901760
    %v1246 = vsub.f32 %v753, %v1245
    %v1247 = vand.u32 %v1246, 4294901760
    %1248 = vmatpush1.msra.mxu0 %v1247
    %1249 = vmatprep.subr.mxu0 0.0
    %v1250 = vand.u32 %v752, 4294901760
    %v1251 = vsub.f32 %v752, %v1250
    %v1252 = vand.u32 %v1251, 4294901760
    %1253 = vmatpush1.msra.mxu0 %v1252
    %1254 = vmatprep.subr.mxu0 0.0
    %v1255 = vand.u32 %v751, 4294901760
    %v1256 = vsub.f32 %v751, %v1255
    %v1257 = vand.u32 %v1256, 4294901760
    %1258 = vmatpush1.msra.mxu0 %v1257
    %1259 = vmatprep.subr.mxu0 0.0
    %v1260 = vand.u32 %v750, 4294901760
    %v1261 = vsub.f32 %v750, %v1260
    %v1262 = vand.u32 %v1261, 4294901760
    %1263 = vmatpush1.msra.mxu0 %v1262
    %1264 = vmatprep.subr.mxu0 0.0
    %v1265 = vand.u32 %v749, 4294901760
    %v1266 = vsub.f32 %v749, %v1265
    %v1267 = vand.u32 %v1266, 4294901760
    %1268 = vmatpush1.msra.mxu0 %v1267
    %1269 = vmatprep.subr.mxu0 0.0
    %v1270 = vand.u32 %v748, 4294901760
    %v1271 = vsub.f32 %v748, %v1270
    %v1272 = vand.u32 %v1271, 4294901760
    %1273 = vmatpush1.msra.mxu0 %v1272
    %1274 = vmatprep.subr.mxu0 0.0
    %v1275 = vand.u32 %v747, 4294901760
    %v1276 = vsub.f32 %v747, %v1275
    %v1277 = vand.u32 %v1276, 4294901760
    %1278 = vmatpush1.msra.mxu0 %v1277
    %1279 = vmatprep.subr.mxu0 0.0
    %v1280 = vand.u32 %v746, 4294901760
    %v1281 = vsub.f32 %v746, %v1280
    %v1282 = vand.u32 %v1281, 4294901760
    %1283 = vmatpush1.msra.mxu0 %v1282
    %1284 = vmatprep.subr.mxu0 0.0
    %1285 = vmatpush2.msra.mxu0 0.0
    %1286 = vmatprep.subr.mxu0 0.0
    %1287 = vmatpush2.msra.mxu0 0.0
    %1288 = vmatprep.subr.mxu0 0.0
    %1289 = vmatpush2.msra.mxu0 0.0
    %1290 = vmatprep.subr.mxu0 0.0
    %1291 = vmatpush2.msra.mxu0 0.0
    %1292 = vmatprep.subr.mxu0 0.0
    %1293 = vmatpush2.msra.mxu0 0.0
    %1294 = vmatprep.subr.mxu0 0.0
    %1295 = vmatpush2.msra.mxu0 0.0
    %1296 = vmatprep.subr.mxu0 0.0
    %1297 = vmatpush2.msra.mxu0 0.0
    %1298 = vmatprep.subr.mxu0 0.0
    %1299 = vmatpush2.msra.mxu0 0.0
    %1300 = vmatprep.subr.mxu0 0.0
    %1301 = vmatpush2.msra.mxu0 0.0
    %1302 = vmatprep.subr.mxu0 0.0
    %1303 = vmatpush2.msra.mxu0 0.0
    %1304 = vmatprep.subr.mxu0 0.0
    %1305 = vmatpush2.msra.mxu0 0.0
    %1306 = vmatprep.subr.mxu0 0.0
    %1307 = vmatpush2.msra.mxu0 0.0
    %1308 = vmatprep.subr.mxu0 0.0
    %1309 = vmatpush2.msra.mxu0 0.0
    %1310 = vmatprep.subr.mxu0 0.0
    %1311 = vmatpush2.msra.mxu0 0.0
    %1312 = vmatprep.subr.mxu0 0.0
    %1313 = vmatpush2.msra.mxu0 0.0
    %1314 = vmatprep.subr.mxu0 0.0
    %1315 = vmatpush2.msra.mxu0 0.0
    %1316 = vmatprep.mubr.f32.mxu0 0.0
    %v1317 = vand.u32 %v745, 4294901760
    %1318 = vmatmul.mubr.f32.gmra.mxu0 %v1317
    %v1319 = vpop.f32.mrf.mxu0
    %v1320 = vadd.f32 %v1201, %v1319
    %v1321 = vpop.f32.mrf.mxu0
    %1322 = vdwg.mxu0
    %1323 = vmatprep.subr.mxu0 0.0
    %v1324 = vand.u32 %v761, 4294901760
    %1325 = vmatpush1.msra.mxu0 %v1324
    %1326 = vmatprep.subr.mxu0 0.0
    %v1327 = vand.u32 %v760, 4294901760
    %1328 = vmatpush1.msra.mxu0 %v1327
    %1329 = vmatprep.subr.mxu0 0.0
    %v1330 = vand.u32 %v759, 4294901760
    %1331 = vmatpush1.msra.mxu0 %v1330
    %1332 = vmatprep.subr.mxu0 0.0
    %v1333 = vand.u32 %v758, 4294901760
    %1334 = vmatpush1.msra.mxu0 %v1333
    %1335 = vmatprep.subr.mxu0 0.0
    %v1336 = vand.u32 %v757, 4294901760
    %1337 = vmatpush1.msra.mxu0 %v1336
    %1338 = vmatprep.subr.mxu0 0.0
    %v1339 = vand.u32 %v756, 4294901760
    %1340 = vmatpush1.msra.mxu0 %v1339
    %1341 = vmatprep.subr.mxu0 0.0
    %v1342 = vand.u32 %v755, 4294901760
    %1343 = vmatpush1.msra.mxu0 %v1342
    %1344 = vmatprep.subr.mxu0 0.0
    %v1345 = vand.u32 %v754, 4294901760
    %1346 = vmatpush1.msra.mxu0 %v1345
    %1347 = vmatprep.subr.mxu0 0.0
    %v1348 = vand.u32 %v753, 4294901760
    %1349 = vmatpush1.msra.mxu0 %v1348
    %1350 = vmatprep.subr.mxu0 0.0
    %v1351 = vand.u32 %v752, 4294901760
    %1352 = vmatpush1.msra.mxu0 %v1351
    %1353 = vmatprep.subr.mxu0 0.0
    %v1354 = vand.u32 %v751, 4294901760
    %1355 = vmatpush1.msra.mxu0 %v1354
    %1356 = vmatprep.subr.mxu0 0.0
    %v1357 = vand.u32 %v750, 4294901760
    %1358 = vmatpush1.msra.mxu0 %v1357
    %1359 = vmatprep.subr.mxu0 0.0
    %v1360 = vand.u32 %v749, 4294901760
    %1361 = vmatpush1.msra.mxu0 %v1360
    %1362 = vmatprep.subr.mxu0 0.0
    %v1363 = vand.u32 %v748, 4294901760
    %1364 = vmatpush1.msra.mxu0 %v1363
    %1365 = vmatprep.subr.mxu0 0.0
    %v1366 = vand.u32 %v747, 4294901760
    %1367 = vmatpush1.msra.mxu0 %v1366
    %1368 = vmatprep.subr.mxu0 0.0
    %v1369 = vand.u32 %v746, 4294901760
    %1370 = vmatpush1.msra.mxu0 %v1369
    %1371 = vmatprep.subr.mxu0 0.0
    %1372 = vmatpush2.msra.mxu0 0.0
    %1373 = vmatprep.subr.mxu0 0.0
    %1374 = vmatpush2.msra.mxu0 0.0
    %1375 = vmatprep.subr.mxu0 0.0
    %1376 = vmatpush2.msra.mxu0 0.0
    %1377 = vmatprep.subr.mxu0 0.0
    %1378 = vmatpush2.msra.mxu0 0.0
    %1379 = vmatprep.subr.mxu0 0.0
    %1380 = vmatpush2.msra.mxu0 0.0
    %1381 = vmatprep.subr.mxu0 0.0
    %1382 = vmatpush2.msra.mxu0 0.0
    %1383 = vmatprep.subr.mxu0 0.0
    %1384 = vmatpush2.msra.mxu0 0.0
    %1385 = vmatprep.subr.mxu0 0.0
    %1386 = vmatpush2.msra.mxu0 0.0
    %1387 = vmatprep.subr.mxu0 0.0
    %1388 = vmatpush2.msra.mxu0 0.0
    %1389 = vmatprep.subr.mxu0 0.0
    %1390 = vmatpush2.msra.mxu0 0.0
    %1391 = vmatprep.subr.mxu0 0.0
    %1392 = vmatpush2.msra.mxu0 0.0
    %1393 = vmatprep.subr.mxu0 0.0
    %1394 = vmatpush2.msra.mxu0 0.0
    %1395 = vmatprep.subr.mxu0 0.0
    %1396 = vmatpush2.msra.mxu0 0.0
    %1397 = vmatprep.subr.mxu0 0.0
    %1398 = vmatpush2.msra.mxu0 0.0
    %1399 = vmatprep.subr.mxu0 0.0
    %1400 = vmatpush2.msra.mxu0 0.0
    %1401 = vmatprep.subr.mxu0 0.0
    %1402 = vmatpush2.msra.mxu0 0.0
    %1403 = vmatprep.mubr.f32.mxu0 0.0
    %v1404 = vand.u32 %v745, 4294901760
    %1405 = vmatmul.mubr.f32.gmra.mxu0 %v1404
    %v1406 = vpop.f32.mrf.mxu0
    %v1407 = vadd.f32 %v1320, %v1406
    %v1408 = vpop.f32.mrf.mxu0
    %1409 = vdwg.mxu0
    %v1410 = vmax.f32 %v1407, 0.0
    %s1411 = scalar_lea.vmem [#allocation7], 128
    %v1412 = vld [vmem:[%s1411] sm:$0xff]
    %v1413 = vld [vmem:[%s1411 + $0x8] sm:$0xff]
    %v1414 = vld [vmem:[%s1411 + $0x10] sm:$0xff]
    %v1415 = vld [vmem:[%s1411 + $0x18] sm:$0xff]
    %v1416 = vld [vmem:[%s1411 + $0x20] sm:$0xff]
    %v1417 = vld [vmem:[%s1411 + $0x28] sm:$0xff]
    %v1418 = vld [vmem:[%s1411 + $0x30] sm:$0xff]
    %v1419 = vld [vmem:[%s1411 + $0x38] sm:$0xff]
    %v1420 = vld [vmem:[%s1411 + $0x40] sm:$0xff]
    %v1421 = vld [vmem:[%s1411 + $0x48] sm:$0xff]
    %v1422 = vld [vmem:[%s1411 + $0x50] sm:$0xff]
    %v1423 = vld [vmem:[%s1411 + $0x58] sm:$0xff]
    %v1424 = vld [vmem:[%s1411 + $0x60] sm:$0xff]
    %v1425 = vld [vmem:[%s1411 + $0x68] sm:$0xff]
    %v1426 = vld [vmem:[%s1411 + $0x70] sm:$0xff]
    %v1427 = vld [vmem:[%s1411 + $0x78] sm:$0xff]
    %s1428 = scalar_lea.vmem %s4, 1
    %v1429 = vld [vmem:[%s1428] sm:$0x1]
    %v1431 = vlaneseq
    %v1432 = vshrl.u32 %v1431, 7
    %v1433 = vsub.s32 0, %v1432
    %v1434 = vrot.slane %v1429, %v1433
    %1436 = vmatprep.subr.mxu0 0.0
    %v1437 = vand.u32 %v1427, 4294901760
    %1438 = vmatpush1.msra.mxu0 %v1437
    %1439 = vmatprep.subr.mxu0 0.0
    %v1440 = vand.u32 %v1426, 4294901760
    %1441 = vmatpush1.msra.mxu0 %v1440
    %1442 = vmatprep.subr.mxu0 0.0
    %v1443 = vand.u32 %v1425, 4294901760
    %1444 = vmatpush1.msra.mxu0 %v1443
    %1445 = vmatprep.subr.mxu0 0.0
    %v1446 = vand.u32 %v1424, 4294901760
    %1447 = vmatpush1.msra.mxu0 %v1446
    %1448 = vmatprep.subr.mxu0 0.0
    %v1449 = vand.u32 %v1423, 4294901760
    %1450 = vmatpush1.msra.mxu0 %v1449
    %1451 = vmatprep.subr.mxu0 0.0
    %v1452 = vand.u32 %v1422, 4294901760
    %1453 = vmatpush1.msra.mxu0 %v1452
    %1454 = vmatprep.subr.mxu0 0.0
    %v1455 = vand.u32 %v1421, 4294901760
    %1456 = vmatpush1.msra.mxu0 %v1455
    %1457 = vmatprep.subr.mxu0 0.0
    %v1458 = vand.u32 %v1420, 4294901760
    %1459 = vmatpush1.msra.mxu0 %v1458
    %1460 = vmatprep.subr.mxu0 0.0
    %v1461 = vand.u32 %v1419, 4294901760
    %1462 = vmatpush1.msra.mxu0 %v1461
    %1463 = vmatprep.subr.mxu0 0.0
    %v1464 = vand.u32 %v1418, 4294901760
    %1465 = vmatpush1.msra.mxu0 %v1464
    %1466 = vmatprep.subr.mxu0 0.0
    %v1467 = vand.u32 %v1417, 4294901760
    %1468 = vmatpush1.msra.mxu0 %v1467
    %1469 = vmatprep.subr.mxu0 0.0
    %v1470 = vand.u32 %v1416, 4294901760
    %1471 = vmatpush1.msra.mxu0 %v1470
    %1472 = vmatprep.subr.mxu0 0.0
    %v1473 = vand.u32 %v1415, 4294901760
    %1474 = vmatpush1.msra.mxu0 %v1473
    %1475 = vmatprep.subr.mxu0 0.0
    %v1476 = vand.u32 %v1414, 4294901760
    %1477 = vmatpush1.msra.mxu0 %v1476
    %1478 = vmatprep.subr.mxu0 0.0
    %v1479 = vand.u32 %v1413, 4294901760
    %1480 = vmatpush1.msra.mxu0 %v1479
    %1481 = vmatprep.subr.mxu0 0.0
    %v1482 = vand.u32 %v1412, 4294901760
    %1483 = vmatpush1.msra.mxu0 %v1482
    %1484 = vmatprep.subr.mxu0 0.0
    %1485 = vmatpush2.msra.mxu0 0.0
    %1486 = vmatprep.subr.mxu0 0.0
    %1487 = vmatpush2.msra.mxu0 0.0
    %1488 = vmatprep.subr.mxu0 0.0
    %1489 = vmatpush2.msra.mxu0 0.0
    %1490 = vmatprep.subr.mxu0 0.0
    %1491 = vmatpush2.msra.mxu0 0.0
    %1492 = vmatprep.subr.mxu0 0.0
    %1493 = vmatpush2.msra.mxu0 0.0
    %1494 = vmatprep.subr.mxu0 0.0
    %1495 = vmatpush2.msra.mxu0 0.0
    %1496 = vmatprep.subr.mxu0 0.0
    %1497 = vmatpush2.msra.mxu0 0.0
    %1498 = vmatprep.subr.mxu0 0.0
    %1499 = vmatpush2.msra.mxu0 0.0
    %1500 = vmatprep.subr.mxu0 0.0
    %1501 = vmatpush2.msra.mxu0 0.0
    %1502 = vmatprep.subr.mxu0 0.0
    %1503 = vmatpush2.msra.mxu0 0.0
    %1504 = vmatprep.subr.mxu0 0.0
    %1505 = vmatpush2.msra.mxu0 0.0
    %1506 = vmatprep.subr.mxu0 0.0
    %1507 = vmatpush2.msra.mxu0 0.0
    %1508 = vmatprep.subr.mxu0 0.0
    %1509 = vmatpush2.msra.mxu0 0.0
    %1510 = vmatprep.subr.mxu0 0.0
    %1511 = vmatpush2.msra.mxu0 0.0
    %1512 = vmatprep.subr.mxu0 0.0
    %1513 = vmatpush2.msra.mxu0 0.0
    %1514 = vmatprep.subr.mxu0 0.0
    %1515 = vmatpush2.msra.mxu0 0.0
    %1516 = vmatprep.mubr.f32.mxu0 0.0
    %v1517 = vand.u32 %v1410, 4294901760
    %v1518 = vsub.f32 %v1410, %v1517
    %v1519 = vand.u32 %v1518, 4294901760
    %v1520 = vsub.f32 %v1518, %v1519
    %v1521 = vand.u32 %v1520, 4294901760
    %1522 = vmatmul.mubr.f32.gmra.mxu0 %v1521
    %v1523 = vpop.f32.mrf.mxu0
    %v1524 = vadd.f32 %v1434, %v1523
    %v1525 = vpop.f32.mrf.mxu0
    %1526 = vdwg.mxu0
    %1527 = vmatprep.subr.mxu0 0.0
    %v1528 = vand.u32 %v1427, 4294901760
    %v1529 = vsub.f32 %v1427, %v1528
    %v1530 = vand.u32 %v1529, 4294901760
    %v1531 = vsub.f32 %v1529, %v1530
    %v1532 = vand.u32 %v1531, 4294901760
    %1533 = vmatpush1.msra.mxu0 %v1532
    %1534 = vmatprep.subr.mxu0 0.0
    %v1535 = vand.u32 %v1426, 4294901760
    %v1536 = vsub.f32 %v1426, %v1535
    %v1537 = vand.u32 %v1536, 4294901760
    %v1538 = vsub.f32 %v1536, %v1537
    %v1539 = vand.u32 %v1538, 4294901760
    %1540 = vmatpush1.msra.mxu0 %v1539
    %1541 = vmatprep.subr.mxu0 0.0
    %v1542 = vand.u32 %v1425, 4294901760
    %v1543 = vsub.f32 %v1425, %v1542
    %v1544 = vand.u32 %v1543, 4294901760
    %v1545 = vsub.f32 %v1543, %v1544
    %v1546 = vand.u32 %v1545, 4294901760
    %1547 = vmatpush1.msra.mxu0 %v1546
    %1548 = vmatprep.subr.mxu0 0.0
    %v1549 = vand.u32 %v1424, 4294901760
    %v1550 = vsub.f32 %v1424, %v1549
    %v1551 = vand.u32 %v1550, 4294901760
    %v1552 = vsub.f32 %v1550, %v1551
    %v1553 = vand.u32 %v1552, 4294901760
    %1554 = vmatpush1.msra.mxu0 %v1553
    %1555 = vmatprep.subr.mxu0 0.0
    %v1556 = vand.u32 %v1423, 4294901760
    %v1557 = vsub.f32 %v1423, %v1556
    %v1558 = vand.u32 %v1557, 4294901760
    %v1559 = vsub.f32 %v1557, %v1558
    %v1560 = vand.u32 %v1559, 4294901760
    %1561 = vmatpush1.msra.mxu0 %v1560
    %1562 = vmatprep.subr.mxu0 0.0
    %v1563 = vand.u32 %v1422, 4294901760
    %v1564 = vsub.f32 %v1422, %v1563
    %v1565 = vand.u32 %v1564, 4294901760
    %v1566 = vsub.f32 %v1564, %v1565
    %v1567 = vand.u32 %v1566, 4294901760
    %1568 = vmatpush1.msra.mxu0 %v1567
    %1569 = vmatprep.subr.mxu0 0.0
    %v1570 = vand.u32 %v1421, 4294901760
    %v1571 = vsub.f32 %v1421, %v1570
    %v1572 = vand.u32 %v1571, 4294901760
    %v1573 = vsub.f32 %v1571, %v1572
    %v1574 = vand.u32 %v1573, 4294901760
    %1575 = vmatpush1.msra.mxu0 %v1574
    %1576 = vmatprep.subr.mxu0 0.0
    %v1577 = vand.u32 %v1420, 4294901760
    %v1578 = vsub.f32 %v1420, %v1577
    %v1579 = vand.u32 %v1578, 4294901760
    %v1580 = vsub.f32 %v1578, %v1579
    %v1581 = vand.u32 %v1580, 4294901760
    %1582 = vmatpush1.msra.mxu0 %v1581
    %1583 = vmatprep.subr.mxu0 0.0
    %v1584 = vand.u32 %v1419, 4294901760
    %v1585 = vsub.f32 %v1419, %v1584
    %v1586 = vand.u32 %v1585, 4294901760
    %v1587 = vsub.f32 %v1585, %v1586
    %v1588 = vand.u32 %v1587, 4294901760
    %1589 = vmatpush1.msra.mxu0 %v1588
    %1590 = vmatprep.subr.mxu0 0.0
    %v1591 = vand.u32 %v1418, 4294901760
    %v1592 = vsub.f32 %v1418, %v1591
    %v1593 = vand.u32 %v1592, 4294901760
    %v1594 = vsub.f32 %v1592, %v1593
    %v1595 = vand.u32 %v1594, 4294901760
    %1596 = vmatpush1.msra.mxu0 %v1595
    %1597 = vmatprep.subr.mxu0 0.0
    %v1598 = vand.u32 %v1417, 4294901760
    %v1599 = vsub.f32 %v1417, %v1598
    %v1600 = vand.u32 %v1599, 4294901760
    %v1601 = vsub.f32 %v1599, %v1600
    %v1602 = vand.u32 %v1601, 4294901760
    %1603 = vmatpush1.msra.mxu0 %v1602
    %1604 = vmatprep.subr.mxu0 0.0
    %v1605 = vand.u32 %v1416, 4294901760
    %v1606 = vsub.f32 %v1416, %v1605
    %v1607 = vand.u32 %v1606, 4294901760
    %v1608 = vsub.f32 %v1606, %v1607
    %v1609 = vand.u32 %v1608, 4294901760
    %1610 = vmatpush1.msra.mxu0 %v1609
    %1611 = vmatprep.subr.mxu0 0.0
    %v1612 = vand.u32 %v1415, 4294901760
    %v1613 = vsub.f32 %v1415, %v1612
    %v1614 = vand.u32 %v1613, 4294901760
    %v1615 = vsub.f32 %v1613, %v1614
    %v1616 = vand.u32 %v1615, 4294901760
    %1617 = vmatpush1.msra.mxu0 %v1616
    %1618 = vmatprep.subr.mxu0 0.0
    %v1619 = vand.u32 %v1414, 4294901760
    %v1620 = vsub.f32 %v1414, %v1619
    %v1621 = vand.u32 %v1620, 4294901760
    %v1622 = vsub.f32 %v1620, %v1621
    %v1623 = vand.u32 %v1622, 4294901760
    %1624 = vmatpush1.msra.mxu0 %v1623
    %1625 = vmatprep.subr.mxu0 0.0
    %v1626 = vand.u32 %v1413, 4294901760
    %v1627 = vsub.f32 %v1413, %v1626
    %v1628 = vand.u32 %v1627, 4294901760
    %v1629 = vsub.f32 %v1627, %v1628
    %v1630 = vand.u32 %v1629, 4294901760
    %1631 = vmatpush1.msra.mxu0 %v1630
    %1632 = vmatprep.subr.mxu0 0.0
    %v1633 = vand.u32 %v1412, 4294901760
    %v1634 = vsub.f32 %v1412, %v1633
    %v1635 = vand.u32 %v1634, 4294901760
    %v1636 = vsub.f32 %v1634, %v1635
    %v1637 = vand.u32 %v1636, 4294901760
    %1638 = vmatpush1.msra.mxu0 %v1637
    %1639 = vmatprep.subr.mxu0 0.0
    %1640 = vmatpush2.msra.mxu0 0.0
    %1641 = vmatprep.subr.mxu0 0.0
    %1642 = vmatpush2.msra.mxu0 0.0
    %1643 = vmatprep.subr.mxu0 0.0
    %1644 = vmatpush2.msra.mxu0 0.0
    %1645 = vmatprep.subr.mxu0 0.0
    %1646 = vmatpush2.msra.mxu0 0.0
    %1647 = vmatprep.subr.mxu0 0.0
    %1648 = vmatpush2.msra.mxu0 0.0
    %1649 = vmatprep.subr.mxu0 0.0
    %1650 = vmatpush2.msra.mxu0 0.0
    %1651 = vmatprep.subr.mxu0 0.0
    %1652 = vmatpush2.msra.mxu0 0.0
    %1653 = vmatprep.subr.mxu0 0.0
    %1654 = vmatpush2.msra.mxu0 0.0
    %1655 = vmatprep.subr.mxu0 0.0
    %1656 = vmatpush2.msra.mxu0 0.0
    %1657 = vmatprep.subr.mxu0 0.0
    %1658 = vmatpush2.msra.mxu0 0.0
    %1659 = vmatprep.subr.mxu0 0.0
    %1660 = vmatpush2.msra.mxu0 0.0
    %1661 = vmatprep.subr.mxu0 0.0
    %1662 = vmatpush2.msra.mxu0 0.0
    %1663 = vmatprep.subr.mxu0 0.0
    %1664 = vmatpush2.msra.mxu0 0.0
    %1665 = vmatprep.subr.mxu0 0.0
    %1666 = vmatpush2.msra.mxu0 0.0
    %1667 = vmatprep.subr.mxu0 0.0
    %1668 = vmatpush2.msra.mxu0 0.0
    %1669 = vmatprep.subr.mxu0 0.0
    %1670 = vmatpush2.msra.mxu0 0.0
    %1671 = vmatprep.mubr.f32.mxu0 0.0
    %v1672 = vand.u32 %v1410, 4294901760
    %1673 = vmatmul.mubr.f32.gmra.mxu0 %v1672
    %v1674 = vpop.f32.mrf.mxu0
    %v1675 = vadd.f32 %v1524, %v1674
    %v1676 = vpop.f32.mrf.mxu0
    %1677 = vdwg.mxu0
    %1678 = vmatprep.subr.mxu0 0.0
    %v1679 = vand.u32 %v1427, 4294901760
    %v1680 = vsub.f32 %v1427, %v1679
    %1681 = vmatpush1.msra.mxu0 %v1680
    %1682 = vmatprep.subr.mxu0 0.0
    %v1683 = vand.u32 %v1426, 4294901760
    %v1684 = vsub.f32 %v1426, %v1683
    %1685 = vmatpush1.msra.mxu0 %v1684
    %1686 = vmatprep.subr.mxu0 0.0
    %v1687 = vand.u32 %v1425, 4294901760
    %v1688 = vsub.f32 %v1425, %v1687
    %1689 = vmatpush1.msra.mxu0 %v1688
    %1690 = vmatprep.subr.mxu0 0.0
    %v1691 = vand.u32 %v1424, 4294901760
    %v1692 = vsub.f32 %v1424, %v1691
    %1693 = vmatpush1.msra.mxu0 %v1692
    %1694 = vmatprep.subr.mxu0 0.0
    %v1695 = vand.u32 %v1423, 4294901760
    %v1696 = vsub.f32 %v1423, %v1695
    %1697 = vmatpush1.msra.mxu0 %v1696
    %1698 = vmatprep.subr.mxu0 0.0
    %v1699 = vand.u32 %v1422, 4294901760
    %v1700 = vsub.f32 %v1422, %v1699
    %1701 = vmatpush1.msra.mxu0 %v1700
    %1702 = vmatprep.subr.mxu0 0.0
    %v1703 = vand.u32 %v1421, 4294901760
    %v1704 = vsub.f32 %v1421, %v1703
    %1705 = vmatpush1.msra.mxu0 %v1704
    %1706 = vmatprep.subr.mxu0 0.0
    %v1707 = vand.u32 %v1420, 4294901760
    %v1708 = vsub.f32 %v1420, %v1707
    %1709 = vmatpush1.msra.mxu0 %v1708
    %1710 = vmatprep.subr.mxu0 0.0
    %v1711 = vand.u32 %v1419, 4294901760
    %v1712 = vsub.f32 %v1419, %v1711
    %1713 = vmatpush1.msra.mxu0 %v1712
    %1714 = vmatprep.subr.mxu0 0.0
    %v1715 = vand.u32 %v1418, 4294901760
    %v1716 = vsub.f32 %v1418, %v1715
    %1717 = vmatpush1.msra.mxu0 %v1716
    %1718 = vmatprep.subr.mxu0 0.0
    %v1719 = vand.u32 %v1417, 4294901760
    %v1720 = vsub.f32 %v1417, %v1719
    %1721 = vmatpush1.msra.mxu0 %v1720
    %1722 = vmatprep.subr.mxu0 0.0
    %v1723 = vand.u32 %v1416, 4294901760
    %v1724 = vsub.f32 %v1416, %v1723
    %1725 = vmatpush1.msra.mxu0 %v1724
    %1726 = vmatprep.subr.mxu0 0.0
    %v1727 = vand.u32 %v1415, 4294901760
    %v1728 = vsub.f32 %v1415, %v1727
    %1729 = vmatpush1.msra.mxu0 %v1728
    %1730 = vmatprep.subr.mxu0 0.0
    %v1731 = vand.u32 %v1414, 4294901760
    %v1732 = vsub.f32 %v1414, %v1731
    %1733 = vmatpush1.msra.mxu0 %v1732
    %1734 = vmatprep.subr.mxu0 0.0
    %v1735 = vand.u32 %v1413, 4294901760
    %v1736 = vsub.f32 %v1413, %v1735
    %1737 = vmatpush1.msra.mxu0 %v1736
    %1738 = vmatprep.subr.mxu0 0.0
    %v1739 = vand.u32 %v1412, 4294901760
    %v1740 = vsub.f32 %v1412, %v1739
    %1741 = vmatpush1.msra.mxu0 %v1740
    %1742 = vmatprep.subr.mxu0 0.0
    %1743 = vmatpush2.msra.mxu0 0.0
    %1744 = vmatprep.subr.mxu0 0.0
    %1745 = vmatpush2.msra.mxu0 0.0
    %1746 = vmatprep.subr.mxu0 0.0
    %1747 = vmatpush2.msra.mxu0 0.0
    %1748 = vmatprep.subr.mxu0 0.0
    %1749 = vmatpush2.msra.mxu0 0.0
    %1750 = vmatprep.subr.mxu0 0.0
    %1751 = vmatpush2.msra.mxu0 0.0
    %1752 = vmatprep.subr.mxu0 0.0
    %1753 = vmatpush2.msra.mxu0 0.0
    %1754 = vmatprep.subr.mxu0 0.0
    %1755 = vmatpush2.msra.mxu0 0.0
    %1756 = vmatprep.subr.mxu0 0.0
    %1757 = vmatpush2.msra.mxu0 0.0
    %1758 = vmatprep.subr.mxu0 0.0
    %1759 = vmatpush2.msra.mxu0 0.0
    %1760 = vmatprep.subr.mxu0 0.0
    %1761 = vmatpush2.msra.mxu0 0.0
    %1762 = vmatprep.subr.mxu0 0.0
    %1763 = vmatpush2.msra.mxu0 0.0
    %1764 = vmatprep.subr.mxu0 0.0
    %1765 = vmatpush2.msra.mxu0 0.0
    %1766 = vmatprep.subr.mxu0 0.0
    %1767 = vmatpush2.msra.mxu0 0.0
    %1768 = vmatprep.subr.mxu0 0.0
    %1769 = vmatpush2.msra.mxu0 0.0
    %1770 = vmatprep.subr.mxu0 0.0
    %1771 = vmatpush2.msra.mxu0 0.0
    %1772 = vmatprep.subr.mxu0 0.0
    %1773 = vmatpush2.msra.mxu0 0.0
    %1774 = vmatprep.mubr.f32.mxu0 0.0
    %v1775 = vand.u32 %v1410, 4294901760
    %v1776 = vsub.f32 %v1410, %v1775
    %1777 = vmatmul.mubr.f32.gmra.mxu0 %v1776
    %v1778 = vpop.f32.mrf.mxu0
    %v1779 = vadd.f32 %v1675, %v1778
    %v1780 = vpop.f32.mrf.mxu0
    %1781 = vdwg.mxu0
    %1782 = vmatprep.subr.mxu0 0.0
    %v1783 = vand.u32 %v1427, 4294901760
    %1784 = vmatpush1.msra.mxu0 %v1783
    %1785 = vmatprep.subr.mxu0 0.0
    %v1786 = vand.u32 %v1426, 4294901760
    %1787 = vmatpush1.msra.mxu0 %v1786
    %1788 = vmatprep.subr.mxu0 0.0
    %v1789 = vand.u32 %v1425, 4294901760
    %1790 = vmatpush1.msra.mxu0 %v1789
    %1791 = vmatprep.subr.mxu0 0.0
    %v1792 = vand.u32 %v1424, 4294901760
    %1793 = vmatpush1.msra.mxu0 %v1792
    %1794 = vmatprep.subr.mxu0 0.0
    %v1795 = vand.u32 %v1423, 4294901760
    %1796 = vmatpush1.msra.mxu0 %v1795
    %1797 = vmatprep.subr.mxu0 0.0
    %v1798 = vand.u32 %v1422, 4294901760
    %1799 = vmatpush1.msra.mxu0 %v1798
    %1800 = vmatprep.subr.mxu0 0.0
    %v1801 = vand.u32 %v1421, 4294901760
    %1802 = vmatpush1.msra.mxu0 %v1801
    %1803 = vmatprep.subr.mxu0 0.0
    %v1804 = vand.u32 %v1420, 4294901760
    %1805 = vmatpush1.msra.mxu0 %v1804
    %1806 = vmatprep.subr.mxu0 0.0
    %v1807 = vand.u32 %v1419, 4294901760
    %1808 = vmatpush1.msra.mxu0 %v1807
    %1809 = vmatprep.subr.mxu0 0.0
    %v1810 = vand.u32 %v1418, 4294901760
    %1811 = vmatpush1.msra.mxu0 %v1810
    %1812 = vmatprep.subr.mxu0 0.0
    %v1813 = vand.u32 %v1417, 4294901760
    %1814 = vmatpush1.msra.mxu0 %v1813
    %1815 = vmatprep.subr.mxu0 0.0
    %v1816 = vand.u32 %v1416, 4294901760
    %1817 = vmatpush1.msra.mxu0 %v1816
    %1818 = vmatprep.subr.mxu0 0.0
    %v1819 = vand.u32 %v1415, 4294901760
    %1820 = vmatpush1.msra.mxu0 %v1819
    %1821 = vmatprep.subr.mxu0 0.0
    %v1822 = vand.u32 %v1414, 4294901760
    %1823 = vmatpush1.msra.mxu0 %v1822
    %1824 = vmatprep.subr.mxu0 0.0
    %v1825 = vand.u32 %v1413, 4294901760
    %1826 = vmatpush1.msra.mxu0 %v1825
    %1827 = vmatprep.subr.mxu0 0.0
    %v1828 = vand.u32 %v1412, 4294901760
    %1829 = vmatpush1.msra.mxu0 %v1828
    %1830 = vmatprep.subr.mxu0 0.0
    %1831 = vmatpush2.msra.mxu0 0.0
    %1832 = vmatprep.subr.mxu0 0.0
    %1833 = vmatpush2.msra.mxu0 0.0
    %1834 = vmatprep.subr.mxu0 0.0
    %1835 = vmatpush2.msra.mxu0 0.0
    %1836 = vmatprep.subr.mxu0 0.0
    %1837 = vmatpush2.msra.mxu0 0.0
    %1838 = vmatprep.subr.mxu0 0.0
    %1839 = vmatpush2.msra.mxu0 0.0
    %1840 = vmatprep.subr.mxu0 0.0
    %1841 = vmatpush2.msra.mxu0 0.0
    %1842 = vmatprep.subr.mxu0 0.0
    %1843 = vmatpush2.msra.mxu0 0.0
    %1844 = vmatprep.subr.mxu0 0.0
    %1845 = vmatpush2.msra.mxu0 0.0
    %1846 = vmatprep.subr.mxu0 0.0
    %1847 = vmatpush2.msra.mxu0 0.0
    %1848 = vmatprep.subr.mxu0 0.0
    %1849 = vmatpush2.msra.mxu0 0.0
    %1850 = vmatprep.subr.mxu0 0.0
    %1851 = vmatpush2.msra.mxu0 0.0
    %1852 = vmatprep.subr.mxu0 0.0
    %1853 = vmatpush2.msra.mxu0 0.0
    %1854 = vmatprep.subr.mxu0 0.0
    %1855 = vmatpush2.msra.mxu0 0.0
    %1856 = vmatprep.subr.mxu0 0.0
    %1857 = vmatpush2.msra.mxu0 0.0
    %1858 = vmatprep.subr.mxu0 0.0
    %1859 = vmatpush2.msra.mxu0 0.0
    %1860 = vmatprep.subr.mxu0 0.0
    %1861 = vmatpush2.msra.mxu0 0.0
    %1862 = vmatprep.mubr.f32.mxu0 0.0
    %v1863 = vand.u32 %v1410, 4294901760
    %v1864 = vsub.f32 %v1410, %v1863
    %v1865 = vand.u32 %v1864, 4294901760
    %1866 = vmatmul.mubr.f32.gmra.mxu0 %v1865
    %v1867 = vpop.f32.mrf.mxu0
    %v1868 = vadd.f32 %v1779, %v1867
    %v1869 = vpop.f32.mrf.mxu0
    %1870 = vdwg.mxu0
    %1871 = vmatprep.subr.mxu0 0.0
    %v1872 = vand.u32 %v1427, 4294901760
    %v1873 = vsub.f32 %v1427, %v1872
    %v1874 = vand.u32 %v1873, 4294901760
    %1875 = vmatpush1.msra.mxu0 %v1874
    %1876 = vmatprep.subr.mxu0 0.0
    %v1877 = vand.u32 %v1426, 4294901760
    %v1878 = vsub.f32 %v1426, %v1877
    %v1879 = vand.u32 %v1878, 4294901760
    %1880 = vmatpush1.msra.mxu0 %v1879
    %1881 = vmatprep.subr.mxu0 0.0
    %v1882 = vand.u32 %v1425, 4294901760
    %v1883 = vsub.f32 %v1425, %v1882
    %v1884 = vand.u32 %v1883, 4294901760
    %1885 = vmatpush1.msra.mxu0 %v1884
    %1886 = vmatprep.subr.mxu0 0.0
    %v1887 = vand.u32 %v1424, 4294901760
    %v1888 = vsub.f32 %v1424, %v1887
    %v1889 = vand.u32 %v1888, 4294901760
    %1890 = vmatpush1.msra.mxu0 %v1889
    %1891 = vmatprep.subr.mxu0 0.0
    %v1892 = vand.u32 %v1423, 4294901760
    %v1893 = vsub.f32 %v1423, %v1892
    %v1894 = vand.u32 %v1893, 4294901760
    %1895 = vmatpush1.msra.mxu0 %v1894
    %1896 = vmatprep.subr.mxu0 0.0
    %v1897 = vand.u32 %v1422, 4294901760
    %v1898 = vsub.f32 %v1422, %v1897
    %v1899 = vand.u32 %v1898, 4294901760
    %1900 = vmatpush1.msra.mxu0 %v1899
    %1901 = vmatprep.subr.mxu0 0.0
    %v1902 = vand.u32 %v1421, 4294901760
    %v1903 = vsub.f32 %v1421, %v1902
    %v1904 = vand.u32 %v1903, 4294901760
    %1905 = vmatpush1.msra.mxu0 %v1904
    %1906 = vmatprep.subr.mxu0 0.0
    %v1907 = vand.u32 %v1420, 4294901760
    %v1908 = vsub.f32 %v1420, %v1907
    %v1909 = vand.u32 %v1908, 4294901760
    %1910 = vmatpush1.msra.mxu0 %v1909
    %1911 = vmatprep.subr.mxu0 0.0
    %v1912 = vand.u32 %v1419, 4294901760
    %v1913 = vsub.f32 %v1419, %v1912
    %v1914 = vand.u32 %v1913, 4294901760
    %1915 = vmatpush1.msra.mxu0 %v1914
    %1916 = vmatprep.subr.mxu0 0.0
    %v1917 = vand.u32 %v1418, 4294901760
    %v1918 = vsub.f32 %v1418, %v1917
    %v1919 = vand.u32 %v1918, 4294901760
    %1920 = vmatpush1.msra.mxu0 %v1919
    %1921 = vmatprep.subr.mxu0 0.0
    %v1922 = vand.u32 %v1417, 4294901760
    %v1923 = vsub.f32 %v1417, %v1922
    %v1924 = vand.u32 %v1923, 4294901760
    %1925 = vmatpush1.msra.mxu0 %v1924
    %1926 = vmatprep.subr.mxu0 0.0
    %v1927 = vand.u32 %v1416, 4294901760
    %v1928 = vsub.f32 %v1416, %v1927
    %v1929 = vand.u32 %v1928, 4294901760
    %1930 = vmatpush1.msra.mxu0 %v1929
    %1931 = vmatprep.subr.mxu0 0.0
    %v1932 = vand.u32 %v1415, 4294901760
    %v1933 = vsub.f32 %v1415, %v1932
    %v1934 = vand.u32 %v1933, 4294901760
    %1935 = vmatpush1.msra.mxu0 %v1934
    %1936 = vmatprep.subr.mxu0 0.0
    %v1937 = vand.u32 %v1414, 4294901760
    %v1938 = vsub.f32 %v1414, %v1937
    %v1939 = vand.u32 %v1938, 4294901760
    %1940 = vmatpush1.msra.mxu0 %v1939
    %1941 = vmatprep.subr.mxu0 0.0
    %v1942 = vand.u32 %v1413, 4294901760
    %v1943 = vsub.f32 %v1413, %v1942
    %v1944 = vand.u32 %v1943, 4294901760
    %1945 = vmatpush1.msra.mxu0 %v1944
    %1946 = vmatprep.subr.mxu0 0.0
    %v1947 = vand.u32 %v1412, 4294901760
    %v1948 = vsub.f32 %v1412, %v1947
    %v1949 = vand.u32 %v1948, 4294901760
    %1950 = vmatpush1.msra.mxu0 %v1949
    %1951 = vmatprep.subr.mxu0 0.0
    %1952 = vmatpush2.msra.mxu0 0.0
    %1953 = vmatprep.subr.mxu0 0.0
    %1954 = vmatpush2.msra.mxu0 0.0
    %1955 = vmatprep.subr.mxu0 0.0
    %1956 = vmatpush2.msra.mxu0 0.0
    %1957 = vmatprep.subr.mxu0 0.0
    %1958 = vmatpush2.msra.mxu0 0.0
    %1959 = vmatprep.subr.mxu0 0.0
    %1960 = vmatpush2.msra.mxu0 0.0
    %1961 = vmatprep.subr.mxu0 0.0
    %1962 = vmatpush2.msra.mxu0 0.0
    %1963 = vmatprep.subr.mxu0 0.0
    %1964 = vmatpush2.msra.mxu0 0.0
    %1965 = vmatprep.subr.mxu0 0.0
    %1966 = vmatpush2.msra.mxu0 0.0
    %1967 = vmatprep.subr.mxu0 0.0
    %1968 = vmatpush2.msra.mxu0 0.0
    %1969 = vmatprep.subr.mxu0 0.0
    %1970 = vmatpush2.msra.mxu0 0.0
    %1971 = vmatprep.subr.mxu0 0.0
    %1972 = vmatpush2.msra.mxu0 0.0
    %1973 = vmatprep.subr.mxu0 0.0
    %1974 = vmatpush2.msra.mxu0 0.0
    %1975 = vmatprep.subr.mxu0 0.0
    %1976 = vmatpush2.msra.mxu0 0.0
    %1977 = vmatprep.subr.mxu0 0.0
    %1978 = vmatpush2.msra.mxu0 0.0
    %1979 = vmatprep.subr.mxu0 0.0
    %1980 = vmatpush2.msra.mxu0 0.0
    %1981 = vmatprep.subr.mxu0 0.0
    %1982 = vmatpush2.msra.mxu0 0.0
    %1983 = vmatprep.mubr.f32.mxu0 0.0
    %v1984 = vand.u32 %v1410, 4294901760
    %1985 = vmatmul.mubr.f32.gmra.mxu0 %v1984
    %v1986 = vpop.f32.mrf.mxu0
    %v1987 = vadd.f32 %v1868, %v1986
    %v1988 = vpop.f32.mrf.mxu0
    %1989 = vdwg.mxu0
    %1990 = vmatprep.subr.mxu0 0.0
    %v1991 = vand.u32 %v1427, 4294901760
    %1992 = vmatpush1.msra.mxu0 %v1991
    %1993 = vmatprep.subr.mxu0 0.0
    %v1994 = vand.u32 %v1426, 4294901760
    %1995 = vmatpush1.msra.mxu0 %v1994
    %1996 = vmatprep.subr.mxu0 0.0
    %v1997 = vand.u32 %v1425, 4294901760
    %1998 = vmatpush1.msra.mxu0 %v1997
    %1999 = vmatprep.subr.mxu0 0.0
    %v2000 = vand.u32 %v1424, 4294901760
    %2001 = vmatpush1.msra.mxu0 %v2000
    %2002 = vmatprep.subr.mxu0 0.0
    %v2003 = vand.u32 %v1423, 4294901760
    %2004 = vmatpush1.msra.mxu0 %v2003
    %2005 = vmatprep.subr.mxu0 0.0
    %v2006 = vand.u32 %v1422, 4294901760
    %2007 = vmatpush1.msra.mxu0 %v2006
    %2008 = vmatprep.subr.mxu0 0.0
    %v2009 = vand.u32 %v1421, 4294901760
    %2010 = vmatpush1.msra.mxu0 %v2009
    %2011 = vmatprep.subr.mxu0 0.0
    %v2012 = vand.u32 %v1420, 4294901760
    %2013 = vmatpush1.msra.mxu0 %v2012
    %2014 = vmatprep.subr.mxu0 0.0
    %v2015 = vand.u32 %v1419, 4294901760
    %2016 = vmatpush1.msra.mxu0 %v2015
    %2017 = vmatprep.subr.mxu0 0.0
    %v2018 = vand.u32 %v1418, 4294901760
    %2019 = vmatpush1.msra.mxu0 %v2018
    %2020 = vmatprep.subr.mxu0 0.0
    %v2021 = vand.u32 %v1417, 4294901760
    %2022 = vmatpush1.msra.mxu0 %v2021
    %2023 = vmatprep.subr.mxu0 0.0
    %v2024 = vand.u32 %v1416, 4294901760
    %2025 = vmatpush1.msra.mxu0 %v2024
    %2026 = vmatprep.subr.mxu0 0.0
    %v2027 = vand.u32 %v1415, 4294901760
    %2028 = vmatpush1.msra.mxu0 %v2027
    %2029 = vmatprep.subr.mxu0 0.0
    %v2030 = vand.u32 %v1414, 4294901760
    %2031 = vmatpush1.msra.mxu0 %v2030
    %2032 = vmatprep.subr.mxu0 0.0
    %v2033 = vand.u32 %v1413, 4294901760
    %2034 = vmatpush1.msra.mxu0 %v2033
    %2035 = vmatprep.subr.mxu0 0.0
    %v2036 = vand.u32 %v1412, 4294901760
    %2037 = vmatpush1.msra.mxu0 %v2036
    %2038 = vmatprep.subr.mxu0 0.0
    %2039 = vmatpush2.msra.mxu0 0.0
    %2040 = vmatprep.subr.mxu0 0.0
    %2041 = vmatpush2.msra.mxu0 0.0
    %2042 = vmatprep.subr.mxu0 0.0
    %2043 = vmatpush2.msra.mxu0 0.0
    %2044 = vmatprep.subr.mxu0 0.0
    %2045 = vmatpush2.msra.mxu0 0.0
    %2046 = vmatprep.subr.mxu0 0.0
    %2047 = vmatpush2.msra.mxu0 0.0
    %2048 = vmatprep.subr.mxu0 0.0
    %2049 = vmatpush2.msra.mxu0 0.0
    %2050 = vmatprep.subr.mxu0 0.0
    %2051 = vmatpush2.msra.mxu0 0.0
    %2052 = vmatprep.subr.mxu0 0.0
    %2053 = vmatpush2.msra.mxu0 0.0
    %2054 = vmatprep.subr.mxu0 0.0
    %2055 = vmatpush2.msra.mxu0 0.0
    %2056 = vmatprep.subr.mxu0 0.0
    %2057 = vmatpush2.msra.mxu0 0.0
    %2058 = vmatprep.subr.mxu0 0.0
    %2059 = vmatpush2.msra.mxu0 0.0
    %2060 = vmatprep.subr.mxu0 0.0
    %2061 = vmatpush2.msra.mxu0 0.0
    %2062 = vmatprep.subr.mxu0 0.0
    %2063 = vmatpush2.msra.mxu0 0.0
    %2064 = vmatprep.subr.mxu0 0.0
    %2065 = vmatpush2.msra.mxu0 0.0
    %2066 = vmatprep.subr.mxu0 0.0
    %2067 = vmatpush2.msra.mxu0 0.0
    %2068 = vmatprep.subr.mxu0 0.0
    %2069 = vmatpush2.msra.mxu0 0.0
    %2070 = vmatprep.mubr.f32.mxu0 0.0
    %v2071 = vand.u32 %v1410, 4294901760
    %2072 = vmatmul.mubr.f32.gmra.mxu0 %v2071
    %v2073 = vpop.f32.mrf.mxu0
    %v2074 = vadd.f32 %v1987, %v2073
    %v2075 = vpop.f32.mrf.mxu0
    %2076 = vdwg.mxu0
    %v2077 = vmax.f32 %v2074, 0.0
    %s2078 = scalar_lea.vmem [#allocation7], 256
    %v2079 = vld [vmem:[%s2078] sm:$0xff]
    %v2080 = vld [vmem:[%s2078 + $0x8] sm:$0xff]
    %v2081 = vld [vmem:[%s2078 + $0x10] sm:$0xff]
    %v2082 = vld [vmem:[%s2078 + $0x18] sm:$0xff]
    %v2083 = vld [vmem:[%s2078 + $0x20] sm:$0xff]
    %v2084 = vld [vmem:[%s2078 + $0x28] sm:$0xff]
    %v2085 = vld [vmem:[%s2078 + $0x30] sm:$0xff]
    %v2086 = vld [vmem:[%s2078 + $0x38] sm:$0xff]
    %v2087 = vld [vmem:[%s2078 + $0x40] sm:$0xff]
    %v2088 = vld [vmem:[%s2078 + $0x48] sm:$0xff]
    %v2089 = vld [vmem:[%s2078 + $0x50] sm:$0xff]
    %v2090 = vld [vmem:[%s2078 + $0x58] sm:$0xff]
    %v2091 = vld [vmem:[%s2078 + $0x60] sm:$0xff]
    %v2092 = vld [vmem:[%s2078 + $0x68] sm:$0xff]
    %v2093 = vld [vmem:[%s2078 + $0x70] sm:$0xff]
    %v2094 = vld [vmem:[%s2078 + $0x78] sm:$0xff]
    %s2095 = scalar_lea.vmem %s4, 2
    %v2096 = vld [vmem:[%s2095] sm:$0x1]
    %v2098 = vlaneseq
    %v2099 = vshrl.u32 %v2098, 7
    %v2100 = vsub.s32 0, %v2099
    %v2101 = vrot.slane %v2096, %v2100
    %2103 = vmatprep.subr.mxu0 0.0
    %v2104 = vand.u32 %v2094, 4294901760
    %2105 = vmatpush1.msra.mxu0 %v2104
    %2106 = vmatprep.subr.mxu0 0.0
    %v2107 = vand.u32 %v2093, 4294901760
    %2108 = vmatpush1.msra.mxu0 %v2107
    %2109 = vmatprep.subr.mxu0 0.0
    %v2110 = vand.u32 %v2092, 4294901760
    %2111 = vmatpush1.msra.mxu0 %v2110
    %2112 = vmatprep.subr.mxu0 0.0
    %v2113 = vand.u32 %v2091, 4294901760
    %2114 = vmatpush1.msra.mxu0 %v2113
    %2115 = vmatprep.subr.mxu0 0.0
    %v2116 = vand.u32 %v2090, 4294901760
    %2117 = vmatpush1.msra.mxu0 %v2116
    %2118 = vmatprep.subr.mxu0 0.0
    %v2119 = vand.u32 %v2089, 4294901760
    %2120 = vmatpush1.msra.mxu0 %v2119
    %2121 = vmatprep.subr.mxu0 0.0
    %v2122 = vand.u32 %v2088, 4294901760
    %2123 = vmatpush1.msra.mxu0 %v2122
    %2124 = vmatprep.subr.mxu0 0.0
    %v2125 = vand.u32 %v2087, 4294901760
    %2126 = vmatpush1.msra.mxu0 %v2125
    %2127 = vmatprep.subr.mxu0 0.0
    %v2128 = vand.u32 %v2086, 4294901760
    %2129 = vmatpush1.msra.mxu0 %v2128
    %2130 = vmatprep.subr.mxu0 0.0
    %v2131 = vand.u32 %v2085, 4294901760
    %2132 = vmatpush1.msra.mxu0 %v2131
    %2133 = vmatprep.subr.mxu0 0.0
    %v2134 = vand.u32 %v2084, 4294901760
    %2135 = vmatpush1.msra.mxu0 %v2134
    %2136 = vmatprep.subr.mxu0 0.0
    %v2137 = vand.u32 %v2083, 4294901760
    %2138 = vmatpush1.msra.mxu0 %v2137
    %2139 = vmatprep.subr.mxu0 0.0
    %v2140 = vand.u32 %v2082, 4294901760
    %2141 = vmatpush1.msra.mxu0 %v2140
    %2142 = vmatprep.subr.mxu0 0.0
    %v2143 = vand.u32 %v2081, 4294901760
    %2144 = vmatpush1.msra.mxu0 %v2143
    %2145 = vmatprep.subr.mxu0 0.0
    %v2146 = vand.u32 %v2080, 4294901760
    %2147 = vmatpush1.msra.mxu0 %v2146
    %2148 = vmatprep.subr.mxu0 0.0
    %v2149 = vand.u32 %v2079, 4294901760
    %2150 = vmatpush1.msra.mxu0 %v2149
    %2151 = vmatprep.subr.mxu0 0.0
    %2152 = vmatpush2.msra.mxu0 0.0
    %2153 = vmatprep.subr.mxu0 0.0
    %2154 = vmatpush2.msra.mxu0 0.0
    %2155 = vmatprep.subr.mxu0 0.0
    %2156 = vmatpush2.msra.mxu0 0.0
    %2157 = vmatprep.subr.mxu0 0.0
    %2158 = vmatpush2.msra.mxu0 0.0
    %2159 = vmatprep.subr.mxu0 0.0
    %2160 = vmatpush2.msra.mxu0 0.0
    %2161 = vmatprep.subr.mxu0 0.0
    %2162 = vmatpush2.msra.mxu0 0.0
    %2163 = vmatprep.subr.mxu0 0.0
    %2164 = vmatpush2.msra.mxu0 0.0
    %2165 = vmatprep.subr.mxu0 0.0
    %2166 = vmatpush2.msra.mxu0 0.0
    %2167 = vmatprep.subr.mxu0 0.0
    %2168 = vmatpush2.msra.mxu0 0.0
    %2169 = vmatprep.subr.mxu0 0.0
    %2170 = vmatpush2.msra.mxu0 0.0
    %2171 = vmatprep.subr.mxu0 0.0
    %2172 = vmatpush2.msra.mxu0 0.0
    %2173 = vmatprep.subr.mxu0 0.0
    %2174 = vmatpush2.msra.mxu0 0.0
    %2175 = vmatprep.subr.mxu0 0.0
    %2176 = vmatpush2.msra.mxu0 0.0
    %2177 = vmatprep.subr.mxu0 0.0
    %2178 = vmatpush2.msra.mxu0 0.0
    %2179 = vmatprep.subr.mxu0 0.0
    %2180 = vmatpush2.msra.mxu0 0.0
    %2181 = vmatprep.subr.mxu0 0.0
    %2182 = vmatpush2.msra.mxu0 0.0
    %2183 = vmatprep.mubr.f32.mxu0 0.0
    %v2184 = vand.u32 %v2077, 4294901760
    %v2185 = vsub.f32 %v2077, %v2184
    %v2186 = vand.u32 %v2185, 4294901760
    %v2187 = vsub.f32 %v2185, %v2186
    %v2188 = vand.u32 %v2187, 4294901760
    %2189 = vmatmul.mubr.f32.gmra.mxu0 %v2188
    %v2190 = vpop.f32.mrf.mxu0
    %v2191 = vadd.f32 %v2101, %v2190
    %v2192 = vpop.f32.mrf.mxu0
    %2193 = vdwg.mxu0
    %2194 = vmatprep.subr.mxu0 0.0
    %v2195 = vand.u32 %v2094, 4294901760
    %v2196 = vsub.f32 %v2094, %v2195
    %v2197 = vand.u32 %v2196, 4294901760
    %v2198 = vsub.f32 %v2196, %v2197
    %v2199 = vand.u32 %v2198, 4294901760
    %2200 = vmatpush1.msra.mxu0 %v2199
    %2201 = vmatprep.subr.mxu0 0.0
    %v2202 = vand.u32 %v2093, 4294901760
    %v2203 = vsub.f32 %v2093, %v2202
    %v2204 = vand.u32 %v2203, 4294901760
    %v2205 = vsub.f32 %v2203, %v2204
    %v2206 = vand.u32 %v2205, 4294901760
    %2207 = vmatpush1.msra.mxu0 %v2206
    %2208 = vmatprep.subr.mxu0 0.0
    %v2209 = vand.u32 %v2092, 4294901760
    %v2210 = vsub.f32 %v2092, %v2209
    %v2211 = vand.u32 %v2210, 4294901760
    %v2212 = vsub.f32 %v2210, %v2211
    %v2213 = vand.u32 %v2212, 4294901760
    %2214 = vmatpush1.msra.mxu0 %v2213
    %2215 = vmatprep.subr.mxu0 0.0
    %v2216 = vand.u32 %v2091, 4294901760
    %v2217 = vsub.f32 %v2091, %v2216
    %v2218 = vand.u32 %v2217, 4294901760
    %v2219 = vsub.f32 %v2217, %v2218
    %v2220 = vand.u32 %v2219, 4294901760
    %2221 = vmatpush1.msra.mxu0 %v2220
    %2222 = vmatprep.subr.mxu0 0.0
    %v2223 = vand.u32 %v2090, 4294901760
    %v2224 = vsub.f32 %v2090, %v2223
    %v2225 = vand.u32 %v2224, 4294901760
    %v2226 = vsub.f32 %v2224, %v2225
    %v2227 = vand.u32 %v2226, 4294901760
    %2228 = vmatpush1.msra.mxu0 %v2227
    %2229 = vmatprep.subr.mxu0 0.0
    %v2230 = vand.u32 %v2089, 4294901760
    %v2231 = vsub.f32 %v2089, %v2230
    %v2232 = vand.u32 %v2231, 4294901760
    %v2233 = vsub.f32 %v2231, %v2232
    %v2234 = vand.u32 %v2233, 4294901760
    %2235 = vmatpush1.msra.mxu0 %v2234
    %2236 = vmatprep.subr.mxu0 0.0
    %v2237 = vand.u32 %v2088, 4294901760
    %v2238 = vsub.f32 %v2088, %v2237
    %v2239 = vand.u32 %v2238, 4294901760
    %v2240 = vsub.f32 %v2238, %v2239
    %v2241 = vand.u32 %v2240, 4294901760
    %2242 = vmatpush1.msra.mxu0 %v2241
    %2243 = vmatprep.subr.mxu0 0.0
    %v2244 = vand.u32 %v2087, 4294901760
    %v2245 = vsub.f32 %v2087, %v2244
    %v2246 = vand.u32 %v2245, 4294901760
    %v2247 = vsub.f32 %v2245, %v2246
    %v2248 = vand.u32 %v2247, 4294901760
    %2249 = vmatpush1.msra.mxu0 %v2248
    %2250 = vmatprep.subr.mxu0 0.0
    %v2251 = vand.u32 %v2086, 4294901760
    %v2252 = vsub.f32 %v2086, %v2251
    %v2253 = vand.u32 %v2252, 4294901760
    %v2254 = vsub.f32 %v2252, %v2253
    %v2255 = vand.u32 %v2254, 4294901760
    %2256 = vmatpush1.msra.mxu0 %v2255
    %2257 = vmatprep.subr.mxu0 0.0
    %v2258 = vand.u32 %v2085, 4294901760
    %v2259 = vsub.f32 %v2085, %v2258
    %v2260 = vand.u32 %v2259, 4294901760
    %v2261 = vsub.f32 %v2259, %v2260
    %v2262 = vand.u32 %v2261, 4294901760
    %2263 = vmatpush1.msra.mxu0 %v2262
    %2264 = vmatprep.subr.mxu0 0.0
    %v2265 = vand.u32 %v2084, 4294901760
    %v2266 = vsub.f32 %v2084, %v2265
    %v2267 = vand.u32 %v2266, 4294901760
    %v2268 = vsub.f32 %v2266, %v2267
    %v2269 = vand.u32 %v2268, 4294901760
    %2270 = vmatpush1.msra.mxu0 %v2269
    %2271 = vmatprep.subr.mxu0 0.0
    %v2272 = vand.u32 %v2083, 4294901760
    %v2273 = vsub.f32 %v2083, %v2272
    %v2274 = vand.u32 %v2273, 4294901760
    %v2275 = vsub.f32 %v2273, %v2274
    %v2276 = vand.u32 %v2275, 4294901760
    %2277 = vmatpush1.msra.mxu0 %v2276
    %2278 = vmatprep.subr.mxu0 0.0
    %v2279 = vand.u32 %v2082, 4294901760
    %v2280 = vsub.f32 %v2082, %v2279
    %v2281 = vand.u32 %v2280, 4294901760
    %v2282 = vsub.f32 %v2280, %v2281
    %v2283 = vand.u32 %v2282, 4294901760
    %2284 = vmatpush1.msra.mxu0 %v2283
    %2285 = vmatprep.subr.mxu0 0.0
    %v2286 = vand.u32 %v2081, 4294901760
    %v2287 = vsub.f32 %v2081, %v2286
    %v2288 = vand.u32 %v2287, 4294901760
    %v2289 = vsub.f32 %v2287, %v2288
    %v2290 = vand.u32 %v2289, 4294901760
    %2291 = vmatpush1.msra.mxu0 %v2290
    %2292 = vmatprep.subr.mxu0 0.0
    %v2293 = vand.u32 %v2080, 4294901760
    %v2294 = vsub.f32 %v2080, %v2293
    %v2295 = vand.u32 %v2294, 4294901760
    %v2296 = vsub.f32 %v2294, %v2295
    %v2297 = vand.u32 %v2296, 4294901760
    %2298 = vmatpush1.msra.mxu0 %v2297
    %2299 = vmatprep.subr.mxu0 0.0
    %v2300 = vand.u32 %v2079, 4294901760
    %v2301 = vsub.f32 %v2079, %v2300
    %v2302 = vand.u32 %v2301, 4294901760
    %v2303 = vsub.f32 %v2301, %v2302
    %v2304 = vand.u32 %v2303, 4294901760
    %2305 = vmatpush1.msra.mxu0 %v2304
    %2306 = vmatprep.subr.mxu0 0.0
    %2307 = vmatpush2.msra.mxu0 0.0
    %2308 = vmatprep.subr.mxu0 0.0
    %2309 = vmatpush2.msra.mxu0 0.0
    %2310 = vmatprep.subr.mxu0 0.0
    %2311 = vmatpush2.msra.mxu0 0.0
    %2312 = vmatprep.subr.mxu0 0.0
    %2313 = vmatpush2.msra.mxu0 0.0
    %2314 = vmatprep.subr.mxu0 0.0
    %2315 = vmatpush2.msra.mxu0 0.0
    %2316 = vmatprep.subr.mxu0 0.0
    %2317 = vmatpush2.msra.mxu0 0.0
    %2318 = vmatprep.subr.mxu0 0.0
    %2319 = vmatpush2.msra.mxu0 0.0
    %2320 = vmatprep.subr.mxu0 0.0
    %2321 = vmatpush2.msra.mxu0 0.0
    %2322 = vmatprep.subr.mxu0 0.0
    %2323 = vmatpush2.msra.mxu0 0.0
    %2324 = vmatprep.subr.mxu0 0.0
    %2325 = vmatpush2.msra.mxu0 0.0
    %2326 = vmatprep.subr.mxu0 0.0
    %2327 = vmatpush2.msra.mxu0 0.0
    %2328 = vmatprep.subr.mxu0 0.0
    %2329 = vmatpush2.msra.mxu0 0.0
    %2330 = vmatprep.subr.mxu0 0.0
    %2331 = vmatpush2.msra.mxu0 0.0
    %2332 = vmatprep.subr.mxu0 0.0
    %2333 = vmatpush2.msra.mxu0 0.0
    %2334 = vmatprep.subr.mxu0 0.0
    %2335 = vmatpush2.msra.mxu0 0.0
    %2336 = vmatprep.subr.mxu0 0.0
    %2337 = vmatpush2.msra.mxu0 0.0
    %2338 = vmatprep.mubr.f32.mxu0 0.0
    %v2339 = vand.u32 %v2077, 4294901760
    %2340 = vmatmul.mubr.f32.gmra.mxu0 %v2339
    %v2341 = vpop.f32.mrf.mxu0
    %v2342 = vadd.f32 %v2191, %v2341
    %v2343 = vpop.f32.mrf.mxu0
    %2344 = vdwg.mxu0
    %2345 = vmatprep.subr.mxu0 0.0
    %v2346 = vand.u32 %v2094, 4294901760
    %v2347 = vsub.f32 %v2094, %v2346
    %2348 = vmatpush1.msra.mxu0 %v2347
    %2349 = vmatprep.subr.mxu0 0.0
    %v2350 = vand.u32 %v2093, 4294901760
    %v2351 = vsub.f32 %v2093, %v2350
    %2352 = vmatpush1.msra.mxu0 %v2351
    %2353 = vmatprep.subr.mxu0 0.0
    %v2354 = vand.u32 %v2092, 4294901760
    %v2355 = vsub.f32 %v2092, %v2354
    %2356 = vmatpush1.msra.mxu0 %v2355
    %2357 = vmatprep.subr.mxu0 0.0
    %v2358 = vand.u32 %v2091, 4294901760
    %v2359 = vsub.f32 %v2091, %v2358
    %2360 = vmatpush1.msra.mxu0 %v2359
    %2361 = vmatprep.subr.mxu0 0.0
    %v2362 = vand.u32 %v2090, 4294901760
    %v2363 = vsub.f32 %v2090, %v2362
    %2364 = vmatpush1.msra.mxu0 %v2363
    %2365 = vmatprep.subr.mxu0 0.0
    %v2366 = vand.u32 %v2089, 4294901760
    %v2367 = vsub.f32 %v2089, %v2366
    %2368 = vmatpush1.msra.mxu0 %v2367
    %2369 = vmatprep.subr.mxu0 0.0
    %v2370 = vand.u32 %v2088, 4294901760
    %v2371 = vsub.f32 %v2088, %v2370
    %2372 = vmatpush1.msra.mxu0 %v2371
    %2373 = vmatprep.subr.mxu0 0.0
    %v2374 = vand.u32 %v2087, 4294901760
    %v2375 = vsub.f32 %v2087, %v2374
    %2376 = vmatpush1.msra.mxu0 %v2375
    %2377 = vmatprep.subr.mxu0 0.0
    %v2378 = vand.u32 %v2086, 4294901760
    %v2379 = vsub.f32 %v2086, %v2378
    %2380 = vmatpush1.msra.mxu0 %v2379
    %2381 = vmatprep.subr.mxu0 0.0
    %v2382 = vand.u32 %v2085, 4294901760
    %v2383 = vsub.f32 %v2085, %v2382
    %2384 = vmatpush1.msra.mxu0 %v2383
    %2385 = vmatprep.subr.mxu0 0.0
    %v2386 = vand.u32 %v2084, 4294901760
    %v2387 = vsub.f32 %v2084, %v2386
    %2388 = vmatpush1.msra.mxu0 %v2387
    %2389 = vmatprep.subr.mxu0 0.0
    %v2390 = vand.u32 %v2083, 4294901760
    %v2391 = vsub.f32 %v2083, %v2390
    %2392 = vmatpush1.msra.mxu0 %v2391
    %2393 = vmatprep.subr.mxu0 0.0
    %v2394 = vand.u32 %v2082, 4294901760
    %v2395 = vsub.f32 %v2082, %v2394
    %2396 = vmatpush1.msra.mxu0 %v2395
    %2397 = vmatprep.subr.mxu0 0.0
    %v2398 = vand.u32 %v2081, 4294901760
    %v2399 = vsub.f32 %v2081, %v2398
    %2400 = vmatpush1.msra.mxu0 %v2399
    %2401 = vmatprep.subr.mxu0 0.0
    %v2402 = vand.u32 %v2080, 4294901760
    %v2403 = vsub.f32 %v2080, %v2402
    %2404 = vmatpush1.msra.mxu0 %v2403
    %2405 = vmatprep.subr.mxu0 0.0
    %v2406 = vand.u32 %v2079, 4294901760
    %v2407 = vsub.f32 %v2079, %v2406
    %2408 = vmatpush1.msra.mxu0 %v2407
    %2409 = vmatprep.subr.mxu0 0.0
    %2410 = vmatpush2.msra.mxu0 0.0
    %2411 = vmatprep.subr.mxu0 0.0
    %2412 = vmatpush2.msra.mxu0 0.0
    %2413 = vmatprep.subr.mxu0 0.0
    %2414 = vmatpush2.msra.mxu0 0.0
    %2415 = vmatprep.subr.mxu0 0.0
    %2416 = vmatpush2.msra.mxu0 0.0
    %2417 = vmatprep.subr.mxu0 0.0
    %2418 = vmatpush2.msra.mxu0 0.0
    %2419 = vmatprep.subr.mxu0 0.0
    %2420 = vmatpush2.msra.mxu0 0.0
    %2421 = vmatprep.subr.mxu0 0.0
    %2422 = vmatpush2.msra.mxu0 0.0
    %2423 = vmatprep.subr.mxu0 0.0
    %2424 = vmatpush2.msra.mxu0 0.0
    %2425 = vmatprep.subr.mxu0 0.0
    %2426 = vmatpush2.msra.mxu0 0.0
    %2427 = vmatprep.subr.mxu0 0.0
    %2428 = vmatpush2.msra.mxu0 0.0
    %2429 = vmatprep.subr.mxu0 0.0
    %2430 = vmatpush2.msra.mxu0 0.0
    %2431 = vmatprep.subr.mxu0 0.0
    %2432 = vmatpush2.msra.mxu0 0.0
    %2433 = vmatprep.subr.mxu0 0.0
    %2434 = vmatpush2.msra.mxu0 0.0
    %2435 = vmatprep.subr.mxu0 0.0
    %2436 = vmatpush2.msra.mxu0 0.0
    %2437 = vmatprep.subr.mxu0 0.0
    %2438 = vmatpush2.msra.mxu0 0.0
    %2439 = vmatprep.subr.mxu0 0.0
    %2440 = vmatpush2.msra.mxu0 0.0
    %2441 = vmatprep.mubr.f32.mxu0 0.0
    %v2442 = vand.u32 %v2077, 4294901760
    %v2443 = vsub.f32 %v2077, %v2442
    %2444 = vmatmul.mubr.f32.gmra.mxu0 %v2443
    %v2445 = vpop.f32.mrf.mxu0
    %v2446 = vadd.f32 %v2342, %v2445
    %v2447 = vpop.f32.mrf.mxu0
    %2448 = vdwg.mxu0
    %2449 = vmatprep.subr.mxu0 0.0
    %v2450 = vand.u32 %v2094, 4294901760
    %2451 = vmatpush1.msra.mxu0 %v2450
    %2452 = vmatprep.subr.mxu0 0.0
    %v2453 = vand.u32 %v2093, 4294901760
    %2454 = vmatpush1.msra.mxu0 %v2453
    %2455 = vmatprep.subr.mxu0 0.0
    %v2456 = vand.u32 %v2092, 4294901760
    %2457 = vmatpush1.msra.mxu0 %v2456
    %2458 = vmatprep.subr.mxu0 0.0
    %v2459 = vand.u32 %v2091, 4294901760
    %2460 = vmatpush1.msra.mxu0 %v2459
    %2461 = vmatprep.subr.mxu0 0.0
    %v2462 = vand.u32 %v2090, 4294901760
    %2463 = vmatpush1.msra.mxu0 %v2462
    %2464 = vmatprep.subr.mxu0 0.0
    %v2465 = vand.u32 %v2089, 4294901760
    %2466 = vmatpush1.msra.mxu0 %v2465
    %2467 = vmatprep.subr.mxu0 0.0
    %v2468 = vand.u32 %v2088, 4294901760
    %2469 = vmatpush1.msra.mxu0 %v2468
    %2470 = vmatprep.subr.mxu0 0.0
    %v2471 = vand.u32 %v2087, 4294901760
    %2472 = vmatpush1.msra.mxu0 %v2471
    %2473 = vmatprep.subr.mxu0 0.0
    %v2474 = vand.u32 %v2086, 4294901760
    %2475 = vmatpush1.msra.mxu0 %v2474
    %2476 = vmatprep.subr.mxu0 0.0
    %v2477 = vand.u32 %v2085, 4294901760
    %2478 = vmatpush1.msra.mxu0 %v2477
    %2479 = vmatprep.subr.mxu0 0.0
    %v2480 = vand.u32 %v2084, 4294901760
    %2481 = vmatpush1.msra.mxu0 %v2480
    %2482 = vmatprep.subr.mxu0 0.0
    %v2483 = vand.u32 %v2083, 4294901760
    %2484 = vmatpush1.msra.mxu0 %v2483
    %2485 = vmatprep.subr.mxu0 0.0
    %v2486 = vand.u32 %v2082, 4294901760
    %2487 = vmatpush1.msra.mxu0 %v2486
    %2488 = vmatprep.subr.mxu0 0.0
    %v2489 = vand.u32 %v2081, 4294901760
    %2490 = vmatpush1.msra.mxu0 %v2489
    %2491 = vmatprep.subr.mxu0 0.0
    %v2492 = vand.u32 %v2080, 4294901760
    %2493 = vmatpush1.msra.mxu0 %v2492
    %2494 = vmatprep.subr.mxu0 0.0
    %v2495 = vand.u32 %v2079, 4294901760
    %2496 = vmatpush1.msra.mxu0 %v2495
    %2497 = vmatprep.subr.mxu0 0.0
    %2498 = vmatpush2.msra.mxu0 0.0
    %2499 = vmatprep.subr.mxu0 0.0
    %2500 = vmatpush2.msra.mxu0 0.0
    %2501 = vmatprep.subr.mxu0 0.0
    %2502 = vmatpush2.msra.mxu0 0.0
    %2503 = vmatprep.subr.mxu0 0.0
    %2504 = vmatpush2.msra.mxu0 0.0
    %2505 = vmatprep.subr.mxu0 0.0
    %2506 = vmatpush2.msra.mxu0 0.0
    %2507 = vmatprep.subr.mxu0 0.0
    %2508 = vmatpush2.msra.mxu0 0.0
    %2509 = vmatprep.subr.mxu0 0.0
    %2510 = vmatpush2.msra.mxu0 0.0
    %2511 = vmatprep.subr.mxu0 0.0
    %2512 = vmatpush2.msra.mxu0 0.0
    %2513 = vmatprep.subr.mxu0 0.0
    %2514 = vmatpush2.msra.mxu0 0.0
    %2515 = vmatprep.subr.mxu0 0.0
    %2516 = vmatpush2.msra.mxu0 0.0
    %2517 = vmatprep.subr.mxu0 0.0
    %2518 = vmatpush2.msra.mxu0 0.0
    %2519 = vmatprep.subr.mxu0 0.0
    %2520 = vmatpush2.msra.mxu0 0.0
    %2521 = vmatprep.subr.mxu0 0.0
    %2522 = vmatpush2.msra.mxu0 0.0
    %2523 = vmatprep.subr.mxu0 0.0
    %2524 = vmatpush2.msra.mxu0 0.0
    %2525 = vmatprep.subr.mxu0 0.0
    %2526 = vmatpush2.msra.mxu0 0.0
    %2527 = vmatprep.subr.mxu0 0.0
    %2528 = vmatpush2.msra.mxu0 0.0
    %2529 = vmatprep.mubr.f32.mxu0 0.0
    %v2530 = vand.u32 %v2077, 4294901760
    %v2531 = vsub.f32 %v2077, %v2530
    %v2532 = vand.u32 %v2531, 4294901760
    %2533 = vmatmul.mubr.f32.gmra.mxu0 %v2532
    %v2534 = vpop.f32.mrf.mxu0
    %v2535 = vadd.f32 %v2446, %v2534
    %v2536 = vpop.f32.mrf.mxu0
    %2537 = vdwg.mxu0
    %2538 = vmatprep.subr.mxu0 0.0
    %v2539 = vand.u32 %v2094, 4294901760
    %v2540 = vsub.f32 %v2094, %v2539
    %v2541 = vand.u32 %v2540, 4294901760
    %2542 = vmatpush1.msra.mxu0 %v2541
    %2543 = vmatprep.subr.mxu0 0.0
    %v2544 = vand.u32 %v2093, 4294901760
    %v2545 = vsub.f32 %v2093, %v2544
    %v2546 = vand.u32 %v2545, 4294901760
    %2547 = vmatpush1.msra.mxu0 %v2546
    %2548 = vmatprep.subr.mxu0 0.0
    %v2549 = vand.u32 %v2092, 4294901760
    %v2550 = vsub.f32 %v2092, %v2549
    %v2551 = vand.u32 %v2550, 4294901760
    %2552 = vmatpush1.msra.mxu0 %v2551
    %2553 = vmatprep.subr.mxu0 0.0
    %v2554 = vand.u32 %v2091, 4294901760
    %v2555 = vsub.f32 %v2091, %v2554
    %v2556 = vand.u32 %v2555, 4294901760
    %2557 = vmatpush1.msra.mxu0 %v2556
    %2558 = vmatprep.subr.mxu0 0.0
    %v2559 = vand.u32 %v2090, 4294901760
    %v2560 = vsub.f32 %v2090, %v2559
    %v2561 = vand.u32 %v2560, 4294901760
    %2562 = vmatpush1.msra.mxu0 %v2561
    %2563 = vmatprep.subr.mxu0 0.0
    %v2564 = vand.u32 %v2089, 4294901760
    %v2565 = vsub.f32 %v2089, %v2564
    %v2566 = vand.u32 %v2565, 4294901760
    %2567 = vmatpush1.msra.mxu0 %v2566
    %2568 = vmatprep.subr.mxu0 0.0
    %v2569 = vand.u32 %v2088, 4294901760
    %v2570 = vsub.f32 %v2088, %v2569
    %v2571 = vand.u32 %v2570, 4294901760
    %2572 = vmatpush1.msra.mxu0 %v2571
    %2573 = vmatprep.subr.mxu0 0.0
    %v2574 = vand.u32 %v2087, 4294901760
    %v2575 = vsub.f32 %v2087, %v2574
    %v2576 = vand.u32 %v2575, 4294901760
    %2577 = vmatpush1.msra.mxu0 %v2576
    %2578 = vmatprep.subr.mxu0 0.0
    %v2579 = vand.u32 %v2086, 4294901760
    %v2580 = vsub.f32 %v2086, %v2579
    %v2581 = vand.u32 %v2580, 4294901760
    %2582 = vmatpush1.msra.mxu0 %v2581
    %2583 = vmatprep.subr.mxu0 0.0
    %v2584 = vand.u32 %v2085, 4294901760
    %v2585 = vsub.f32 %v2085, %v2584
    %v2586 = vand.u32 %v2585, 4294901760
    %2587 = vmatpush1.msra.mxu0 %v2586
    %2588 = vmatprep.subr.mxu0 0.0
    %v2589 = vand.u32 %v2084, 4294901760
    %v2590 = vsub.f32 %v2084, %v2589
    %v2591 = vand.u32 %v2590, 4294901760
    %2592 = vmatpush1.msra.mxu0 %v2591
    %2593 = vmatprep.subr.mxu0 0.0
    %v2594 = vand.u32 %v2083, 4294901760
    %v2595 = vsub.f32 %v2083, %v2594
    %v2596 = vand.u32 %v2595, 4294901760
    %2597 = vmatpush1.msra.mxu0 %v2596
    %2598 = vmatprep.subr.mxu0 0.0
    %v2599 = vand.u32 %v2082, 4294901760
    %v2600 = vsub.f32 %v2082, %v2599
    %v2601 = vand.u32 %v2600, 4294901760
    %2602 = vmatpush1.msra.mxu0 %v2601
    %2603 = vmatprep.subr.mxu0 0.0
    %v2604 = vand.u32 %v2081, 4294901760
    %v2605 = vsub.f32 %v2081, %v2604
    %v2606 = vand.u32 %v2605, 4294901760
    %2607 = vmatpush1.msra.mxu0 %v2606
    %2608 = vmatprep.subr.mxu0 0.0
    %v2609 = vand.u32 %v2080, 4294901760
    %v2610 = vsub.f32 %v2080, %v2609
    %v2611 = vand.u32 %v2610, 4294901760
    %2612 = vmatpush1.msra.mxu0 %v2611
    %2613 = vmatprep.subr.mxu0 0.0
    %v2614 = vand.u32 %v2079, 4294901760
    %v2615 = vsub.f32 %v2079, %v2614
    %v2616 = vand.u32 %v2615, 4294901760
    %2617 = vmatpush1.msra.mxu0 %v2616
    %2618 = vmatprep.subr.mxu0 0.0
    %2619 = vmatpush2.msra.mxu0 0.0
    %2620 = vmatprep.subr.mxu0 0.0
    %2621 = vmatpush2.msra.mxu0 0.0
    %2622 = vmatprep.subr.mxu0 0.0
    %2623 = vmatpush2.msra.mxu0 0.0
    %2624 = vmatprep.subr.mxu0 0.0
    %2625 = vmatpush2.msra.mxu0 0.0
    %2626 = vmatprep.subr.mxu0 0.0
    %2627 = vmatpush2.msra.mxu0 0.0
    %2628 = vmatprep.subr.mxu0 0.0
    %2629 = vmatpush2.msra.mxu0 0.0
    %2630 = vmatprep.subr.mxu0 0.0
    %2631 = vmatpush2.msra.mxu0 0.0
    %2632 = vmatprep.subr.mxu0 0.0
    %2633 = vmatpush2.msra.mxu0 0.0
    %2634 = vmatprep.subr.mxu0 0.0
    %2635 = vmatpush2.msra.mxu0 0.0
    %2636 = vmatprep.subr.mxu0 0.0
    %2637 = vmatpush2.msra.mxu0 0.0
    %2638 = vmatprep.subr.mxu0 0.0
    %2639 = vmatpush2.msra.mxu0 0.0
    %2640 = vmatprep.subr.mxu0 0.0
    %2641 = vmatpush2.msra.mxu0 0.0
    %2642 = vmatprep.subr.mxu0 0.0
    %2643 = vmatpush2.msra.mxu0 0.0
    %2644 = vmatprep.subr.mxu0 0.0
    %2645 = vmatpush2.msra.mxu0 0.0
    %2646 = vmatprep.subr.mxu0 0.0
    %2647 = vmatpush2.msra.mxu0 0.0
    %2648 = vmatprep.subr.mxu0 0.0
    %2649 = vmatpush2.msra.mxu0 0.0
    %2650 = vmatprep.mubr.f32.mxu0 0.0
    %v2651 = vand.u32 %v2077, 4294901760
    %2652 = vmatmul.mubr.f32.gmra.mxu0 %v2651
    %v2653 = vpop.f32.mrf.mxu0
    %v2654 = vadd.f32 %v2535, %v2653
    %v2655 = vpop.f32.mrf.mxu0
    %2656 = vdwg.mxu0
    %2657 = vmatprep.subr.mxu0 0.0
    %v2658 = vand.u32 %v2094, 4294901760
    %2659 = vmatpush1.msra.mxu0 %v2658
    %2660 = vmatprep.subr.mxu0 0.0
    %v2661 = vand.u32 %v2093, 4294901760
    %2662 = vmatpush1.msra.mxu0 %v2661
    %2663 = vmatprep.subr.mxu0 0.0
    %v2664 = vand.u32 %v2092, 4294901760
    %2665 = vmatpush1.msra.mxu0 %v2664
    %2666 = vmatprep.subr.mxu0 0.0
    %v2667 = vand.u32 %v2091, 4294901760
    %2668 = vmatpush1.msra.mxu0 %v2667
    %2669 = vmatprep.subr.mxu0 0.0
    %v2670 = vand.u32 %v2090, 4294901760
    %2671 = vmatpush1.msra.mxu0 %v2670
    %2672 = vmatprep.subr.mxu0 0.0
    %v2673 = vand.u32 %v2089, 4294901760
    %2674 = vmatpush1.msra.mxu0 %v2673
    %2675 = vmatprep.subr.mxu0 0.0
    %v2676 = vand.u32 %v2088, 4294901760
    %2677 = vmatpush1.msra.mxu0 %v2676
    %2678 = vmatprep.subr.mxu0 0.0
    %v2679 = vand.u32 %v2087, 4294901760
    %2680 = vmatpush1.msra.mxu0 %v2679
    %2681 = vmatprep.subr.mxu0 0.0
    %v2682 = vand.u32 %v2086, 4294901760
    %2683 = vmatpush1.msra.mxu0 %v2682
    %2684 = vmatprep.subr.mxu0 0.0
    %v2685 = vand.u32 %v2085, 4294901760
    %2686 = vmatpush1.msra.mxu0 %v2685
    %2687 = vmatprep.subr.mxu0 0.0
    %v2688 = vand.u32 %v2084, 4294901760
    %2689 = vmatpush1.msra.mxu0 %v2688
    %2690 = vmatprep.subr.mxu0 0.0
    %v2691 = vand.u32 %v2083, 4294901760
    %2692 = vmatpush1.msra.mxu0 %v2691
    %2693 = vmatprep.subr.mxu0 0.0
    %v2694 = vand.u32 %v2082, 4294901760
    %2695 = vmatpush1.msra.mxu0 %v2694
    %2696 = vmatprep.subr.mxu0 0.0
    %v2697 = vand.u32 %v2081, 4294901760
    %2698 = vmatpush1.msra.mxu0 %v2697
    %2699 = vmatprep.subr.mxu0 0.0
    %v2700 = vand.u32 %v2080, 4294901760
    %2701 = vmatpush1.msra.mxu0 %v2700
    %2702 = vmatprep.subr.mxu0 0.0
    %v2703 = vand.u32 %v2079, 4294901760
    %2704 = vmatpush1.msra.mxu0 %v2703
    %2705 = vmatprep.subr.mxu0 0.0
    %2706 = vmatpush2.msra.mxu0 0.0
    %2707 = vmatprep.subr.mxu0 0.0
    %2708 = vmatpush2.msra.mxu0 0.0
    %2709 = vmatprep.subr.mxu0 0.0
    %2710 = vmatpush2.msra.mxu0 0.0
    %2711 = vmatprep.subr.mxu0 0.0
    %2712 = vmatpush2.msra.mxu0 0.0
    %2713 = vmatprep.subr.mxu0 0.0
    %2714 = vmatpush2.msra.mxu0 0.0
    %2715 = vmatprep.subr.mxu0 0.0
    %2716 = vmatpush2.msra.mxu0 0.0
    %2717 = vmatprep.subr.mxu0 0.0
    %2718 = vmatpush2.msra.mxu0 0.0
    %2719 = vmatprep.subr.mxu0 0.0
    %2720 = vmatpush2.msra.mxu0 0.0
    %2721 = vmatprep.subr.mxu0 0.0
    %2722 = vmatpush2.msra.mxu0 0.0
    %2723 = vmatprep.subr.mxu0 0.0
    %2724 = vmatpush2.msra.mxu0 0.0
    %2725 = vmatprep.subr.mxu0 0.0
    %2726 = vmatpush2.msra.mxu0 0.0
    %2727 = vmatprep.subr.mxu0 0.0
    %2728 = vmatpush2.msra.mxu0 0.0
    %2729 = vmatprep.subr.mxu0 0.0
    %2730 = vmatpush2.msra.mxu0 0.0
    %2731 = vmatprep.subr.mxu0 0.0
    %2732 = vmatpush2.msra.mxu0 0.0
    %2733 = vmatprep.subr.mxu0 0.0
    %2734 = vmatpush2.msra.mxu0 0.0
    %2735 = vmatprep.subr.mxu0 0.0
    %2736 = vmatpush2.msra.mxu0 0.0
    %2737 = vmatprep.mubr.f32.mxu0 0.0
    %v2738 = vand.u32 %v2077, 4294901760
    %2739 = vmatmul.mubr.f32.gmra.mxu0 %v2738
    %v2740 = vpop.f32.mrf.mxu0
    %v2741 = vadd.f32 %v2654, %v2740
    %v2742 = vpop.f32.mrf.mxu0
    %2743 = vdwg.mxu0
    %v2744 = vmax.f32 %v2741, 0.0
    %s2745 = scalar_lea.vmem [#allocation7], 384
    %v2746 = vld [vmem:[%s2745] sm:$0xff]
    %v2747 = vld [vmem:[%s2745 + $0x8] sm:$0xff]
    %v2748 = vld [vmem:[%s2745 + $0x10] sm:$0xff]
    %v2749 = vld [vmem:[%s2745 + $0x18] sm:$0xff]
    %v2750 = vld [vmem:[%s2745 + $0x20] sm:$0xff]
    %v2751 = vld [vmem:[%s2745 + $0x28] sm:$0xff]
    %v2752 = vld [vmem:[%s2745 + $0x30] sm:$0xff]
    %v2753 = vld [vmem:[%s2745 + $0x38] sm:$0xff]
    %v2754 = vld [vmem:[%s2745 + $0x40] sm:$0xff]
    %v2755 = vld [vmem:[%s2745 + $0x48] sm:$0xff]
    %v2756 = vld [vmem:[%s2745 + $0x50] sm:$0xff]
    %v2757 = vld [vmem:[%s2745 + $0x58] sm:$0xff]
    %v2758 = vld [vmem:[%s2745 + $0x60] sm:$0xff]
    %v2759 = vld [vmem:[%s2745 + $0x68] sm:$0xff]
    %v2760 = vld [vmem:[%s2745 + $0x70] sm:$0xff]
    %v2761 = vld [vmem:[%s2745 + $0x78] sm:$0xff]
    %s2762 = scalar_lea.vmem %s4, 3
    %v2763 = vld [vmem:[%s2762] sm:$0x1]
    %v2765 = vlaneseq
    %v2766 = vshrl.u32 %v2765, 7
    %v2767 = vsub.s32 0, %v2766
    %v2768 = vrot.slane %v2763, %v2767
    %2770 = vmatprep.subr.mxu0 0.0
    %v2771 = vand.u32 %v2761, 4294901760
    %2772 = vmatpush1.msra.mxu0 %v2771
    %2773 = vmatprep.subr.mxu0 0.0
    %v2774 = vand.u32 %v2760, 4294901760
    %2775 = vmatpush1.msra.mxu0 %v2774
    %2776 = vmatprep.subr.mxu0 0.0
    %v2777 = vand.u32 %v2759, 4294901760
    %2778 = vmatpush1.msra.mxu0 %v2777
    %2779 = vmatprep.subr.mxu0 0.0
    %v2780 = vand.u32 %v2758, 4294901760
    %2781 = vmatpush1.msra.mxu0 %v2780
    %2782 = vmatprep.subr.mxu0 0.0
    %v2783 = vand.u32 %v2757, 4294901760
    %2784 = vmatpush1.msra.mxu0 %v2783
    %2785 = vmatprep.subr.mxu0 0.0
    %v2786 = vand.u32 %v2756, 4294901760
    %2787 = vmatpush1.msra.mxu0 %v2786
    %2788 = vmatprep.subr.mxu0 0.0
    %v2789 = vand.u32 %v2755, 4294901760
    %2790 = vmatpush1.msra.mxu0 %v2789
    %2791 = vmatprep.subr.mxu0 0.0
    %v2792 = vand.u32 %v2754, 4294901760
    %2793 = vmatpush1.msra.mxu0 %v2792
    %2794 = vmatprep.subr.mxu0 0.0
    %v2795 = vand.u32 %v2753, 4294901760
    %2796 = vmatpush1.msra.mxu0 %v2795
    %2797 = vmatprep.subr.mxu0 0.0
    %v2798 = vand.u32 %v2752, 4294901760
    %2799 = vmatpush1.msra.mxu0 %v2798
    %2800 = vmatprep.subr.mxu0 0.0
    %v2801 = vand.u32 %v2751, 4294901760
    %2802 = vmatpush1.msra.mxu0 %v2801
    %2803 = vmatprep.subr.mxu0 0.0
    %v2804 = vand.u32 %v2750, 4294901760
    %2805 = vmatpush1.msra.mxu0 %v2804
    %2806 = vmatprep.subr.mxu0 0.0
    %v2807 = vand.u32 %v2749, 4294901760
    %2808 = vmatpush1.msra.mxu0 %v2807
    %2809 = vmatprep.subr.mxu0 0.0
    %v2810 = vand.u32 %v2748, 4294901760
    %2811 = vmatpush1.msra.mxu0 %v2810
    %2812 = vmatprep.subr.mxu0 0.0
    %v2813 = vand.u32 %v2747, 4294901760
    %2814 = vmatpush1.msra.mxu0 %v2813
    %2815 = vmatprep.subr.mxu0 0.0
    %v2816 = vand.u32 %v2746, 4294901760
    %2817 = vmatpush1.msra.mxu0 %v2816
    %2818 = vmatprep.subr.mxu0 0.0
    %2819 = vmatpush2.msra.mxu0 0.0
    %2820 = vmatprep.subr.mxu0 0.0
    %2821 = vmatpush2.msra.mxu0 0.0
    %2822 = vmatprep.subr.mxu0 0.0
    %2823 = vmatpush2.msra.mxu0 0.0
    %2824 = vmatprep.subr.mxu0 0.0
    %2825 = vmatpush2.msra.mxu0 0.0
    %2826 = vmatprep.subr.mxu0 0.0
    %2827 = vmatpush2.msra.mxu0 0.0
    %2828 = vmatprep.subr.mxu0 0.0
    %2829 = vmatpush2.msra.mxu0 0.0
    %2830 = vmatprep.subr.mxu0 0.0
    %2831 = vmatpush2.msra.mxu0 0.0
    %2832 = vmatprep.subr.mxu0 0.0
    %2833 = vmatpush2.msra.mxu0 0.0
    %2834 = vmatprep.subr.mxu0 0.0
    %2835 = vmatpush2.msra.mxu0 0.0
    %2836 = vmatprep.subr.mxu0 0.0
    %2837 = vmatpush2.msra.mxu0 0.0
    %2838 = vmatprep.subr.mxu0 0.0
    %2839 = vmatpush2.msra.mxu0 0.0
    %2840 = vmatprep.subr.mxu0 0.0
    %2841 = vmatpush2.msra.mxu0 0.0
    %2842 = vmatprep.subr.mxu0 0.0
    %2843 = vmatpush2.msra.mxu0 0.0
    %2844 = vmatprep.subr.mxu0 0.0
    %2845 = vmatpush2.msra.mxu0 0.0
    %2846 = vmatprep.subr.mxu0 0.0
    %2847 = vmatpush2.msra.mxu0 0.0
    %2848 = vmatprep.subr.mxu0 0.0
    %2849 = vmatpush2.msra.mxu0 0.0
    %2850 = vmatprep.mubr.f32.mxu0 0.0
    %v2851 = vand.u32 %v2744, 4294901760
    %v2852 = vsub.f32 %v2744, %v2851
    %v2853 = vand.u32 %v2852, 4294901760
    %v2854 = vsub.f32 %v2852, %v2853
    %v2855 = vand.u32 %v2854, 4294901760
    %2856 = vmatmul.mubr.f32.gmra.mxu0 %v2855
    %v2857 = vpop.f32.mrf.mxu0
    %v2858 = vadd.f32 %v2768, %v2857
    %v2859 = vpop.f32.mrf.mxu0
    %2860 = vdwg.mxu0
    %2861 = vmatprep.subr.mxu0 0.0
    %v2862 = vand.u32 %v2761, 4294901760
    %v2863 = vsub.f32 %v2761, %v2862
    %v2864 = vand.u32 %v2863, 4294901760
    %v2865 = vsub.f32 %v2863, %v2864
    %v2866 = vand.u32 %v2865, 4294901760
    %2867 = vmatpush1.msra.mxu0 %v2866
    %2868 = vmatprep.subr.mxu0 0.0
    %v2869 = vand.u32 %v2760, 4294901760
    %v2870 = vsub.f32 %v2760, %v2869
    %v2871 = vand.u32 %v2870, 4294901760
    %v2872 = vsub.f32 %v2870, %v2871
    %v2873 = vand.u32 %v2872, 4294901760
    %2874 = vmatpush1.msra.mxu0 %v2873
    %2875 = vmatprep.subr.mxu0 0.0
    %v2876 = vand.u32 %v2759, 4294901760
    %v2877 = vsub.f32 %v2759, %v2876
    %v2878 = vand.u32 %v2877, 4294901760
    %v2879 = vsub.f32 %v2877, %v2878
    %v2880 = vand.u32 %v2879, 4294901760
    %2881 = vmatpush1.msra.mxu0 %v2880
    %2882 = vmatprep.subr.mxu0 0.0
    %v2883 = vand.u32 %v2758, 4294901760
    %v2884 = vsub.f32 %v2758, %v2883
    %v2885 = vand.u32 %v2884, 4294901760
    %v2886 = vsub.f32 %v2884, %v2885
    %v2887 = vand.u32 %v2886, 4294901760
    %2888 = vmatpush1.msra.mxu0 %v2887
    %2889 = vmatprep.subr.mxu0 0.0
    %v2890 = vand.u32 %v2757, 4294901760
    %v2891 = vsub.f32 %v2757, %v2890
    %v2892 = vand.u32 %v2891, 4294901760
    %v2893 = vsub.f32 %v2891, %v2892
    %v2894 = vand.u32 %v2893, 4294901760
    %2895 = vmatpush1.msra.mxu0 %v2894
    %2896 = vmatprep.subr.mxu0 0.0
    %v2897 = vand.u32 %v2756, 4294901760
    %v2898 = vsub.f32 %v2756, %v2897
    %v2899 = vand.u32 %v2898, 4294901760
    %v2900 = vsub.f32 %v2898, %v2899
    %v2901 = vand.u32 %v2900, 4294901760
    %2902 = vmatpush1.msra.mxu0 %v2901
    %2903 = vmatprep.subr.mxu0 0.0
    %v2904 = vand.u32 %v2755, 4294901760
    %v2905 = vsub.f32 %v2755, %v2904
    %v2906 = vand.u32 %v2905, 4294901760
    %v2907 = vsub.f32 %v2905, %v2906
    %v2908 = vand.u32 %v2907, 4294901760
    %2909 = vmatpush1.msra.mxu0 %v2908
    %2910 = vmatprep.subr.mxu0 0.0
    %v2911 = vand.u32 %v2754, 4294901760
    %v2912 = vsub.f32 %v2754, %v2911
    %v2913 = vand.u32 %v2912, 4294901760
    %v2914 = vsub.f32 %v2912, %v2913
    %v2915 = vand.u32 %v2914, 4294901760
    %2916 = vmatpush1.msra.mxu0 %v2915
    %2917 = vmatprep.subr.mxu0 0.0
    %v2918 = vand.u32 %v2753, 4294901760
    %v2919 = vsub.f32 %v2753, %v2918
    %v2920 = vand.u32 %v2919, 4294901760
    %v2921 = vsub.f32 %v2919, %v2920
    %v2922 = vand.u32 %v2921, 4294901760
    %2923 = vmatpush1.msra.mxu0 %v2922
    %2924 = vmatprep.subr.mxu0 0.0
    %v2925 = vand.u32 %v2752, 4294901760
    %v2926 = vsub.f32 %v2752, %v2925
    %v2927 = vand.u32 %v2926, 4294901760
    %v2928 = vsub.f32 %v2926, %v2927
    %v2929 = vand.u32 %v2928, 4294901760
    %2930 = vmatpush1.msra.mxu0 %v2929
    %2931 = vmatprep.subr.mxu0 0.0
    %v2932 = vand.u32 %v2751, 4294901760
    %v2933 = vsub.f32 %v2751, %v2932
    %v2934 = vand.u32 %v2933, 4294901760
    %v2935 = vsub.f32 %v2933, %v2934
    %v2936 = vand.u32 %v2935, 4294901760
    %2937 = vmatpush1.msra.mxu0 %v2936
    %2938 = vmatprep.subr.mxu0 0.0
    %v2939 = vand.u32 %v2750, 4294901760
    %v2940 = vsub.f32 %v2750, %v2939
    %v2941 = vand.u32 %v2940, 4294901760
    %v2942 = vsub.f32 %v2940, %v2941
    %v2943 = vand.u32 %v2942, 4294901760
    %2944 = vmatpush1.msra.mxu0 %v2943
    %2945 = vmatprep.subr.mxu0 0.0
    %v2946 = vand.u32 %v2749, 4294901760
    %v2947 = vsub.f32 %v2749, %v2946
    %v2948 = vand.u32 %v2947, 4294901760
    %v2949 = vsub.f32 %v2947, %v2948
    %v2950 = vand.u32 %v2949, 4294901760
    %2951 = vmatpush1.msra.mxu0 %v2950
    %2952 = vmatprep.subr.mxu0 0.0
    %v2953 = vand.u32 %v2748, 4294901760
    %v2954 = vsub.f32 %v2748, %v2953
    %v2955 = vand.u32 %v2954, 4294901760
    %v2956 = vsub.f32 %v2954, %v2955
    %v2957 = vand.u32 %v2956, 4294901760
    %2958 = vmatpush1.msra.mxu0 %v2957
    %2959 = vmatprep.subr.mxu0 0.0
    %v2960 = vand.u32 %v2747, 4294901760
    %v2961 = vsub.f32 %v2747, %v2960
    %v2962 = vand.u32 %v2961, 4294901760
    %v2963 = vsub.f32 %v2961, %v2962
    %v2964 = vand.u32 %v2963, 4294901760
    %2965 = vmatpush1.msra.mxu0 %v2964
    %2966 = vmatprep.subr.mxu0 0.0
    %v2967 = vand.u32 %v2746, 4294901760
    %v2968 = vsub.f32 %v2746, %v2967
    %v2969 = vand.u32 %v2968, 4294901760
    %v2970 = vsub.f32 %v2968, %v2969
    %v2971 = vand.u32 %v2970, 4294901760
    %2972 = vmatpush1.msra.mxu0 %v2971
    %2973 = vmatprep.subr.mxu0 0.0
    %2974 = vmatpush2.msra.mxu0 0.0
    %2975 = vmatprep.subr.mxu0 0.0
    %2976 = vmatpush2.msra.mxu0 0.0
    %2977 = vmatprep.subr.mxu0 0.0
    %2978 = vmatpush2.msra.mxu0 0.0
    %2979 = vmatprep.subr.mxu0 0.0
    %2980 = vmatpush2.msra.mxu0 0.0
    %2981 = vmatprep.subr.mxu0 0.0
    %2982 = vmatpush2.msra.mxu0 0.0
    %2983 = vmatprep.subr.mxu0 0.0
    %2984 = vmatpush2.msra.mxu0 0.0
    %2985 = vmatprep.subr.mxu0 0.0
    %2986 = vmatpush2.msra.mxu0 0.0
    %2987 = vmatprep.subr.mxu0 0.0
    %2988 = vmatpush2.msra.mxu0 0.0
    %2989 = vmatprep.subr.mxu0 0.0
    %2990 = vmatpush2.msra.mxu0 0.0
    %2991 = vmatprep.subr.mxu0 0.0
    %2992 = vmatpush2.msra.mxu0 0.0
    %2993 = vmatprep.subr.mxu0 0.0
    %2994 = vmatpush2.msra.mxu0 0.0
    %2995 = vmatprep.subr.mxu0 0.0
    %2996 = vmatpush2.msra.mxu0 0.0
    %2997 = vmatprep.subr.mxu0 0.0
    %2998 = vmatpush2.msra.mxu0 0.0
    %2999 = vmatprep.subr.mxu0 0.0
    %3000 = vmatpush2.msra.mxu0 0.0
    %3001 = vmatprep.subr.mxu0 0.0
    %3002 = vmatpush2.msra.mxu0 0.0
    %3003 = vmatprep.subr.mxu0 0.0
    %3004 = vmatpush2.msra.mxu0 0.0
    %3005 = vmatprep.mubr.f32.mxu0 0.0
    %v3006 = vand.u32 %v2744, 4294901760
    %3007 = vmatmul.mubr.f32.gmra.mxu0 %v3006
    %v3008 = vpop.f32.mrf.mxu0
    %v3009 = vadd.f32 %v2858, %v3008
    %v3010 = vpop.f32.mrf.mxu0
    %3011 = vdwg.mxu0
    %3012 = vmatprep.subr.mxu0 0.0
    %v3013 = vand.u32 %v2761, 4294901760
    %v3014 = vsub.f32 %v2761, %v3013
    %3015 = vmatpush1.msra.mxu0 %v3014
    %3016 = vmatprep.subr.mxu0 0.0
    %v3017 = vand.u32 %v2760, 4294901760
    %v3018 = vsub.f32 %v2760, %v3017
    %3019 = vmatpush1.msra.mxu0 %v3018
    %3020 = vmatprep.subr.mxu0 0.0
    %v3021 = vand.u32 %v2759, 4294901760
    %v3022 = vsub.f32 %v2759, %v3021
    %3023 = vmatpush1.msra.mxu0 %v3022
    %3024 = vmatprep.subr.mxu0 0.0
    %v3025 = vand.u32 %v2758, 4294901760
    %v3026 = vsub.f32 %v2758, %v3025
    %3027 = vmatpush1.msra.mxu0 %v3026
    %3028 = vmatprep.subr.mxu0 0.0
    %v3029 = vand.u32 %v2757, 4294901760
    %v3030 = vsub.f32 %v2757, %v3029
    %3031 = vmatpush1.msra.mxu0 %v3030
    %3032 = vmatprep.subr.mxu0 0.0
    %v3033 = vand.u32 %v2756, 4294901760
    %v3034 = vsub.f32 %v2756, %v3033
    %3035 = vmatpush1.msra.mxu0 %v3034
    %3036 = vmatprep.subr.mxu0 0.0
    %v3037 = vand.u32 %v2755, 4294901760
    %v3038 = vsub.f32 %v2755, %v3037
    %3039 = vmatpush1.msra.mxu0 %v3038
    %3040 = vmatprep.subr.mxu0 0.0
    %v3041 = vand.u32 %v2754, 4294901760
    %v3042 = vsub.f32 %v2754, %v3041
    %3043 = vmatpush1.msra.mxu0 %v3042
    %3044 = vmatprep.subr.mxu0 0.0
    %v3045 = vand.u32 %v2753, 4294901760
    %v3046 = vsub.f32 %v2753, %v3045
    %3047 = vmatpush1.msra.mxu0 %v3046
    %3048 = vmatprep.subr.mxu0 0.0
    %v3049 = vand.u32 %v2752, 4294901760
    %v3050 = vsub.f32 %v2752, %v3049
    %3051 = vmatpush1.msra.mxu0 %v3050
    %3052 = vmatprep.subr.mxu0 0.0
    %v3053 = vand.u32 %v2751, 4294901760
    %v3054 = vsub.f32 %v2751, %v3053
    %3055 = vmatpush1.msra.mxu0 %v3054
    %3056 = vmatprep.subr.mxu0 0.0
    %v3057 = vand.u32 %v2750, 4294901760
    %v3058 = vsub.f32 %v2750, %v3057
    %3059 = vmatpush1.msra.mxu0 %v3058
    %3060 = vmatprep.subr.mxu0 0.0
    %v3061 = vand.u32 %v2749, 4294901760
    %v3062 = vsub.f32 %v2749, %v3061
    %3063 = vmatpush1.msra.mxu0 %v3062
    %3064 = vmatprep.subr.mxu0 0.0
    %v3065 = vand.u32 %v2748, 4294901760
    %v3066 = vsub.f32 %v2748, %v3065
    %3067 = vmatpush1.msra.mxu0 %v3066
    %3068 = vmatprep.subr.mxu0 0.0
    %v3069 = vand.u32 %v2747, 4294901760
    %v3070 = vsub.f32 %v2747, %v3069
    %3071 = vmatpush1.msra.mxu0 %v3070
    %3072 = vmatprep.subr.mxu0 0.0
    %v3073 = vand.u32 %v2746, 4294901760
    %v3074 = vsub.f32 %v2746, %v3073
    %3075 = vmatpush1.msra.mxu0 %v3074
    %3076 = vmatprep.subr.mxu0 0.0
    %3077 = vmatpush2.msra.mxu0 0.0
    %3078 = vmatprep.subr.mxu0 0.0
    %3079 = vmatpush2.msra.mxu0 0.0
    %3080 = vmatprep.subr.mxu0 0.0
    %3081 = vmatpush2.msra.mxu0 0.0
    %3082 = vmatprep.subr.mxu0 0.0
    %3083 = vmatpush2.msra.mxu0 0.0
    %3084 = vmatprep.subr.mxu0 0.0
    %3085 = vmatpush2.msra.mxu0 0.0
    %3086 = vmatprep.subr.mxu0 0.0
    %3087 = vmatpush2.msra.mxu0 0.0
    %3088 = vmatprep.subr.mxu0 0.0
    %3089 = vmatpush2.msra.mxu0 0.0
    %3090 = vmatprep.subr.mxu0 0.0
    %3091 = vmatpush2.msra.mxu0 0.0
    %3092 = vmatprep.subr.mxu0 0.0
    %3093 = vmatpush2.msra.mxu0 0.0
    %3094 = vmatprep.subr.mxu0 0.0
    %3095 = vmatpush2.msra.mxu0 0.0
    %3096 = vmatprep.subr.mxu0 0.0
    %3097 = vmatpush2.msra.mxu0 0.0
    %3098 = vmatprep.subr.mxu0 0.0
    %3099 = vmatpush2.msra.mxu0 0.0
    %3100 = vmatprep.subr.mxu0 0.0
    %3101 = vmatpush2.msra.mxu0 0.0
    %3102 = vmatprep.subr.mxu0 0.0
    %3103 = vmatpush2.msra.mxu0 0.0
    %3104 = vmatprep.subr.mxu0 0.0
    %3105 = vmatpush2.msra.mxu0 0.0
    %3106 = vmatprep.subr.mxu0 0.0
    %3107 = vmatpush2.msra.mxu0 0.0
    %3108 = vmatprep.mubr.f32.mxu0 0.0
    %v3109 = vand.u32 %v2744, 4294901760
    %v3110 = vsub.f32 %v2744, %v3109
    %3111 = vmatmul.mubr.f32.gmra.mxu0 %v3110
    %v3112 = vpop.f32.mrf.mxu0
    %v3113 = vadd.f32 %v3009, %v3112
    %v3114 = vpop.f32.mrf.mxu0
    %3115 = vdwg.mxu0
    %3116 = vmatprep.subr.mxu0 0.0
    %v3117 = vand.u32 %v2761, 4294901760
    %3118 = vmatpush1.msra.mxu0 %v3117
    %3119 = vmatprep.subr.mxu0 0.0
    %v3120 = vand.u32 %v2760, 4294901760
    %3121 = vmatpush1.msra.mxu0 %v3120
    %3122 = vmatprep.subr.mxu0 0.0
    %v3123 = vand.u32 %v2759, 4294901760
    %3124 = vmatpush1.msra.mxu0 %v3123
    %3125 = vmatprep.subr.mxu0 0.0
    %v3126 = vand.u32 %v2758, 4294901760
    %3127 = vmatpush1.msra.mxu0 %v3126
    %3128 = vmatprep.subr.mxu0 0.0
    %v3129 = vand.u32 %v2757, 4294901760
    %3130 = vmatpush1.msra.mxu0 %v3129
    %3131 = vmatprep.subr.mxu0 0.0
    %v3132 = vand.u32 %v2756, 4294901760
    %3133 = vmatpush1.msra.mxu0 %v3132
    %3134 = vmatprep.subr.mxu0 0.0
    %v3135 = vand.u32 %v2755, 4294901760
    %3136 = vmatpush1.msra.mxu0 %v3135
    %3137 = vmatprep.subr.mxu0 0.0
    %v3138 = vand.u32 %v2754, 4294901760
    %3139 = vmatpush1.msra.mxu0 %v3138
    %3140 = vmatprep.subr.mxu0 0.0
    %v3141 = vand.u32 %v2753, 4294901760
    %3142 = vmatpush1.msra.mxu0 %v3141
    %3143 = vmatprep.subr.mxu0 0.0
    %v3144 = vand.u32 %v2752, 4294901760
    %3145 = vmatpush1.msra.mxu0 %v3144
    %3146 = vmatprep.subr.mxu0 0.0
    %v3147 = vand.u32 %v2751, 4294901760
    %3148 = vmatpush1.msra.mxu0 %v3147
    %3149 = vmatprep.subr.mxu0 0.0
    %v3150 = vand.u32 %v2750, 4294901760
    %3151 = vmatpush1.msra.mxu0 %v3150
    %3152 = vmatprep.subr.mxu0 0.0
    %v3153 = vand.u32 %v2749, 4294901760
    %3154 = vmatpush1.msra.mxu0 %v3153
    %3155 = vmatprep.subr.mxu0 0.0
    %v3156 = vand.u32 %v2748, 4294901760
    %3157 = vmatpush1.msra.mxu0 %v3156
    %3158 = vmatprep.subr.mxu0 0.0
    %v3159 = vand.u32 %v2747, 4294901760
    %3160 = vmatpush1.msra.mxu0 %v3159
    %3161 = vmatprep.subr.mxu0 0.0
    %v3162 = vand.u32 %v2746, 4294901760
    %3163 = vmatpush1.msra.mxu0 %v3162
    %3164 = vmatprep.subr.mxu0 0.0
    %3165 = vmatpush2.msra.mxu0 0.0
    %3166 = vmatprep.subr.mxu0 0.0
    %3167 = vmatpush2.msra.mxu0 0.0
    %3168 = vmatprep.subr.mxu0 0.0
    %3169 = vmatpush2.msra.mxu0 0.0
    %3170 = vmatprep.subr.mxu0 0.0
    %3171 = vmatpush2.msra.mxu0 0.0
    %3172 = vmatprep.subr.mxu0 0.0
    %3173 = vmatpush2.msra.mxu0 0.0
    %3174 = vmatprep.subr.mxu0 0.0
    %3175 = vmatpush2.msra.mxu0 0.0
    %3176 = vmatprep.subr.mxu0 0.0
    %3177 = vmatpush2.msra.mxu0 0.0
    %3178 = vmatprep.subr.mxu0 0.0
    %3179 = vmatpush2.msra.mxu0 0.0
    %3180 = vmatprep.subr.mxu0 0.0
    %3181 = vmatpush2.msra.mxu0 0.0
    %3182 = vmatprep.subr.mxu0 0.0
    %3183 = vmatpush2.msra.mxu0 0.0
    %3184 = vmatprep.subr.mxu0 0.0
    %3185 = vmatpush2.msra.mxu0 0.0
    %3186 = vmatprep.subr.mxu0 0.0
    %3187 = vmatpush2.msra.mxu0 0.0
    %3188 = vmatprep.subr.mxu0 0.0
    %3189 = vmatpush2.msra.mxu0 0.0
    %3190 = vmatprep.subr.mxu0 0.0
    %3191 = vmatpush2.msra.mxu0 0.0
    %3192 = vmatprep.subr.mxu0 0.0
    %3193 = vmatpush2.msra.mxu0 0.0
    %3194 = vmatprep.subr.mxu0 0.0
    %3195 = vmatpush2.msra.mxu0 0.0
    %3196 = vmatprep.mubr.f32.mxu0 0.0
    %v3197 = vand.u32 %v2744, 4294901760
    %v3198 = vsub.f32 %v2744, %v3197
    %v3199 = vand.u32 %v3198, 4294901760
    %3200 = vmatmul.mubr.f32.gmra.mxu0 %v3199
    %v3201 = vpop.f32.mrf.mxu0
    %v3202 = vadd.f32 %v3113, %v3201
    %v3203 = vpop.f32.mrf.mxu0
    %3204 = vdwg.mxu0
    %3205 = vmatprep.subr.mxu0 0.0
    %v3206 = vand.u32 %v2761, 4294901760
    %v3207 = vsub.f32 %v2761, %v3206
    %v3208 = vand.u32 %v3207, 4294901760
    %3209 = vmatpush1.msra.mxu0 %v3208
    %3210 = vmatprep.subr.mxu0 0.0
    %v3211 = vand.u32 %v2760, 4294901760
    %v3212 = vsub.f32 %v2760, %v3211
    %v3213 = vand.u32 %v3212, 4294901760
    %3214 = vmatpush1.msra.mxu0 %v3213
    %3215 = vmatprep.subr.mxu0 0.0
    %v3216 = vand.u32 %v2759, 4294901760
    %v3217 = vsub.f32 %v2759, %v3216
    %v3218 = vand.u32 %v3217, 4294901760
    %3219 = vmatpush1.msra.mxu0 %v3218
    %3220 = vmatprep.subr.mxu0 0.0
    %v3221 = vand.u32 %v2758, 4294901760
    %v3222 = vsub.f32 %v2758, %v3221
    %v3223 = vand.u32 %v3222, 4294901760
    %3224 = vmatpush1.msra.mxu0 %v3223
    %3225 = vmatprep.subr.mxu0 0.0
    %v3226 = vand.u32 %v2757, 4294901760
    %v3227 = vsub.f32 %v2757, %v3226
    %v3228 = vand.u32 %v3227, 4294901760
    %3229 = vmatpush1.msra.mxu0 %v3228
    %3230 = vmatprep.subr.mxu0 0.0
    %v3231 = vand.u32 %v2756, 4294901760
    %v3232 = vsub.f32 %v2756, %v3231
    %v3233 = vand.u32 %v3232, 4294901760
    %3234 = vmatpush1.msra.mxu0 %v3233
    %3235 = vmatprep.subr.mxu0 0.0
    %v3236 = vand.u32 %v2755, 4294901760
    %v3237 = vsub.f32 %v2755, %v3236
    %v3238 = vand.u32 %v3237, 4294901760
    %3239 = vmatpush1.msra.mxu0 %v3238
    %3240 = vmatprep.subr.mxu0 0.0
    %v3241 = vand.u32 %v2754, 4294901760
    %v3242 = vsub.f32 %v2754, %v3241
    %v3243 = vand.u32 %v3242, 4294901760
    %3244 = vmatpush1.msra.mxu0 %v3243
    %3245 = vmatprep.subr.mxu0 0.0
    %v3246 = vand.u32 %v2753, 4294901760
    %v3247 = vsub.f32 %v2753, %v3246
    %v3248 = vand.u32 %v3247, 4294901760
    %3249 = vmatpush1.msra.mxu0 %v3248
    %3250 = vmatprep.subr.mxu0 0.0
    %v3251 = vand.u32 %v2752, 4294901760
    %v3252 = vsub.f32 %v2752, %v3251
    %v3253 = vand.u32 %v3252, 4294901760
    %3254 = vmatpush1.msra.mxu0 %v3253
    %3255 = vmatprep.subr.mxu0 0.0
    %v3256 = vand.u32 %v2751, 4294901760
    %v3257 = vsub.f32 %v2751, %v3256
    %v3258 = vand.u32 %v3257, 4294901760
    %3259 = vmatpush1.msra.mxu0 %v3258
    %3260 = vmatprep.subr.mxu0 0.0
    %v3261 = vand.u32 %v2750, 4294901760
    %v3262 = vsub.f32 %v2750, %v3261
    %v3263 = vand.u32 %v3262, 4294901760
    %3264 = vmatpush1.msra.mxu0 %v3263
    %3265 = vmatprep.subr.mxu0 0.0
    %v3266 = vand.u32 %v2749, 4294901760
    %v3267 = vsub.f32 %v2749, %v3266
    %v3268 = vand.u32 %v3267, 4294901760
    %3269 = vmatpush1.msra.mxu0 %v3268
    %3270 = vmatprep.subr.mxu0 0.0
    %v3271 = vand.u32 %v2748, 4294901760
    %v3272 = vsub.f32 %v2748, %v3271
    %v3273 = vand.u32 %v3272, 4294901760
    %3274 = vmatpush1.msra.mxu0 %v3273
    %3275 = vmatprep.subr.mxu0 0.0
    %v3276 = vand.u32 %v2747, 4294901760
    %v3277 = vsub.f32 %v2747, %v3276
    %v3278 = vand.u32 %v3277, 4294901760
    %3279 = vmatpush1.msra.mxu0 %v3278
    %3280 = vmatprep.subr.mxu0 0.0
    %v3281 = vand.u32 %v2746, 4294901760
    %v3282 = vsub.f32 %v2746, %v3281
    %v3283 = vand.u32 %v3282, 4294901760
    %3284 = vmatpush1.msra.mxu0 %v3283
    %3285 = vmatprep.subr.mxu0 0.0
    %3286 = vmatpush2.msra.mxu0 0.0
    %3287 = vmatprep.subr.mxu0 0.0
    %3288 = vmatpush2.msra.mxu0 0.0
    %3289 = vmatprep.subr.mxu0 0.0
    %3290 = vmatpush2.msra.mxu0 0.0
    %3291 = vmatprep.subr.mxu0 0.0
    %3292 = vmatpush2.msra.mxu0 0.0
    %3293 = vmatprep.subr.mxu0 0.0
    %3294 = vmatpush2.msra.mxu0 0.0
    %3295 = vmatprep.subr.mxu0 0.0
    %3296 = vmatpush2.msra.mxu0 0.0
    %3297 = vmatprep.subr.mxu0 0.0
    %3298 = vmatpush2.msra.mxu0 0.0
    %3299 = vmatprep.subr.mxu0 0.0
    %3300 = vmatpush2.msra.mxu0 0.0
    %3301 = vmatprep.subr.mxu0 0.0
    %3302 = vmatpush2.msra.mxu0 0.0
    %3303 = vmatprep.subr.mxu0 0.0
    %3304 = vmatpush2.msra.mxu0 0.0
    %3305 = vmatprep.subr.mxu0 0.0
    %3306 = vmatpush2.msra.mxu0 0.0
    %3307 = vmatprep.subr.mxu0 0.0
    %3308 = vmatpush2.msra.mxu0 0.0
    %3309 = vmatprep.subr.mxu0 0.0
    %3310 = vmatpush2.msra.mxu0 0.0
    %3311 = vmatprep.subr.mxu0 0.0
    %3312 = vmatpush2.msra.mxu0 0.0
    %3313 = vmatprep.subr.mxu0 0.0
    %3314 = vmatpush2.msra.mxu0 0.0
    %3315 = vmatprep.subr.mxu0 0.0
    %3316 = vmatpush2.msra.mxu0 0.0
    %3317 = vmatprep.mubr.f32.mxu0 0.0
    %v3318 = vand.u32 %v2744, 4294901760
    %3319 = vmatmul.mubr.f32.gmra.mxu0 %v3318
    %v3320 = vpop.f32.mrf.mxu0
    %v3321 = vadd.f32 %v3202, %v3320
    %v3322 = vpop.f32.mrf.mxu0
    %3323 = vdwg.mxu0
    %3324 = vmatprep.subr.mxu0 0.0
    %v3325 = vand.u32 %v2761, 4294901760
    %3326 = vmatpush1.msra.mxu0 %v3325
    %3327 = vmatprep.subr.mxu0 0.0
    %v3328 = vand.u32 %v2760, 4294901760
    %3329 = vmatpush1.msra.mxu0 %v3328
    %3330 = vmatprep.subr.mxu0 0.0
    %v3331 = vand.u32 %v2759, 4294901760
    %3332 = vmatpush1.msra.mxu0 %v3331
    %3333 = vmatprep.subr.mxu0 0.0
    %v3334 = vand.u32 %v2758, 4294901760
    %3335 = vmatpush1.msra.mxu0 %v3334
    %3336 = vmatprep.subr.mxu0 0.0
    %v3337 = vand.u32 %v2757, 4294901760
    %3338 = vmatpush1.msra.mxu0 %v3337
    %3339 = vmatprep.subr.mxu0 0.0
    %v3340 = vand.u32 %v2756, 4294901760
    %3341 = vmatpush1.msra.mxu0 %v3340
    %3342 = vmatprep.subr.mxu0 0.0
    %v3343 = vand.u32 %v2755, 4294901760
    %3344 = vmatpush1.msra.mxu0 %v3343
    %3345 = vmatprep.subr.mxu0 0.0
    %v3346 = vand.u32 %v2754, 4294901760
    %3347 = vmatpush1.msra.mxu0 %v3346
    %3348 = vmatprep.subr.mxu0 0.0
    %v3349 = vand.u32 %v2753, 4294901760
    %3350 = vmatpush1.msra.mxu0 %v3349
    %3351 = vmatprep.subr.mxu0 0.0
    %v3352 = vand.u32 %v2752, 4294901760
    %3353 = vmatpush1.msra.mxu0 %v3352
    %3354 = vmatprep.subr.mxu0 0.0
    %v3355 = vand.u32 %v2751, 4294901760
    %3356 = vmatpush1.msra.mxu0 %v3355
    %3357 = vmatprep.subr.mxu0 0.0
    %v3358 = vand.u32 %v2750, 4294901760
    %3359 = vmatpush1.msra.mxu0 %v3358
    %3360 = vmatprep.subr.mxu0 0.0
    %v3361 = vand.u32 %v2749, 4294901760
    %3362 = vmatpush1.msra.mxu0 %v3361
    %3363 = vmatprep.subr.mxu0 0.0
    %v3364 = vand.u32 %v2748, 4294901760
    %3365 = vmatpush1.msra.mxu0 %v3364
    %3366 = vmatprep.subr.mxu0 0.0
    %v3367 = vand.u32 %v2747, 4294901760
    %3368 = vmatpush1.msra.mxu0 %v3367
    %3369 = vmatprep.subr.mxu0 0.0
    %v3370 = vand.u32 %v2746, 4294901760
    %3371 = vmatpush1.msra.mxu0 %v3370
    %3372 = vmatprep.subr.mxu0 0.0
    %3373 = vmatpush2.msra.mxu0 0.0
    %3374 = vmatprep.subr.mxu0 0.0
    %3375 = vmatpush2.msra.mxu0 0.0
    %3376 = vmatprep.subr.mxu0 0.0
    %3377 = vmatpush2.msra.mxu0 0.0
    %3378 = vmatprep.subr.mxu0 0.0
    %3379 = vmatpush2.msra.mxu0 0.0
    %3380 = vmatprep.subr.mxu0 0.0
    %3381 = vmatpush2.msra.mxu0 0.0
    %3382 = vmatprep.subr.mxu0 0.0
    %3383 = vmatpush2.msra.mxu0 0.0
    %3384 = vmatprep.subr.mxu0 0.0
    %3385 = vmatpush2.msra.mxu0 0.0
    %3386 = vmatprep.subr.mxu0 0.0
    %3387 = vmatpush2.msra.mxu0 0.0
    %3388 = vmatprep.subr.mxu0 0.0
    %3389 = vmatpush2.msra.mxu0 0.0
    %3390 = vmatprep.subr.mxu0 0.0
    %3391 = vmatpush2.msra.mxu0 0.0
    %3392 = vmatprep.subr.mxu0 0.0
    %3393 = vmatpush2.msra.mxu0 0.0
    %3394 = vmatprep.subr.mxu0 0.0
    %3395 = vmatpush2.msra.mxu0 0.0
    %3396 = vmatprep.subr.mxu0 0.0
    %3397 = vmatpush2.msra.mxu0 0.0
    %3398 = vmatprep.subr.mxu0 0.0
    %3399 = vmatpush2.msra.mxu0 0.0
    %3400 = vmatprep.subr.mxu0 0.0
    %3401 = vmatpush2.msra.mxu0 0.0
    %3402 = vmatprep.subr.mxu0 0.0
    %3403 = vmatpush2.msra.mxu0 0.0
    %3404 = vmatprep.mubr.f32.mxu0 0.0
    %v3405 = vand.u32 %v2744, 4294901760
    %3406 = vmatmul.mubr.f32.gmra.mxu0 %v3405
    %v3407 = vpop.f32.mrf.mxu0
    %v3408 = vadd.f32 %v3321, %v3407
    %v3409 = vpop.f32.mrf.mxu0
    %3410 = vdwg.mxu0
    %v3411 = vmax.f32 %v3408, 0.0
    %s3412 = scalar_lea.vmem [#allocation7], 512
    %v3413 = vld [vmem:[%s3412] sm:$0xff]
    %v3414 = vld [vmem:[%s3412 + $0x8] sm:$0xff]
    %v3415 = vld [vmem:[%s3412 + $0x10] sm:$0xff]
    %v3416 = vld [vmem:[%s3412 + $0x18] sm:$0xff]
    %v3417 = vld [vmem:[%s3412 + $0x20] sm:$0xff]
    %v3418 = vld [vmem:[%s3412 + $0x28] sm:$0xff]
    %v3419 = vld [vmem:[%s3412 + $0x30] sm:$0xff]
    %v3420 = vld [vmem:[%s3412 + $0x38] sm:$0xff]
    %v3421 = vld [vmem:[%s3412 + $0x40] sm:$0xff]
    %v3422 = vld [vmem:[%s3412 + $0x48] sm:$0xff]
    %v3423 = vld [vmem:[%s3412 + $0x50] sm:$0xff]
    %v3424 = vld [vmem:[%s3412 + $0x58] sm:$0xff]
    %v3425 = vld [vmem:[%s3412 + $0x60] sm:$0xff]
    %v3426 = vld [vmem:[%s3412 + $0x68] sm:$0xff]
    %v3427 = vld [vmem:[%s3412 + $0x70] sm:$0xff]
    %v3428 = vld [vmem:[%s3412 + $0x78] sm:$0xff]
    %s3429 = scalar_lea.vmem %s4, 4
    %v3430 = vld [vmem:[%s3429] sm:$0x1]
    %v3432 = vlaneseq
    %v3433 = vshrl.u32 %v3432, 7
    %v3434 = vsub.s32 0, %v3433
    %v3435 = vrot.slane %v3430, %v3434
    %3437 = vmatprep.subr.mxu0 0.0
    %v3438 = vand.u32 %v3428, 4294901760
    %3439 = vmatpush1.msra.mxu0 %v3438
    %3440 = vmatprep.subr.mxu0 0.0
    %v3441 = vand.u32 %v3427, 4294901760
    %3442 = vmatpush1.msra.mxu0 %v3441
    %3443 = vmatprep.subr.mxu0 0.0
    %v3444 = vand.u32 %v3426, 4294901760
    %3445 = vmatpush1.msra.mxu0 %v3444
    %3446 = vmatprep.subr.mxu0 0.0
    %v3447 = vand.u32 %v3425, 4294901760
    %3448 = vmatpush1.msra.mxu0 %v3447
    %3449 = vmatprep.subr.mxu0 0.0
    %v3450 = vand.u32 %v3424, 4294901760
    %3451 = vmatpush1.msra.mxu0 %v3450
    %3452 = vmatprep.subr.mxu0 0.0
    %v3453 = vand.u32 %v3423, 4294901760
    %3454 = vmatpush1.msra.mxu0 %v3453
    %3455 = vmatprep.subr.mxu0 0.0
    %v3456 = vand.u32 %v3422, 4294901760
    %3457 = vmatpush1.msra.mxu0 %v3456
    %3458 = vmatprep.subr.mxu0 0.0
    %v3459 = vand.u32 %v3421, 4294901760
    %3460 = vmatpush1.msra.mxu0 %v3459
    %3461 = vmatprep.subr.mxu0 0.0
    %v3462 = vand.u32 %v3420, 4294901760
    %3463 = vmatpush1.msra.mxu0 %v3462
    %3464 = vmatprep.subr.mxu0 0.0
    %v3465 = vand.u32 %v3419, 4294901760
    %3466 = vmatpush1.msra.mxu0 %v3465
    %3467 = vmatprep.subr.mxu0 0.0
    %v3468 = vand.u32 %v3418, 4294901760
    %3469 = vmatpush1.msra.mxu0 %v3468
    %3470 = vmatprep.subr.mxu0 0.0
    %v3471 = vand.u32 %v3417, 4294901760
    %3472 = vmatpush1.msra.mxu0 %v3471
    %3473 = vmatprep.subr.mxu0 0.0
    %v3474 = vand.u32 %v3416, 4294901760
    %3475 = vmatpush1.msra.mxu0 %v3474
    %3476 = vmatprep.subr.mxu0 0.0
    %v3477 = vand.u32 %v3415, 4294901760
    %3478 = vmatpush1.msra.mxu0 %v3477
    %3479 = vmatprep.subr.mxu0 0.0
    %v3480 = vand.u32 %v3414, 4294901760
    %3481 = vmatpush1.msra.mxu0 %v3480
    %3482 = vmatprep.subr.mxu0 0.0
    %v3483 = vand.u32 %v3413, 4294901760
    %3484 = vmatpush1.msra.mxu0 %v3483
    %3485 = vmatprep.subr.mxu0 0.0
    %3486 = vmatpush2.msra.mxu0 0.0
    %3487 = vmatprep.subr.mxu0 0.0
    %3488 = vmatpush2.msra.mxu0 0.0
    %3489 = vmatprep.subr.mxu0 0.0
    %3490 = vmatpush2.msra.mxu0 0.0
    %3491 = vmatprep.subr.mxu0 0.0
    %3492 = vmatpush2.msra.mxu0 0.0
    %3493 = vmatprep.subr.mxu0 0.0
    %3494 = vmatpush2.msra.mxu0 0.0
    %3495 = vmatprep.subr.mxu0 0.0
    %3496 = vmatpush2.msra.mxu0 0.0
    %3497 = vmatprep.subr.mxu0 0.0
    %3498 = vmatpush2.msra.mxu0 0.0
    %3499 = vmatprep.subr.mxu0 0.0
    %3500 = vmatpush2.msra.mxu0 0.0
    %3501 = vmatprep.subr.mxu0 0.0
    %3502 = vmatpush2.msra.mxu0 0.0
    %3503 = vmatprep.subr.mxu0 0.0
    %3504 = vmatpush2.msra.mxu0 0.0
    %3505 = vmatprep.subr.mxu0 0.0
    %3506 = vmatpush2.msra.mxu0 0.0
    %3507 = vmatprep.subr.mxu0 0.0
    %3508 = vmatpush2.msra.mxu0 0.0
    %3509 = vmatprep.subr.mxu0 0.0
    %3510 = vmatpush2.msra.mxu0 0.0
    %3511 = vmatprep.subr.mxu0 0.0
    %3512 = vmatpush2.msra.mxu0 0.0
    %3513 = vmatprep.subr.mxu0 0.0
    %3514 = vmatpush2.msra.mxu0 0.0
    %3515 = vmatprep.subr.mxu0 0.0
    %3516 = vmatpush2.msra.mxu0 0.0
    %3517 = vmatprep.mubr.f32.mxu0 0.0
    %v3518 = vand.u32 %v3411, 4294901760
    %v3519 = vsub.f32 %v3411, %v3518
    %v3520 = vand.u32 %v3519, 4294901760
    %v3521 = vsub.f32 %v3519, %v3520
    %v3522 = vand.u32 %v3521, 4294901760
    %3523 = vmatmul.mubr.f32.gmra.mxu0 %v3522
    %v3524 = vpop.f32.mrf.mxu0
    %v3525 = vadd.f32 %v3435, %v3524
    %v3526 = vpop.f32.mrf.mxu0
    %3527 = vdwg.mxu0
    %3528 = vmatprep.subr.mxu0 0.0
    %v3529 = vand.u32 %v3428, 4294901760
    %v3530 = vsub.f32 %v3428, %v3529
    %v3531 = vand.u32 %v3530, 4294901760
    %v3532 = vsub.f32 %v3530, %v3531
    %v3533 = vand.u32 %v3532, 4294901760
    %3534 = vmatpush1.msra.mxu0 %v3533
    %3535 = vmatprep.subr.mxu0 0.0
    %v3536 = vand.u32 %v3427, 4294901760
    %v3537 = vsub.f32 %v3427, %v3536
    %v3538 = vand.u32 %v3537, 4294901760
    %v3539 = vsub.f32 %v3537, %v3538
    %v3540 = vand.u32 %v3539, 4294901760
    %3541 = vmatpush1.msra.mxu0 %v3540
    %3542 = vmatprep.subr.mxu0 0.0
    %v3543 = vand.u32 %v3426, 4294901760
    %v3544 = vsub.f32 %v3426, %v3543
    %v3545 = vand.u32 %v3544, 4294901760
    %v3546 = vsub.f32 %v3544, %v3545
    %v3547 = vand.u32 %v3546, 4294901760
    %3548 = vmatpush1.msra.mxu0 %v3547
    %3549 = vmatprep.subr.mxu0 0.0
    %v3550 = vand.u32 %v3425, 4294901760
    %v3551 = vsub.f32 %v3425, %v3550
    %v3552 = vand.u32 %v3551, 4294901760
    %v3553 = vsub.f32 %v3551, %v3552
    %v3554 = vand.u32 %v3553, 4294901760
    %3555 = vmatpush1.msra.mxu0 %v3554
    %3556 = vmatprep.subr.mxu0 0.0
    %v3557 = vand.u32 %v3424, 4294901760
    %v3558 = vsub.f32 %v3424, %v3557
    %v3559 = vand.u32 %v3558, 4294901760
    %v3560 = vsub.f32 %v3558, %v3559
    %v3561 = vand.u32 %v3560, 4294901760
    %3562 = vmatpush1.msra.mxu0 %v3561
    %3563 = vmatprep.subr.mxu0 0.0
    %v3564 = vand.u32 %v3423, 4294901760
    %v3565 = vsub.f32 %v3423, %v3564
    %v3566 = vand.u32 %v3565, 4294901760
    %v3567 = vsub.f32 %v3565, %v3566
    %v3568 = vand.u32 %v3567, 4294901760
    %3569 = vmatpush1.msra.mxu0 %v3568
    %3570 = vmatprep.subr.mxu0 0.0
    %v3571 = vand.u32 %v3422, 4294901760
    %v3572 = vsub.f32 %v3422, %v3571
    %v3573 = vand.u32 %v3572, 4294901760
    %v3574 = vsub.f32 %v3572, %v3573
    %v3575 = vand.u32 %v3574, 4294901760
    %3576 = vmatpush1.msra.mxu0 %v3575
    %3577 = vmatprep.subr.mxu0 0.0
    %v3578 = vand.u32 %v3421, 4294901760
    %v3579 = vsub.f32 %v3421, %v3578
    %v3580 = vand.u32 %v3579, 4294901760
    %v3581 = vsub.f32 %v3579, %v3580
    %v3582 = vand.u32 %v3581, 4294901760
    %3583 = vmatpush1.msra.mxu0 %v3582
    %3584 = vmatprep.subr.mxu0 0.0
    %v3585 = vand.u32 %v3420, 4294901760
    %v3586 = vsub.f32 %v3420, %v3585
    %v3587 = vand.u32 %v3586, 4294901760
    %v3588 = vsub.f32 %v3586, %v3587
    %v3589 = vand.u32 %v3588, 4294901760
    %3590 = vmatpush1.msra.mxu0 %v3589
    %3591 = vmatprep.subr.mxu0 0.0
    %v3592 = vand.u32 %v3419, 4294901760
    %v3593 = vsub.f32 %v3419, %v3592
    %v3594 = vand.u32 %v3593, 4294901760
    %v3595 = vsub.f32 %v3593, %v3594
    %v3596 = vand.u32 %v3595, 4294901760
    %3597 = vmatpush1.msra.mxu0 %v3596
    %3598 = vmatprep.subr.mxu0 0.0
    %v3599 = vand.u32 %v3418, 4294901760
    %v3600 = vsub.f32 %v3418, %v3599
    %v3601 = vand.u32 %v3600, 4294901760
    %v3602 = vsub.f32 %v3600, %v3601
    %v3603 = vand.u32 %v3602, 4294901760
    %3604 = vmatpush1.msra.mxu0 %v3603
    %3605 = vmatprep.subr.mxu0 0.0
    %v3606 = vand.u32 %v3417, 4294901760
    %v3607 = vsub.f32 %v3417, %v3606
    %v3608 = vand.u32 %v3607, 4294901760
    %v3609 = vsub.f32 %v3607, %v3608
    %v3610 = vand.u32 %v3609, 4294901760
    %3611 = vmatpush1.msra.mxu0 %v3610
    %3612 = vmatprep.subr.mxu0 0.0
    %v3613 = vand.u32 %v3416, 4294901760
    %v3614 = vsub.f32 %v3416, %v3613
    %v3615 = vand.u32 %v3614, 4294901760
    %v3616 = vsub.f32 %v3614, %v3615
    %v3617 = vand.u32 %v3616, 4294901760
    %3618 = vmatpush1.msra.mxu0 %v3617
    %3619 = vmatprep.subr.mxu0 0.0
    %v3620 = vand.u32 %v3415, 4294901760
    %v3621 = vsub.f32 %v3415, %v3620
    %v3622 = vand.u32 %v3621, 4294901760
    %v3623 = vsub.f32 %v3621, %v3622
    %v3624 = vand.u32 %v3623, 4294901760
    %3625 = vmatpush1.msra.mxu0 %v3624
    %3626 = vmatprep.subr.mxu0 0.0
    %v3627 = vand.u32 %v3414, 4294901760
    %v3628 = vsub.f32 %v3414, %v3627
    %v3629 = vand.u32 %v3628, 4294901760
    %v3630 = vsub.f32 %v3628, %v3629
    %v3631 = vand.u32 %v3630, 4294901760
    %3632 = vmatpush1.msra.mxu0 %v3631
    %3633 = vmatprep.subr.mxu0 0.0
    %v3634 = vand.u32 %v3413, 4294901760
    %v3635 = vsub.f32 %v3413, %v3634
    %v3636 = vand.u32 %v3635, 4294901760
    %v3637 = vsub.f32 %v3635, %v3636
    %v3638 = vand.u32 %v3637, 4294901760
    %3639 = vmatpush1.msra.mxu0 %v3638
    %3640 = vmatprep.subr.mxu0 0.0
    %3641 = vmatpush2.msra.mxu0 0.0
    %3642 = vmatprep.subr.mxu0 0.0
    %3643 = vmatpush2.msra.mxu0 0.0
    %3644 = vmatprep.subr.mxu0 0.0
    %3645 = vmatpush2.msra.mxu0 0.0
    %3646 = vmatprep.subr.mxu0 0.0
    %3647 = vmatpush2.msra.mxu0 0.0
    %3648 = vmatprep.subr.mxu0 0.0
    %3649 = vmatpush2.msra.mxu0 0.0
    %3650 = vmatprep.subr.mxu0 0.0
    %3651 = vmatpush2.msra.mxu0 0.0
    %3652 = vmatprep.subr.mxu0 0.0
    %3653 = vmatpush2.msra.mxu0 0.0
    %3654 = vmatprep.subr.mxu0 0.0
    %3655 = vmatpush2.msra.mxu0 0.0
    %3656 = vmatprep.subr.mxu0 0.0
    %3657 = vmatpush2.msra.mxu0 0.0
    %3658 = vmatprep.subr.mxu0 0.0
    %3659 = vmatpush2.msra.mxu0 0.0
    %3660 = vmatprep.subr.mxu0 0.0
    %3661 = vmatpush2.msra.mxu0 0.0
    %3662 = vmatprep.subr.mxu0 0.0
    %3663 = vmatpush2.msra.mxu0 0.0
    %3664 = vmatprep.subr.mxu0 0.0
    %3665 = vmatpush2.msra.mxu0 0.0
    %3666 = vmatprep.subr.mxu0 0.0
    %3667 = vmatpush2.msra.mxu0 0.0
    %3668 = vmatprep.subr.mxu0 0.0
    %3669 = vmatpush2.msra.mxu0 0.0
    %3670 = vmatprep.subr.mxu0 0.0
    %3671 = vmatpush2.msra.mxu0 0.0
    %3672 = vmatprep.mubr.f32.mxu0 0.0
    %v3673 = vand.u32 %v3411, 4294901760
    %3674 = vmatmul.mubr.f32.gmra.mxu0 %v3673
    %v3675 = vpop.f32.mrf.mxu0
    %v3676 = vadd.f32 %v3525, %v3675
    %v3677 = vpop.f32.mrf.mxu0
    %3678 = vdwg.mxu0
    %3679 = vmatprep.subr.mxu0 0.0
    %v3680 = vand.u32 %v3428, 4294901760
    %v3681 = vsub.f32 %v3428, %v3680
    %3682 = vmatpush1.msra.mxu0 %v3681
    %3683 = vmatprep.subr.mxu0 0.0
    %v3684 = vand.u32 %v3427, 4294901760
    %v3685 = vsub.f32 %v3427, %v3684
    %3686 = vmatpush1.msra.mxu0 %v3685
    %3687 = vmatprep.subr.mxu0 0.0
    %v3688 = vand.u32 %v3426, 4294901760
    %v3689 = vsub.f32 %v3426, %v3688
    %3690 = vmatpush1.msra.mxu0 %v3689
    %3691 = vmatprep.subr.mxu0 0.0
    %v3692 = vand.u32 %v3425, 4294901760
    %v3693 = vsub.f32 %v3425, %v3692
    %3694 = vmatpush1.msra.mxu0 %v3693
    %3695 = vmatprep.subr.mxu0 0.0
    %v3696 = vand.u32 %v3424, 4294901760
    %v3697 = vsub.f32 %v3424, %v3696
    %3698 = vmatpush1.msra.mxu0 %v3697
    %3699 = vmatprep.subr.mxu0 0.0
    %v3700 = vand.u32 %v3423, 4294901760
    %v3701 = vsub.f32 %v3423, %v3700
    %3702 = vmatpush1.msra.mxu0 %v3701
    %3703 = vmatprep.subr.mxu0 0.0
    %v3704 = vand.u32 %v3422, 4294901760
    %v3705 = vsub.f32 %v3422, %v3704
    %3706 = vmatpush1.msra.mxu0 %v3705
    %3707 = vmatprep.subr.mxu0 0.0
    %v3708 = vand.u32 %v3421, 4294901760
    %v3709 = vsub.f32 %v3421, %v3708
    %3710 = vmatpush1.msra.mxu0 %v3709
    %3711 = vmatprep.subr.mxu0 0.0
    %v3712 = vand.u32 %v3420, 4294901760
    %v3713 = vsub.f32 %v3420, %v3712
    %3714 = vmatpush1.msra.mxu0 %v3713
    %3715 = vmatprep.subr.mxu0 0.0
    %v3716 = vand.u32 %v3419, 4294901760
    %v3717 = vsub.f32 %v3419, %v3716
    %3718 = vmatpush1.msra.mxu0 %v3717
    %3719 = vmatprep.subr.mxu0 0.0
    %v3720 = vand.u32 %v3418, 4294901760
    %v3721 = vsub.f32 %v3418, %v3720
    %3722 = vmatpush1.msra.mxu0 %v3721
    %3723 = vmatprep.subr.mxu0 0.0
    %v3724 = vand.u32 %v3417, 4294901760
    %v3725 = vsub.f32 %v3417, %v3724
    %3726 = vmatpush1.msra.mxu0 %v3725
    %3727 = vmatprep.subr.mxu0 0.0
    %v3728 = vand.u32 %v3416, 4294901760
    %v3729 = vsub.f32 %v3416, %v3728
    %3730 = vmatpush1.msra.mxu0 %v3729
    %3731 = vmatprep.subr.mxu0 0.0
    %v3732 = vand.u32 %v3415, 4294901760
    %v3733 = vsub.f32 %v3415, %v3732
    %3734 = vmatpush1.msra.mxu0 %v3733
    %3735 = vmatprep.subr.mxu0 0.0
    %v3736 = vand.u32 %v3414, 4294901760
    %v3737 = vsub.f32 %v3414, %v3736
    %3738 = vmatpush1.msra.mxu0 %v3737
    %3739 = vmatprep.subr.mxu0 0.0
    %v3740 = vand.u32 %v3413, 4294901760
    %v3741 = vsub.f32 %v3413, %v3740
    %3742 = vmatpush1.msra.mxu0 %v3741
    %3743 = vmatprep.subr.mxu0 0.0
    %3744 = vmatpush2.msra.mxu0 0.0
    %3745 = vmatprep.subr.mxu0 0.0
    %3746 = vmatpush2.msra.mxu0 0.0
    %3747 = vmatprep.subr.mxu0 0.0
    %3748 = vmatpush2.msra.mxu0 0.0
    %3749 = vmatprep.subr.mxu0 0.0
    %3750 = vmatpush2.msra.mxu0 0.0
    %3751 = vmatprep.subr.mxu0 0.0
    %3752 = vmatpush2.msra.mxu0 0.0
    %3753 = vmatprep.subr.mxu0 0.0
    %3754 = vmatpush2.msra.mxu0 0.0
    %3755 = vmatprep.subr.mxu0 0.0
    %3756 = vmatpush2.msra.mxu0 0.0
    %3757 = vmatprep.subr.mxu0 0.0
    %3758 = vmatpush2.msra.mxu0 0.0
    %3759 = vmatprep.subr.mxu0 0.0
    %3760 = vmatpush2.msra.mxu0 0.0
    %3761 = vmatprep.subr.mxu0 0.0
    %3762 = vmatpush2.msra.mxu0 0.0
    %3763 = vmatprep.subr.mxu0 0.0
    %3764 = vmatpush2.msra.mxu0 0.0
    %3765 = vmatprep.subr.mxu0 0.0
    %3766 = vmatpush2.msra.mxu0 0.0
    %3767 = vmatprep.subr.mxu0 0.0
    %3768 = vmatpush2.msra.mxu0 0.0
    %3769 = vmatprep.subr.mxu0 0.0
    %3770 = vmatpush2.msra.mxu0 0.0
    %3771 = vmatprep.subr.mxu0 0.0
    %3772 = vmatpush2.msra.mxu0 0.0
    %3773 = vmatprep.subr.mxu0 0.0
    %3774 = vmatpush2.msra.mxu0 0.0
    %3775 = vmatprep.mubr.f32.mxu0 0.0
    %v3776 = vand.u32 %v3411, 4294901760
    %v3777 = vsub.f32 %v3411, %v3776
    %3778 = vmatmul.mubr.f32.gmra.mxu0 %v3777
    %v3779 = vpop.f32.mrf.mxu0
    %v3780 = vadd.f32 %v3676, %v3779
    %v3781 = vpop.f32.mrf.mxu0
    %3782 = vdwg.mxu0
    %3783 = vmatprep.subr.mxu0 0.0
    %v3784 = vand.u32 %v3428, 4294901760
    %3785 = vmatpush1.msra.mxu0 %v3784
    %3786 = vmatprep.subr.mxu0 0.0
    %v3787 = vand.u32 %v3427, 4294901760
    %3788 = vmatpush1.msra.mxu0 %v3787
    %3789 = vmatprep.subr.mxu0 0.0
    %v3790 = vand.u32 %v3426, 4294901760
    %3791 = vmatpush1.msra.mxu0 %v3790
    %3792 = vmatprep.subr.mxu0 0.0
    %v3793 = vand.u32 %v3425, 4294901760
    %3794 = vmatpush1.msra.mxu0 %v3793
    %3795 = vmatprep.subr.mxu0 0.0
    %v3796 = vand.u32 %v3424, 4294901760
    %3797 = vmatpush1.msra.mxu0 %v3796
    %3798 = vmatprep.subr.mxu0 0.0
    %v3799 = vand.u32 %v3423, 4294901760
    %3800 = vmatpush1.msra.mxu0 %v3799
    %3801 = vmatprep.subr.mxu0 0.0
    %v3802 = vand.u32 %v3422, 4294901760
    %3803 = vmatpush1.msra.mxu0 %v3802
    %3804 = vmatprep.subr.mxu0 0.0
    %v3805 = vand.u32 %v3421, 4294901760
    %3806 = vmatpush1.msra.mxu0 %v3805
    %3807 = vmatprep.subr.mxu0 0.0
    %v3808 = vand.u32 %v3420, 4294901760
    %3809 = vmatpush1.msra.mxu0 %v3808
    %3810 = vmatprep.subr.mxu0 0.0
    %v3811 = vand.u32 %v3419, 4294901760
    %3812 = vmatpush1.msra.mxu0 %v3811
    %3813 = vmatprep.subr.mxu0 0.0
    %v3814 = vand.u32 %v3418, 4294901760
    %3815 = vmatpush1.msra.mxu0 %v3814
    %3816 = vmatprep.subr.mxu0 0.0
    %v3817 = vand.u32 %v3417, 4294901760
    %3818 = vmatpush1.msra.mxu0 %v3817
    %3819 = vmatprep.subr.mxu0 0.0
    %v3820 = vand.u32 %v3416, 4294901760
    %3821 = vmatpush1.msra.mxu0 %v3820
    %3822 = vmatprep.subr.mxu0 0.0
    %v3823 = vand.u32 %v3415, 4294901760
    %3824 = vmatpush1.msra.mxu0 %v3823
    %3825 = vmatprep.subr.mxu0 0.0
    %v3826 = vand.u32 %v3414, 4294901760
    %3827 = vmatpush1.msra.mxu0 %v3826
    %3828 = vmatprep.subr.mxu0 0.0
    %v3829 = vand.u32 %v3413, 4294901760
    %3830 = vmatpush1.msra.mxu0 %v3829
    %3831 = vmatprep.subr.mxu0 0.0
    %3832 = vmatpush2.msra.mxu0 0.0
    %3833 = vmatprep.subr.mxu0 0.0
    %3834 = vmatpush2.msra.mxu0 0.0
    %3835 = vmatprep.subr.mxu0 0.0
    %3836 = vmatpush2.msra.mxu0 0.0
    %3837 = vmatprep.subr.mxu0 0.0
    %3838 = vmatpush2.msra.mxu0 0.0
    %3839 = vmatprep.subr.mxu0 0.0
    %3840 = vmatpush2.msra.mxu0 0.0
    %3841 = vmatprep.subr.mxu0 0.0
    %3842 = vmatpush2.msra.mxu0 0.0
    %3843 = vmatprep.subr.mxu0 0.0
    %3844 = vmatpush2.msra.mxu0 0.0
    %3845 = vmatprep.subr.mxu0 0.0
    %3846 = vmatpush2.msra.mxu0 0.0
    %3847 = vmatprep.subr.mxu0 0.0
    %3848 = vmatpush2.msra.mxu0 0.0
    %3849 = vmatprep.subr.mxu0 0.0
    %3850 = vmatpush2.msra.mxu0 0.0
    %3851 = vmatprep.subr.mxu0 0.0
    %3852 = vmatpush2.msra.mxu0 0.0
    %3853 = vmatprep.subr.mxu0 0.0
    %3854 = vmatpush2.msra.mxu0 0.0
    %3855 = vmatprep.subr.mxu0 0.0
    %3856 = vmatpush2.msra.mxu0 0.0
    %3857 = vmatprep.subr.mxu0 0.0
    %3858 = vmatpush2.msra.mxu0 0.0
    %3859 = vmatprep.subr.mxu0 0.0
    %3860 = vmatpush2.msra.mxu0 0.0
    %3861 = vmatprep.subr.mxu0 0.0
    %3862 = vmatpush2.msra.mxu0 0.0
    %3863 = vmatprep.mubr.f32.mxu0 0.0
    %v3864 = vand.u32 %v3411, 4294901760
    %v3865 = vsub.f32 %v3411, %v3864
    %v3866 = vand.u32 %v3865, 4294901760
    %3867 = vmatmul.mubr.f32.gmra.mxu0 %v3866
    %v3868 = vpop.f32.mrf.mxu0
    %v3869 = vadd.f32 %v3780, %v3868
    %v3870 = vpop.f32.mrf.mxu0
    %3871 = vdwg.mxu0
    %3872 = vmatprep.subr.mxu0 0.0
    %v3873 = vand.u32 %v3428, 4294901760
    %v3874 = vsub.f32 %v3428, %v3873
    %v3875 = vand.u32 %v3874, 4294901760
    %3876 = vmatpush1.msra.mxu0 %v3875
    %3877 = vmatprep.subr.mxu0 0.0
    %v3878 = vand.u32 %v3427, 4294901760
    %v3879 = vsub.f32 %v3427, %v3878
    %v3880 = vand.u32 %v3879, 4294901760
    %3881 = vmatpush1.msra.mxu0 %v3880
    %3882 = vmatprep.subr.mxu0 0.0
    %v3883 = vand.u32 %v3426, 4294901760
    %v3884 = vsub.f32 %v3426, %v3883
    %v3885 = vand.u32 %v3884, 4294901760
    %3886 = vmatpush1.msra.mxu0 %v3885
    %3887 = vmatprep.subr.mxu0 0.0
    %v3888 = vand.u32 %v3425, 4294901760
    %v3889 = vsub.f32 %v3425, %v3888
    %v3890 = vand.u32 %v3889, 4294901760
    %3891 = vmatpush1.msra.mxu0 %v3890
    %3892 = vmatprep.subr.mxu0 0.0
    %v3893 = vand.u32 %v3424, 4294901760
    %v3894 = vsub.f32 %v3424, %v3893
    %v3895 = vand.u32 %v3894, 4294901760
    %3896 = vmatpush1.msra.mxu0 %v3895
    %3897 = vmatprep.subr.mxu0 0.0
    %v3898 = vand.u32 %v3423, 4294901760
    %v3899 = vsub.f32 %v3423, %v3898
    %v3900 = vand.u32 %v3899, 4294901760
    %3901 = vmatpush1.msra.mxu0 %v3900
    %3902 = vmatprep.subr.mxu0 0.0
    %v3903 = vand.u32 %v3422, 4294901760
    %v3904 = vsub.f32 %v3422, %v3903
    %v3905 = vand.u32 %v3904, 4294901760
    %3906 = vmatpush1.msra.mxu0 %v3905
    %3907 = vmatprep.subr.mxu0 0.0
    %v3908 = vand.u32 %v3421, 4294901760
    %v3909 = vsub.f32 %v3421, %v3908
    %v3910 = vand.u32 %v3909, 4294901760
    %3911 = vmatpush1.msra.mxu0 %v3910
    %3912 = vmatprep.subr.mxu0 0.0
    %v3913 = vand.u32 %v3420, 4294901760
    %v3914 = vsub.f32 %v3420, %v3913
    %v3915 = vand.u32 %v3914, 4294901760
    %3916 = vmatpush1.msra.mxu0 %v3915
    %3917 = vmatprep.subr.mxu0 0.0
    %v3918 = vand.u32 %v3419, 4294901760
    %v3919 = vsub.f32 %v3419, %v3918
    %v3920 = vand.u32 %v3919, 4294901760
    %3921 = vmatpush1.msra.mxu0 %v3920
    %3922 = vmatprep.subr.mxu0 0.0
    %v3923 = vand.u32 %v3418, 4294901760
    %v3924 = vsub.f32 %v3418, %v3923
    %v3925 = vand.u32 %v3924, 4294901760
    %3926 = vmatpush1.msra.mxu0 %v3925
    %3927 = vmatprep.subr.mxu0 0.0
    %v3928 = vand.u32 %v3417, 4294901760
    %v3929 = vsub.f32 %v3417, %v3928
    %v3930 = vand.u32 %v3929, 4294901760
    %3931 = vmatpush1.msra.mxu0 %v3930
    %3932 = vmatprep.subr.mxu0 0.0
    %v3933 = vand.u32 %v3416, 4294901760
    %v3934 = vsub.f32 %v3416, %v3933
    %v3935 = vand.u32 %v3934, 4294901760
    %3936 = vmatpush1.msra.mxu0 %v3935
    %3937 = vmatprep.subr.mxu0 0.0
    %v3938 = vand.u32 %v3415, 4294901760
    %v3939 = vsub.f32 %v3415, %v3938
    %v3940 = vand.u32 %v3939, 4294901760
    %3941 = vmatpush1.msra.mxu0 %v3940
    %3942 = vmatprep.subr.mxu0 0.0
    %v3943 = vand.u32 %v3414, 4294901760
    %v3944 = vsub.f32 %v3414, %v3943
    %v3945 = vand.u32 %v3944, 4294901760
    %3946 = vmatpush1.msra.mxu0 %v3945
    %3947 = vmatprep.subr.mxu0 0.0
    %v3948 = vand.u32 %v3413, 4294901760
    %v3949 = vsub.f32 %v3413, %v3948
    %v3950 = vand.u32 %v3949, 4294901760
    %3951 = vmatpush1.msra.mxu0 %v3950
    %3952 = vmatprep.subr.mxu0 0.0
    %3953 = vmatpush2.msra.mxu0 0.0
    %3954 = vmatprep.subr.mxu0 0.0
    %3955 = vmatpush2.msra.mxu0 0.0
    %3956 = vmatprep.subr.mxu0 0.0
    %3957 = vmatpush2.msra.mxu0 0.0
    %3958 = vmatprep.subr.mxu0 0.0
    %3959 = vmatpush2.msra.mxu0 0.0
    %3960 = vmatprep.subr.mxu0 0.0
    %3961 = vmatpush2.msra.mxu0 0.0
    %3962 = vmatprep.subr.mxu0 0.0
    %3963 = vmatpush2.msra.mxu0 0.0
    %3964 = vmatprep.subr.mxu0 0.0
    %3965 = vmatpush2.msra.mxu0 0.0
    %3966 = vmatprep.subr.mxu0 0.0
    %3967 = vmatpush2.msra.mxu0 0.0
    %3968 = vmatprep.subr.mxu0 0.0
    %3969 = vmatpush2.msra.mxu0 0.0
    %3970 = vmatprep.subr.mxu0 0.0
    %3971 = vmatpush2.msra.mxu0 0.0
    %3972 = vmatprep.subr.mxu0 0.0
    %3973 = vmatpush2.msra.mxu0 0.0
    %3974 = vmatprep.subr.mxu0 0.0
    %3975 = vmatpush2.msra.mxu0 0.0
    %3976 = vmatprep.subr.mxu0 0.0
    %3977 = vmatpush2.msra.mxu0 0.0
    %3978 = vmatprep.subr.mxu0 0.0
    %3979 = vmatpush2.msra.mxu0 0.0
    %3980 = vmatprep.subr.mxu0 0.0
    %3981 = vmatpush2.msra.mxu0 0.0
    %3982 = vmatprep.subr.mxu0 0.0
    %3983 = vmatpush2.msra.mxu0 0.0
    %3984 = vmatprep.mubr.f32.mxu0 0.0
    %v3985 = vand.u32 %v3411, 4294901760
    %3986 = vmatmul.mubr.f32.gmra.mxu0 %v3985
    %v3987 = vpop.f32.mrf.mxu0
    %v3988 = vadd.f32 %v3869, %v3987
    %v3989 = vpop.f32.mrf.mxu0
    %3990 = vdwg.mxu0
    %3991 = vmatprep.subr.mxu0 0.0
    %v3992 = vand.u32 %v3428, 4294901760
    %3993 = vmatpush1.msra.mxu0 %v3992
    %3994 = vmatprep.subr.mxu0 0.0
    %v3995 = vand.u32 %v3427, 4294901760
    %3996 = vmatpush1.msra.mxu0 %v3995
    %3997 = vmatprep.subr.mxu0 0.0
    %v3998 = vand.u32 %v3426, 4294901760
    %3999 = vmatpush1.msra.mxu0 %v3998
    %4000 = vmatprep.subr.mxu0 0.0
    %v4001 = vand.u32 %v3425, 4294901760
    %4002 = vmatpush1.msra.mxu0 %v4001
    %4003 = vmatprep.subr.mxu0 0.0
    %v4004 = vand.u32 %v3424, 4294901760
    %4005 = vmatpush1.msra.mxu0 %v4004
    %4006 = vmatprep.subr.mxu0 0.0
    %v4007 = vand.u32 %v3423, 4294901760
    %4008 = vmatpush1.msra.mxu0 %v4007
    %4009 = vmatprep.subr.mxu0 0.0
    %v4010 = vand.u32 %v3422, 4294901760
    %4011 = vmatpush1.msra.mxu0 %v4010
    %4012 = vmatprep.subr.mxu0 0.0
    %v4013 = vand.u32 %v3421, 4294901760
    %4014 = vmatpush1.msra.mxu0 %v4013
    %4015 = vmatprep.subr.mxu0 0.0
    %v4016 = vand.u32 %v3420, 4294901760
    %4017 = vmatpush1.msra.mxu0 %v4016
    %4018 = vmatprep.subr.mxu0 0.0
    %v4019 = vand.u32 %v3419, 4294901760
    %4020 = vmatpush1.msra.mxu0 %v4019
    %4021 = vmatprep.subr.mxu0 0.0
    %v4022 = vand.u32 %v3418, 4294901760
    %4023 = vmatpush1.msra.mxu0 %v4022
    %4024 = vmatprep.subr.mxu0 0.0
    %v4025 = vand.u32 %v3417, 4294901760
    %4026 = vmatpush1.msra.mxu0 %v4025
    %4027 = vmatprep.subr.mxu0 0.0
    %v4028 = vand.u32 %v3416, 4294901760
    %4029 = vmatpush1.msra.mxu0 %v4028
    %4030 = vmatprep.subr.mxu0 0.0
    %v4031 = vand.u32 %v3415, 4294901760
    %4032 = vmatpush1.msra.mxu0 %v4031
    %4033 = vmatprep.subr.mxu0 0.0
    %v4034 = vand.u32 %v3414, 4294901760
    %4035 = vmatpush1.msra.mxu0 %v4034
    %4036 = vmatprep.subr.mxu0 0.0
    %v4037 = vand.u32 %v3413, 4294901760
    %4038 = vmatpush1.msra.mxu0 %v4037
    %4039 = vmatprep.subr.mxu0 0.0
    %4040 = vmatpush2.msra.mxu0 0.0
    %4041 = vmatprep.subr.mxu0 0.0
    %4042 = vmatpush2.msra.mxu0 0.0
    %4043 = vmatprep.subr.mxu0 0.0
    %4044 = vmatpush2.msra.mxu0 0.0
    %4045 = vmatprep.subr.mxu0 0.0
    %4046 = vmatpush2.msra.mxu0 0.0
    %4047 = vmatprep.subr.mxu0 0.0
    %4048 = vmatpush2.msra.mxu0 0.0
    %4049 = vmatprep.subr.mxu0 0.0
    %4050 = vmatpush2.msra.mxu0 0.0
    %4051 = vmatprep.subr.mxu0 0.0
    %4052 = vmatpush2.msra.mxu0 0.0
    %4053 = vmatprep.subr.mxu0 0.0
    %4054 = vmatpush2.msra.mxu0 0.0
    %4055 = vmatprep.subr.mxu0 0.0
    %4056 = vmatpush2.msra.mxu0 0.0
    %4057 = vmatprep.subr.mxu0 0.0
    %4058 = vmatpush2.msra.mxu0 0.0
    %4059 = vmatprep.subr.mxu0 0.0
    %4060 = vmatpush2.msra.mxu0 0.0
    %4061 = vmatprep.subr.mxu0 0.0
    %4062 = vmatpush2.msra.mxu0 0.0
    %4063 = vmatprep.subr.mxu0 0.0
    %4064 = vmatpush2.msra.mxu0 0.0
    %4065 = vmatprep.subr.mxu0 0.0
    %4066 = vmatpush2.msra.mxu0 0.0
    %4067 = vmatprep.subr.mxu0 0.0
    %4068 = vmatpush2.msra.mxu0 0.0
    %4069 = vmatprep.subr.mxu0 0.0
    %4070 = vmatpush2.msra.mxu0 0.0
    %4071 = vmatprep.mubr.f32.mxu0 0.0
    %v4072 = vand.u32 %v3411, 4294901760
    %4073 = vmatmul.mubr.f32.gmra.mxu0 %v4072
    %v4074 = vpop.f32.mrf.mxu0
    %v4075 = vadd.f32 %v3988, %v4074
    %v4076 = vpop.f32.mrf.mxu0
    %4077 = vdwg.mxu0
    %v4078 = vmax.f32 %v4075, 0.0
    %s4079 = scalar_lea.vmem [#allocation7], 640
    %v4080 = vld [vmem:[%s4079] sm:$0xff]
    %v4081 = vld [vmem:[%s4079 + $0x8] sm:$0xff]
    %v4082 = vld [vmem:[%s4079 + $0x10] sm:$0xff]
    %v4083 = vld [vmem:[%s4079 + $0x18] sm:$0xff]
    %v4084 = vld [vmem:[%s4079 + $0x20] sm:$0xff]
    %v4085 = vld [vmem:[%s4079 + $0x28] sm:$0xff]
    %v4086 = vld [vmem:[%s4079 + $0x30] sm:$0xff]
    %v4087 = vld [vmem:[%s4079 + $0x38] sm:$0xff]
    %v4088 = vld [vmem:[%s4079 + $0x40] sm:$0xff]
    %v4089 = vld [vmem:[%s4079 + $0x48] sm:$0xff]
    %v4090 = vld [vmem:[%s4079 + $0x50] sm:$0xff]
    %v4091 = vld [vmem:[%s4079 + $0x58] sm:$0xff]
    %v4092 = vld [vmem:[%s4079 + $0x60] sm:$0xff]
    %v4093 = vld [vmem:[%s4079 + $0x68] sm:$0xff]
    %v4094 = vld [vmem:[%s4079 + $0x70] sm:$0xff]
    %v4095 = vld [vmem:[%s4079 + $0x78] sm:$0xff]
    %s4096 = scalar_lea.vmem %s4, 5
    %v4097 = vld [vmem:[%s4096] sm:$0x1]
    %v4099 = vlaneseq
    %v4100 = vshrl.u32 %v4099, 7
    %v4101 = vsub.s32 0, %v4100
    %v4102 = vrot.slane %v4097, %v4101
    %4104 = vmatprep.subr.mxu0 0.0
    %v4105 = vand.u32 %v4095, 4294901760
    %4106 = vmatpush1.msra.mxu0 %v4105
    %4107 = vmatprep.subr.mxu0 0.0
    %v4108 = vand.u32 %v4094, 4294901760
    %4109 = vmatpush1.msra.mxu0 %v4108
    %4110 = vmatprep.subr.mxu0 0.0
    %v4111 = vand.u32 %v4093, 4294901760
    %4112 = vmatpush1.msra.mxu0 %v4111
    %4113 = vmatprep.subr.mxu0 0.0
    %v4114 = vand.u32 %v4092, 4294901760
    %4115 = vmatpush1.msra.mxu0 %v4114
    %4116 = vmatprep.subr.mxu0 0.0
    %v4117 = vand.u32 %v4091, 4294901760
    %4118 = vmatpush1.msra.mxu0 %v4117
    %4119 = vmatprep.subr.mxu0 0.0
    %v4120 = vand.u32 %v4090, 4294901760
    %4121 = vmatpush1.msra.mxu0 %v4120
    %4122 = vmatprep.subr.mxu0 0.0
    %v4123 = vand.u32 %v4089, 4294901760
    %4124 = vmatpush1.msra.mxu0 %v4123
    %4125 = vmatprep.subr.mxu0 0.0
    %v4126 = vand.u32 %v4088, 4294901760
    %4127 = vmatpush1.msra.mxu0 %v4126
    %4128 = vmatprep.subr.mxu0 0.0
    %v4129 = vand.u32 %v4087, 4294901760
    %4130 = vmatpush1.msra.mxu0 %v4129
    %4131 = vmatprep.subr.mxu0 0.0
    %v4132 = vand.u32 %v4086, 4294901760
    %4133 = vmatpush1.msra.mxu0 %v4132
    %4134 = vmatprep.subr.mxu0 0.0
    %v4135 = vand.u32 %v4085, 4294901760
    %4136 = vmatpush1.msra.mxu0 %v4135
    %4137 = vmatprep.subr.mxu0 0.0
    %v4138 = vand.u32 %v4084, 4294901760
    %4139 = vmatpush1.msra.mxu0 %v4138
    %4140 = vmatprep.subr.mxu0 0.0
    %v4141 = vand.u32 %v4083, 4294901760
    %4142 = vmatpush1.msra.mxu0 %v4141
    %4143 = vmatprep.subr.mxu0 0.0
    %v4144 = vand.u32 %v4082, 4294901760
    %4145 = vmatpush1.msra.mxu0 %v4144
    %4146 = vmatprep.subr.mxu0 0.0
    %v4147 = vand.u32 %v4081, 4294901760
    %4148 = vmatpush1.msra.mxu0 %v4147
    %4149 = vmatprep.subr.mxu0 0.0
    %v4150 = vand.u32 %v4080, 4294901760
    %4151 = vmatpush1.msra.mxu0 %v4150
    %4152 = vmatprep.subr.mxu0 0.0
    %4153 = vmatpush2.msra.mxu0 0.0
    %4154 = vmatprep.subr.mxu0 0.0
    %4155 = vmatpush2.msra.mxu0 0.0
    %4156 = vmatprep.subr.mxu0 0.0
    %4157 = vmatpush2.msra.mxu0 0.0
    %4158 = vmatprep.subr.mxu0 0.0
    %4159 = vmatpush2.msra.mxu0 0.0
    %4160 = vmatprep.subr.mxu0 0.0
    %4161 = vmatpush2.msra.mxu0 0.0
    %4162 = vmatprep.subr.mxu0 0.0
    %4163 = vmatpush2.msra.mxu0 0.0
    %4164 = vmatprep.subr.mxu0 0.0
    %4165 = vmatpush2.msra.mxu0 0.0
    %4166 = vmatprep.subr.mxu0 0.0
    %4167 = vmatpush2.msra.mxu0 0.0
    %4168 = vmatprep.subr.mxu0 0.0
    %4169 = vmatpush2.msra.mxu0 0.0
    %4170 = vmatprep.subr.mxu0 0.0
    %4171 = vmatpush2.msra.mxu0 0.0
    %4172 = vmatprep.subr.mxu0 0.0
    %4173 = vmatpush2.msra.mxu0 0.0
    %4174 = vmatprep.subr.mxu0 0.0
    %4175 = vmatpush2.msra.mxu0 0.0
    %4176 = vmatprep.subr.mxu0 0.0
    %4177 = vmatpush2.msra.mxu0 0.0
    %4178 = vmatprep.subr.mxu0 0.0
    %4179 = vmatpush2.msra.mxu0 0.0
    %4180 = vmatprep.subr.mxu0 0.0
    %4181 = vmatpush2.msra.mxu0 0.0
    %4182 = vmatprep.subr.mxu0 0.0
    %4183 = vmatpush2.msra.mxu0 0.0
    %4184 = vmatprep.mubr.f32.mxu0 0.0
    %v4185 = vand.u32 %v4078, 4294901760
    %v4186 = vsub.f32 %v4078, %v4185
    %v4187 = vand.u32 %v4186, 4294901760
    %v4188 = vsub.f32 %v4186, %v4187
    %v4189 = vand.u32 %v4188, 4294901760
    %4190 = vmatmul.mubr.f32.gmra.mxu0 %v4189
    %v4191 = vpop.f32.mrf.mxu0
    %v4192 = vadd.f32 %v4102, %v4191
    %v4193 = vpop.f32.mrf.mxu0
    %4194 = vdwg.mxu0
    %4195 = vmatprep.subr.mxu0 0.0
    %v4196 = vand.u32 %v4095, 4294901760
    %v4197 = vsub.f32 %v4095, %v4196
    %v4198 = vand.u32 %v4197, 4294901760
    %v4199 = vsub.f32 %v4197, %v4198
    %v4200 = vand.u32 %v4199, 4294901760
    %4201 = vmatpush1.msra.mxu0 %v4200
    %4202 = vmatprep.subr.mxu0 0.0
    %v4203 = vand.u32 %v4094, 4294901760
    %v4204 = vsub.f32 %v4094, %v4203
    %v4205 = vand.u32 %v4204, 4294901760
    %v4206 = vsub.f32 %v4204, %v4205
    %v4207 = vand.u32 %v4206, 4294901760
    %4208 = vmatpush1.msra.mxu0 %v4207
    %4209 = vmatprep.subr.mxu0 0.0
    %v4210 = vand.u32 %v4093, 4294901760
    %v4211 = vsub.f32 %v4093, %v4210
    %v4212 = vand.u32 %v4211, 4294901760
    %v4213 = vsub.f32 %v4211, %v4212
    %v4214 = vand.u32 %v4213, 4294901760
    %4215 = vmatpush1.msra.mxu0 %v4214
    %4216 = vmatprep.subr.mxu0 0.0
    %v4217 = vand.u32 %v4092, 4294901760
    %v4218 = vsub.f32 %v4092, %v4217
    %v4219 = vand.u32 %v4218, 4294901760
    %v4220 = vsub.f32 %v4218, %v4219
    %v4221 = vand.u32 %v4220, 4294901760
    %4222 = vmatpush1.msra.mxu0 %v4221
    %4223 = vmatprep.subr.mxu0 0.0
    %v4224 = vand.u32 %v4091, 4294901760
    %v4225 = vsub.f32 %v4091, %v4224
    %v4226 = vand.u32 %v4225, 4294901760
    %v4227 = vsub.f32 %v4225, %v4226
    %v4228 = vand.u32 %v4227, 4294901760
    %4229 = vmatpush1.msra.mxu0 %v4228
    %4230 = vmatprep.subr.mxu0 0.0
    %v4231 = vand.u32 %v4090, 4294901760
    %v4232 = vsub.f32 %v4090, %v4231
    %v4233 = vand.u32 %v4232, 4294901760
    %v4234 = vsub.f32 %v4232, %v4233
    %v4235 = vand.u32 %v4234, 4294901760
    %4236 = vmatpush1.msra.mxu0 %v4235
    %4237 = vmatprep.subr.mxu0 0.0
    %v4238 = vand.u32 %v4089, 4294901760
    %v4239 = vsub.f32 %v4089, %v4238
    %v4240 = vand.u32 %v4239, 4294901760
    %v4241 = vsub.f32 %v4239, %v4240
    %v4242 = vand.u32 %v4241, 4294901760
    %4243 = vmatpush1.msra.mxu0 %v4242
    %4244 = vmatprep.subr.mxu0 0.0
    %v4245 = vand.u32 %v4088, 4294901760
    %v4246 = vsub.f32 %v4088, %v4245
    %v4247 = vand.u32 %v4246, 4294901760
    %v4248 = vsub.f32 %v4246, %v4247
    %v4249 = vand.u32 %v4248, 4294901760
    %4250 = vmatpush1.msra.mxu0 %v4249
    %4251 = vmatprep.subr.mxu0 0.0
    %v4252 = vand.u32 %v4087, 4294901760
    %v4253 = vsub.f32 %v4087, %v4252
    %v4254 = vand.u32 %v4253, 4294901760
    %v4255 = vsub.f32 %v4253, %v4254
    %v4256 = vand.u32 %v4255, 4294901760
    %4257 = vmatpush1.msra.mxu0 %v4256
    %4258 = vmatprep.subr.mxu0 0.0
    %v4259 = vand.u32 %v4086, 4294901760
    %v4260 = vsub.f32 %v4086, %v4259
    %v4261 = vand.u32 %v4260, 4294901760
    %v4262 = vsub.f32 %v4260, %v4261
    %v4263 = vand.u32 %v4262, 4294901760
    %4264 = vmatpush1.msra.mxu0 %v4263
    %4265 = vmatprep.subr.mxu0 0.0
    %v4266 = vand.u32 %v4085, 4294901760
    %v4267 = vsub.f32 %v4085, %v4266
    %v4268 = vand.u32 %v4267, 4294901760
    %v4269 = vsub.f32 %v4267, %v4268
    %v4270 = vand.u32 %v4269, 4294901760
    %4271 = vmatpush1.msra.mxu0 %v4270
    %4272 = vmatprep.subr.mxu0 0.0
    %v4273 = vand.u32 %v4084, 4294901760
    %v4274 = vsub.f32 %v4084, %v4273
    %v4275 = vand.u32 %v4274, 4294901760
    %v4276 = vsub.f32 %v4274, %v4275
    %v4277 = vand.u32 %v4276, 4294901760
    %4278 = vmatpush1.msra.mxu0 %v4277
    %4279 = vmatprep.subr.mxu0 0.0
    %v4280 = vand.u32 %v4083, 4294901760
    %v4281 = vsub.f32 %v4083, %v4280
    %v4282 = vand.u32 %v4281, 4294901760
    %v4283 = vsub.f32 %v4281, %v4282
    %v4284 = vand.u32 %v4283, 4294901760
    %4285 = vmatpush1.msra.mxu0 %v4284
    %4286 = vmatprep.subr.mxu0 0.0
    %v4287 = vand.u32 %v4082, 4294901760
    %v4288 = vsub.f32 %v4082, %v4287
    %v4289 = vand.u32 %v4288, 4294901760
    %v4290 = vsub.f32 %v4288, %v4289
    %v4291 = vand.u32 %v4290, 4294901760
    %4292 = vmatpush1.msra.mxu0 %v4291
    %4293 = vmatprep.subr.mxu0 0.0
    %v4294 = vand.u32 %v4081, 4294901760
    %v4295 = vsub.f32 %v4081, %v4294
    %v4296 = vand.u32 %v4295, 4294901760
    %v4297 = vsub.f32 %v4295, %v4296
    %v4298 = vand.u32 %v4297, 4294901760
    %4299 = vmatpush1.msra.mxu0 %v4298
    %4300 = vmatprep.subr.mxu0 0.0
    %v4301 = vand.u32 %v4080, 4294901760
    %v4302 = vsub.f32 %v4080, %v4301
    %v4303 = vand.u32 %v4302, 4294901760
    %v4304 = vsub.f32 %v4302, %v4303
    %v4305 = vand.u32 %v4304, 4294901760
    %4306 = vmatpush1.msra.mxu0 %v4305
    %4307 = vmatprep.subr.mxu0 0.0
    %4308 = vmatpush2.msra.mxu0 0.0
    %4309 = vmatprep.subr.mxu0 0.0
    %4310 = vmatpush2.msra.mxu0 0.0
    %4311 = vmatprep.subr.mxu0 0.0
    %4312 = vmatpush2.msra.mxu0 0.0
    %4313 = vmatprep.subr.mxu0 0.0
    %4314 = vmatpush2.msra.mxu0 0.0
    %4315 = vmatprep.subr.mxu0 0.0
    %4316 = vmatpush2.msra.mxu0 0.0
    %4317 = vmatprep.subr.mxu0 0.0
    %4318 = vmatpush2.msra.mxu0 0.0
    %4319 = vmatprep.subr.mxu0 0.0
    %4320 = vmatpush2.msra.mxu0 0.0
    %4321 = vmatprep.subr.mxu0 0.0
    %4322 = vmatpush2.msra.mxu0 0.0
    %4323 = vmatprep.subr.mxu0 0.0
    %4324 = vmatpush2.msra.mxu0 0.0
    %4325 = vmatprep.subr.mxu0 0.0
    %4326 = vmatpush2.msra.mxu0 0.0
    %4327 = vmatprep.subr.mxu0 0.0
    %4328 = vmatpush2.msra.mxu0 0.0
    %4329 = vmatprep.subr.mxu0 0.0
    %4330 = vmatpush2.msra.mxu0 0.0
    %4331 = vmatprep.subr.mxu0 0.0
    %4332 = vmatpush2.msra.mxu0 0.0
    %4333 = vmatprep.subr.mxu0 0.0
    %4334 = vmatpush2.msra.mxu0 0.0
    %4335 = vmatprep.subr.mxu0 0.0
    %4336 = vmatpush2.msra.mxu0 0.0
    %4337 = vmatprep.subr.mxu0 0.0
    %4338 = vmatpush2.msra.mxu0 0.0
    %4339 = vmatprep.mubr.f32.mxu0 0.0
    %v4340 = vand.u32 %v4078, 4294901760
    %4341 = vmatmul.mubr.f32.gmra.mxu0 %v4340
    %v4342 = vpop.f32.mrf.mxu0
    %v4343 = vadd.f32 %v4192, %v4342
    %v4344 = vpop.f32.mrf.mxu0
    %4345 = vdwg.mxu0
    %4346 = vmatprep.subr.mxu0 0.0
    %v4347 = vand.u32 %v4095, 4294901760
    %v4348 = vsub.f32 %v4095, %v4347
    %4349 = vmatpush1.msra.mxu0 %v4348
    %4350 = vmatprep.subr.mxu0 0.0
    %v4351 = vand.u32 %v4094, 4294901760
    %v4352 = vsub.f32 %v4094, %v4351
    %4353 = vmatpush1.msra.mxu0 %v4352
    %4354 = vmatprep.subr.mxu0 0.0
    %v4355 = vand.u32 %v4093, 4294901760
    %v4356 = vsub.f32 %v4093, %v4355
    %4357 = vmatpush1.msra.mxu0 %v4356
    %4358 = vmatprep.subr.mxu0 0.0
    %v4359 = vand.u32 %v4092, 4294901760
    %v4360 = vsub.f32 %v4092, %v4359
    %4361 = vmatpush1.msra.mxu0 %v4360
    %4362 = vmatprep.subr.mxu0 0.0
    %v4363 = vand.u32 %v4091, 4294901760
    %v4364 = vsub.f32 %v4091, %v4363
    %4365 = vmatpush1.msra.mxu0 %v4364
    %4366 = vmatprep.subr.mxu0 0.0
    %v4367 = vand.u32 %v4090, 4294901760
    %v4368 = vsub.f32 %v4090, %v4367
    %4369 = vmatpush1.msra.mxu0 %v4368
    %4370 = vmatprep.subr.mxu0 0.0
    %v4371 = vand.u32 %v4089, 4294901760
    %v4372 = vsub.f32 %v4089, %v4371
    %4373 = vmatpush1.msra.mxu0 %v4372
    %4374 = vmatprep.subr.mxu0 0.0
    %v4375 = vand.u32 %v4088, 4294901760
    %v4376 = vsub.f32 %v4088, %v4375
    %4377 = vmatpush1.msra.mxu0 %v4376
    %4378 = vmatprep.subr.mxu0 0.0
    %v4379 = vand.u32 %v4087, 4294901760
    %v4380 = vsub.f32 %v4087, %v4379
    %4381 = vmatpush1.msra.mxu0 %v4380
    %4382 = vmatprep.subr.mxu0 0.0
    %v4383 = vand.u32 %v4086, 4294901760
    %v4384 = vsub.f32 %v4086, %v4383
    %4385 = vmatpush1.msra.mxu0 %v4384
    %4386 = vmatprep.subr.mxu0 0.0
    %v4387 = vand.u32 %v4085, 4294901760
    %v4388 = vsub.f32 %v4085, %v4387
    %4389 = vmatpush1.msra.mxu0 %v4388
    %4390 = vmatprep.subr.mxu0 0.0
    %v4391 = vand.u32 %v4084, 4294901760
    %v4392 = vsub.f32 %v4084, %v4391
    %4393 = vmatpush1.msra.mxu0 %v4392
    %4394 = vmatprep.subr.mxu0 0.0
    %v4395 = vand.u32 %v4083, 4294901760
    %v4396 = vsub.f32 %v4083, %v4395
    %4397 = vmatpush1.msra.mxu0 %v4396
    %4398 = vmatprep.subr.mxu0 0.0
    %v4399 = vand.u32 %v4082, 4294901760
    %v4400 = vsub.f32 %v4082, %v4399
    %4401 = vmatpush1.msra.mxu0 %v4400
    %4402 = vmatprep.subr.mxu0 0.0
    %v4403 = vand.u32 %v4081, 4294901760
    %v4404 = vsub.f32 %v4081, %v4403
    %4405 = vmatpush1.msra.mxu0 %v4404
    %4406 = vmatprep.subr.mxu0 0.0
    %v4407 = vand.u32 %v4080, 4294901760
    %v4408 = vsub.f32 %v4080, %v4407
    %4409 = vmatpush1.msra.mxu0 %v4408
    %4410 = vmatprep.subr.mxu0 0.0
    %4411 = vmatpush2.msra.mxu0 0.0
    %4412 = vmatprep.subr.mxu0 0.0
    %4413 = vmatpush2.msra.mxu0 0.0
    %4414 = vmatprep.subr.mxu0 0.0
    %4415 = vmatpush2.msra.mxu0 0.0
    %4416 = vmatprep.subr.mxu0 0.0
    %4417 = vmatpush2.msra.mxu0 0.0
    %4418 = vmatprep.subr.mxu0 0.0
    %4419 = vmatpush2.msra.mxu0 0.0
    %4420 = vmatprep.subr.mxu0 0.0
    %4421 = vmatpush2.msra.mxu0 0.0
    %4422 = vmatprep.subr.mxu0 0.0
    %4423 = vmatpush2.msra.mxu0 0.0
    %4424 = vmatprep.subr.mxu0 0.0
    %4425 = vmatpush2.msra.mxu0 0.0
    %4426 = vmatprep.subr.mxu0 0.0
    %4427 = vmatpush2.msra.mxu0 0.0
    %4428 = vmatprep.subr.mxu0 0.0
    %4429 = vmatpush2.msra.mxu0 0.0
    %4430 = vmatprep.subr.mxu0 0.0
    %4431 = vmatpush2.msra.mxu0 0.0
    %4432 = vmatprep.subr.mxu0 0.0
    %4433 = vmatpush2.msra.mxu0 0.0
    %4434 = vmatprep.subr.mxu0 0.0
    %4435 = vmatpush2.msra.mxu0 0.0
    %4436 = vmatprep.subr.mxu0 0.0
    %4437 = vmatpush2.msra.mxu0 0.0
    %4438 = vmatprep.subr.mxu0 0.0
    %4439 = vmatpush2.msra.mxu0 0.0
    %4440 = vmatprep.subr.mxu0 0.0
    %4441 = vmatpush2.msra.mxu0 0.0
    %4442 = vmatprep.mubr.f32.mxu0 0.0
    %v4443 = vand.u32 %v4078, 4294901760
    %v4444 = vsub.f32 %v4078, %v4443
    %4445 = vmatmul.mubr.f32.gmra.mxu0 %v4444
    %v4446 = vpop.f32.mrf.mxu0
    %v4447 = vadd.f32 %v4343, %v4446
    %v4448 = vpop.f32.mrf.mxu0
    %4449 = vdwg.mxu0
    %4450 = vmatprep.subr.mxu0 0.0
    %v4451 = vand.u32 %v4095, 4294901760
    %4452 = vmatpush1.msra.mxu0 %v4451
    %4453 = vmatprep.subr.mxu0 0.0
    %v4454 = vand.u32 %v4094, 4294901760
    %4455 = vmatpush1.msra.mxu0 %v4454
    %4456 = vmatprep.subr.mxu0 0.0
    %v4457 = vand.u32 %v4093, 4294901760
    %4458 = vmatpush1.msra.mxu0 %v4457
    %4459 = vmatprep.subr.mxu0 0.0
    %v4460 = vand.u32 %v4092, 4294901760
    %4461 = vmatpush1.msra.mxu0 %v4460
    %4462 = vmatprep.subr.mxu0 0.0
    %v4463 = vand.u32 %v4091, 4294901760
    %4464 = vmatpush1.msra.mxu0 %v4463
    %4465 = vmatprep.subr.mxu0 0.0
    %v4466 = vand.u32 %v4090, 4294901760
    %4467 = vmatpush1.msra.mxu0 %v4466
    %4468 = vmatprep.subr.mxu0 0.0
    %v4469 = vand.u32 %v4089, 4294901760
    %4470 = vmatpush1.msra.mxu0 %v4469
    %4471 = vmatprep.subr.mxu0 0.0
    %v4472 = vand.u32 %v4088, 4294901760
    %4473 = vmatpush1.msra.mxu0 %v4472
    %4474 = vmatprep.subr.mxu0 0.0
    %v4475 = vand.u32 %v4087, 4294901760
    %4476 = vmatpush1.msra.mxu0 %v4475
    %4477 = vmatprep.subr.mxu0 0.0
    %v4478 = vand.u32 %v4086, 4294901760
    %4479 = vmatpush1.msra.mxu0 %v4478
    %4480 = vmatprep.subr.mxu0 0.0
    %v4481 = vand.u32 %v4085, 4294901760
    %4482 = vmatpush1.msra.mxu0 %v4481
    %4483 = vmatprep.subr.mxu0 0.0
    %v4484 = vand.u32 %v4084, 4294901760
    %4485 = vmatpush1.msra.mxu0 %v4484
    %4486 = vmatprep.subr.mxu0 0.0
    %v4487 = vand.u32 %v4083, 4294901760
    %4488 = vmatpush1.msra.mxu0 %v4487
    %4489 = vmatprep.subr.mxu0 0.0
    %v4490 = vand.u32 %v4082, 4294901760
    %4491 = vmatpush1.msra.mxu0 %v4490
    %4492 = vmatprep.subr.mxu0 0.0
    %v4493 = vand.u32 %v4081, 4294901760
    %4494 = vmatpush1.msra.mxu0 %v4493
    %4495 = vmatprep.subr.mxu0 0.0
    %v4496 = vand.u32 %v4080, 4294901760
    %4497 = vmatpush1.msra.mxu0 %v4496
    %4498 = vmatprep.subr.mxu0 0.0
    %4499 = vmatpush2.msra.mxu0 0.0
    %4500 = vmatprep.subr.mxu0 0.0
    %4501 = vmatpush2.msra.mxu0 0.0
    %4502 = vmatprep.subr.mxu0 0.0
    %4503 = vmatpush2.msra.mxu0 0.0
    %4504 = vmatprep.subr.mxu0 0.0
    %4505 = vmatpush2.msra.mxu0 0.0
    %4506 = vmatprep.subr.mxu0 0.0
    %4507 = vmatpush2.msra.mxu0 0.0
    %4508 = vmatprep.subr.mxu0 0.0
    %4509 = vmatpush2.msra.mxu0 0.0
    %4510 = vmatprep.subr.mxu0 0.0
    %4511 = vmatpush2.msra.mxu0 0.0
    %4512 = vmatprep.subr.mxu0 0.0
    %4513 = vmatpush2.msra.mxu0 0.0
    %4514 = vmatprep.subr.mxu0 0.0
    %4515 = vmatpush2.msra.mxu0 0.0
    %4516 = vmatprep.subr.mxu0 0.0
    %4517 = vmatpush2.msra.mxu0 0.0
    %4518 = vmatprep.subr.mxu0 0.0
    %4519 = vmatpush2.msra.mxu0 0.0
    %4520 = vmatprep.subr.mxu0 0.0
    %4521 = vmatpush2.msra.mxu0 0.0
    %4522 = vmatprep.subr.mxu0 0.0
    %4523 = vmatpush2.msra.mxu0 0.0
    %4524 = vmatprep.subr.mxu0 0.0
    %4525 = vmatpush2.msra.mxu0 0.0
    %4526 = vmatprep.subr.mxu0 0.0
    %4527 = vmatpush2.msra.mxu0 0.0
    %4528 = vmatprep.subr.mxu0 0.0
    %4529 = vmatpush2.msra.mxu0 0.0
    %4530 = vmatprep.mubr.f32.mxu0 0.0
    %v4531 = vand.u32 %v4078, 4294901760
    %v4532 = vsub.f32 %v4078, %v4531
    %v4533 = vand.u32 %v4532, 4294901760
    %4534 = vmatmul.mubr.f32.gmra.mxu0 %v4533
    %v4535 = vpop.f32.mrf.mxu0
    %v4536 = vadd.f32 %v4447, %v4535
    %v4537 = vpop.f32.mrf.mxu0
    %4538 = vdwg.mxu0
    %4539 = vmatprep.subr.mxu0 0.0
    %v4540 = vand.u32 %v4095, 4294901760
    %v4541 = vsub.f32 %v4095, %v4540
    %v4542 = vand.u32 %v4541, 4294901760
    %4543 = vmatpush1.msra.mxu0 %v4542
    %4544 = vmatprep.subr.mxu0 0.0
    %v4545 = vand.u32 %v4094, 4294901760
    %v4546 = vsub.f32 %v4094, %v4545
    %v4547 = vand.u32 %v4546, 4294901760
    %4548 = vmatpush1.msra.mxu0 %v4547
    %4549 = vmatprep.subr.mxu0 0.0
    %v4550 = vand.u32 %v4093, 4294901760
    %v4551 = vsub.f32 %v4093, %v4550
    %v4552 = vand.u32 %v4551, 4294901760
    %4553 = vmatpush1.msra.mxu0 %v4552
    %4554 = vmatprep.subr.mxu0 0.0
    %v4555 = vand.u32 %v4092, 4294901760
    %v4556 = vsub.f32 %v4092, %v4555
    %v4557 = vand.u32 %v4556, 4294901760
    %4558 = vmatpush1.msra.mxu0 %v4557
    %4559 = vmatprep.subr.mxu0 0.0
    %v4560 = vand.u32 %v4091, 4294901760
    %v4561 = vsub.f32 %v4091, %v4560
    %v4562 = vand.u32 %v4561, 4294901760
    %4563 = vmatpush1.msra.mxu0 %v4562
    %4564 = vmatprep.subr.mxu0 0.0
    %v4565 = vand.u32 %v4090, 4294901760
    %v4566 = vsub.f32 %v4090, %v4565
    %v4567 = vand.u32 %v4566, 4294901760
    %4568 = vmatpush1.msra.mxu0 %v4567
    %4569 = vmatprep.subr.mxu0 0.0
    %v4570 = vand.u32 %v4089, 4294901760
    %v4571 = vsub.f32 %v4089, %v4570
    %v4572 = vand.u32 %v4571, 4294901760
    %4573 = vmatpush1.msra.mxu0 %v4572
    %4574 = vmatprep.subr.mxu0 0.0
    %v4575 = vand.u32 %v4088, 4294901760
    %v4576 = vsub.f32 %v4088, %v4575
    %v4577 = vand.u32 %v4576, 4294901760
    %4578 = vmatpush1.msra.mxu0 %v4577
    %4579 = vmatprep.subr.mxu0 0.0
    %v4580 = vand.u32 %v4087, 4294901760
    %v4581 = vsub.f32 %v4087, %v4580
    %v4582 = vand.u32 %v4581, 4294901760
    %4583 = vmatpush1.msra.mxu0 %v4582
    %4584 = vmatprep.subr.mxu0 0.0
    %v4585 = vand.u32 %v4086, 4294901760
    %v4586 = vsub.f32 %v4086, %v4585
    %v4587 = vand.u32 %v4586, 4294901760
    %4588 = vmatpush1.msra.mxu0 %v4587
    %4589 = vmatprep.subr.mxu0 0.0
    %v4590 = vand.u32 %v4085, 4294901760
    %v4591 = vsub.f32 %v4085, %v4590
    %v4592 = vand.u32 %v4591, 4294901760
    %4593 = vmatpush1.msra.mxu0 %v4592
    %4594 = vmatprep.subr.mxu0 0.0
    %v4595 = vand.u32 %v4084, 4294901760
    %v4596 = vsub.f32 %v4084, %v4595
    %v4597 = vand.u32 %v4596, 4294901760
    %4598 = vmatpush1.msra.mxu0 %v4597
    %4599 = vmatprep.subr.mxu0 0.0
    %v4600 = vand.u32 %v4083, 4294901760
    %v4601 = vsub.f32 %v4083, %v4600
    %v4602 = vand.u32 %v4601, 4294901760
    %4603 = vmatpush1.msra.mxu0 %v4602
    %4604 = vmatprep.subr.mxu0 0.0
    %v4605 = vand.u32 %v4082, 4294901760
    %v4606 = vsub.f32 %v4082, %v4605
    %v4607 = vand.u32 %v4606, 4294901760
    %4608 = vmatpush1.msra.mxu0 %v4607
    %4609 = vmatprep.subr.mxu0 0.0
    %v4610 = vand.u32 %v4081, 4294901760
    %v4611 = vsub.f32 %v4081, %v4610
    %v4612 = vand.u32 %v4611, 4294901760
    %4613 = vmatpush1.msra.mxu0 %v4612
    %4614 = vmatprep.subr.mxu0 0.0
    %v4615 = vand.u32 %v4080, 4294901760
    %v4616 = vsub.f32 %v4080, %v4615
    %v4617 = vand.u32 %v4616, 4294901760
    %4618 = vmatpush1.msra.mxu0 %v4617
    %4619 = vmatprep.subr.mxu0 0.0
    %4620 = vmatpush2.msra.mxu0 0.0
    %4621 = vmatprep.subr.mxu0 0.0
    %4622 = vmatpush2.msra.mxu0 0.0
    %4623 = vmatprep.subr.mxu0 0.0
    %4624 = vmatpush2.msra.mxu0 0.0
    %4625 = vmatprep.subr.mxu0 0.0
    %4626 = vmatpush2.msra.mxu0 0.0
    %4627 = vmatprep.subr.mxu0 0.0
    %4628 = vmatpush2.msra.mxu0 0.0
    %4629 = vmatprep.subr.mxu0 0.0
    %4630 = vmatpush2.msra.mxu0 0.0
    %4631 = vmatprep.subr.mxu0 0.0
    %4632 = vmatpush2.msra.mxu0 0.0
    %4633 = vmatprep.subr.mxu0 0.0
    %4634 = vmatpush2.msra.mxu0 0.0
    %4635 = vmatprep.subr.mxu0 0.0
    %4636 = vmatpush2.msra.mxu0 0.0
    %4637 = vmatprep.subr.mxu0 0.0
    %4638 = vmatpush2.msra.mxu0 0.0
    %4639 = vmatprep.subr.mxu0 0.0
    %4640 = vmatpush2.msra.mxu0 0.0
    %4641 = vmatprep.subr.mxu0 0.0
    %4642 = vmatpush2.msra.mxu0 0.0
    %4643 = vmatprep.subr.mxu0 0.0
    %4644 = vmatpush2.msra.mxu0 0.0
    %4645 = vmatprep.subr.mxu0 0.0
    %4646 = vmatpush2.msra.mxu0 0.0
    %4647 = vmatprep.subr.mxu0 0.0
    %4648 = vmatpush2.msra.mxu0 0.0
    %4649 = vmatprep.subr.mxu0 0.0
    %4650 = vmatpush2.msra.mxu0 0.0
    %4651 = vmatprep.mubr.f32.mxu0 0.0
    %v4652 = vand.u32 %v4078, 4294901760
    %4653 = vmatmul.mubr.f32.gmra.mxu0 %v4652
    %v4654 = vpop.f32.mrf.mxu0
    %v4655 = vadd.f32 %v4536, %v4654
    %v4656 = vpop.f32.mrf.mxu0
    %4657 = vdwg.mxu0
    %4658 = vmatprep.subr.mxu0 0.0
    %v4659 = vand.u32 %v4095, 4294901760
    %4660 = vmatpush1.msra.mxu0 %v4659
    %4661 = vmatprep.subr.mxu0 0.0
    %v4662 = vand.u32 %v4094, 4294901760
    %4663 = vmatpush1.msra.mxu0 %v4662
    %4664 = vmatprep.subr.mxu0 0.0
    %v4665 = vand.u32 %v4093, 4294901760
    %4666 = vmatpush1.msra.mxu0 %v4665
    %4667 = vmatprep.subr.mxu0 0.0
    %v4668 = vand.u32 %v4092, 4294901760
    %4669 = vmatpush1.msra.mxu0 %v4668
    %4670 = vmatprep.subr.mxu0 0.0
    %v4671 = vand.u32 %v4091, 4294901760
    %4672 = vmatpush1.msra.mxu0 %v4671
    %4673 = vmatprep.subr.mxu0 0.0
    %v4674 = vand.u32 %v4090, 4294901760
    %4675 = vmatpush1.msra.mxu0 %v4674
    %4676 = vmatprep.subr.mxu0 0.0
    %v4677 = vand.u32 %v4089, 4294901760
    %4678 = vmatpush1.msra.mxu0 %v4677
    %4679 = vmatprep.subr.mxu0 0.0
    %v4680 = vand.u32 %v4088, 4294901760
    %4681 = vmatpush1.msra.mxu0 %v4680
    %4682 = vmatprep.subr.mxu0 0.0
    %v4683 = vand.u32 %v4087, 4294901760
    %4684 = vmatpush1.msra.mxu0 %v4683
    %4685 = vmatprep.subr.mxu0 0.0
    %v4686 = vand.u32 %v4086, 4294901760
    %4687 = vmatpush1.msra.mxu0 %v4686
    %4688 = vmatprep.subr.mxu0 0.0
    %v4689 = vand.u32 %v4085, 4294901760
    %4690 = vmatpush1.msra.mxu0 %v4689
    %4691 = vmatprep.subr.mxu0 0.0
    %v4692 = vand.u32 %v4084, 4294901760
    %4693 = vmatpush1.msra.mxu0 %v4692
    %4694 = vmatprep.subr.mxu0 0.0
    %v4695 = vand.u32 %v4083, 4294901760
    %4696 = vmatpush1.msra.mxu0 %v4695
    %4697 = vmatprep.subr.mxu0 0.0
    %v4698 = vand.u32 %v4082, 4294901760
    %4699 = vmatpush1.msra.mxu0 %v4698
    %4700 = vmatprep.subr.mxu0 0.0
    %v4701 = vand.u32 %v4081, 4294901760
    %4702 = vmatpush1.msra.mxu0 %v4701
    %4703 = vmatprep.subr.mxu0 0.0
    %v4704 = vand.u32 %v4080, 4294901760
    %4705 = vmatpush1.msra.mxu0 %v4704
    %4706 = vmatprep.subr.mxu0 0.0
    %4707 = vmatpush2.msra.mxu0 0.0
    %4708 = vmatprep.subr.mxu0 0.0
    %4709 = vmatpush2.msra.mxu0 0.0
    %4710 = vmatprep.subr.mxu0 0.0
    %4711 = vmatpush2.msra.mxu0 0.0
    %4712 = vmatprep.subr.mxu0 0.0
    %4713 = vmatpush2.msra.mxu0 0.0
    %4714 = vmatprep.subr.mxu0 0.0
    %4715 = vmatpush2.msra.mxu0 0.0
    %4716 = vmatprep.subr.mxu0 0.0
    %4717 = vmatpush2.msra.mxu0 0.0
    %4718 = vmatprep.subr.mxu0 0.0
    %4719 = vmatpush2.msra.mxu0 0.0
    %4720 = vmatprep.subr.mxu0 0.0
    %4721 = vmatpush2.msra.mxu0 0.0
    %4722 = vmatprep.subr.mxu0 0.0
    %4723 = vmatpush2.msra.mxu0 0.0
    %4724 = vmatprep.subr.mxu0 0.0
    %4725 = vmatpush2.msra.mxu0 0.0
    %4726 = vmatprep.subr.mxu0 0.0
    %4727 = vmatpush2.msra.mxu0 0.0
    %4728 = vmatprep.subr.mxu0 0.0
    %4729 = vmatpush2.msra.mxu0 0.0
    %4730 = vmatprep.subr.mxu0 0.0
    %4731 = vmatpush2.msra.mxu0 0.0
    %4732 = vmatprep.subr.mxu0 0.0
    %4733 = vmatpush2.msra.mxu0 0.0
    %4734 = vmatprep.subr.mxu0 0.0
    %4735 = vmatpush2.msra.mxu0 0.0
    %4736 = vmatprep.subr.mxu0 0.0
    %4737 = vmatpush2.msra.mxu0 0.0
    %4738 = vmatprep.mubr.f32.mxu0 0.0
    %v4739 = vand.u32 %v4078, 4294901760
    %4740 = vmatmul.mubr.f32.gmra.mxu0 %v4739
    %v4741 = vpop.f32.mrf.mxu0
    %v4742 = vadd.f32 %v4655, %v4741
    %v4743 = vpop.f32.mrf.mxu0
    %4744 = vdwg.mxu0
    %v4745 = vmax.f32 %v4742, 0.0
    %v4746 = vld [vmem:[#allocation8] sm:$0xff]
    %v4747 = vld [vmem:[#allocation8 + $0x8] sm:$0xff]
    %v4748 = vld [vmem:[#allocation8 + $0x10] sm:$0xff]
    %v4749 = vld [vmem:[#allocation8 + $0x18] sm:$0xff]
    %v4750 = vld [vmem:[#allocation8 + $0x20] sm:$0xff]
    %v4751 = vld [vmem:[#allocation8 + $0x28] sm:$0xff]
    %v4752 = vld [vmem:[#allocation8 + $0x30] sm:$0xff]
    %v4753 = vld [vmem:[#allocation8 + $0x38] sm:$0xff]
    %v4754 = vld [vmem:[#allocation8 + $0x40] sm:$0xff]
    %v4755 = vld [vmem:[#allocation8 + $0x48] sm:$0xff]
    %v4756 = vld [vmem:[#allocation8 + $0x50] sm:$0xff]
    %v4757 = vld [vmem:[#allocation8 + $0x58] sm:$0xff]
    %v4758 = vld [vmem:[#allocation8 + $0x60] sm:$0xff]
    %v4759 = vld [vmem:[#allocation8 + $0x68] sm:$0xff]
    %v4760 = vld [vmem:[#allocation8 + $0x70] sm:$0xff]
    %v4761 = vld [vmem:[#allocation8 + $0x78] sm:$0xff]
    %v4762 = vld [vmem:[%s6] sm:$0x1]
    %v4764 = vlaneseq
    %v4765 = vshrl.u32 %v4764, 7
    %v4766 = vsub.s32 0, %v4765
    %v4767 = vrot.slane %v4762, %v4766
    %4769 = vmatprep.subr.mxu0 0.0
    %v4770 = vand.u32 %v4761, 4294901760
    %4771 = vmatpush1.msra.mxu0 %v4770
    %4772 = vmatprep.subr.mxu0 0.0
    %v4773 = vand.u32 %v4760, 4294901760
    %4774 = vmatpush1.msra.mxu0 %v4773
    %4775 = vmatprep.subr.mxu0 0.0
    %v4776 = vand.u32 %v4759, 4294901760
    %4777 = vmatpush1.msra.mxu0 %v4776
    %4778 = vmatprep.subr.mxu0 0.0
    %v4779 = vand.u32 %v4758, 4294901760
    %4780 = vmatpush1.msra.mxu0 %v4779
    %4781 = vmatprep.subr.mxu0 0.0
    %v4782 = vand.u32 %v4757, 4294901760
    %4783 = vmatpush1.msra.mxu0 %v4782
    %4784 = vmatprep.subr.mxu0 0.0
    %v4785 = vand.u32 %v4756, 4294901760
    %4786 = vmatpush1.msra.mxu0 %v4785
    %4787 = vmatprep.subr.mxu0 0.0
    %v4788 = vand.u32 %v4755, 4294901760
    %4789 = vmatpush1.msra.mxu0 %v4788
    %4790 = vmatprep.subr.mxu0 0.0
    %v4791 = vand.u32 %v4754, 4294901760
    %4792 = vmatpush1.msra.mxu0 %v4791
    %4793 = vmatprep.subr.mxu0 0.0
    %v4794 = vand.u32 %v4753, 4294901760
    %4795 = vmatpush1.msra.mxu0 %v4794
    %4796 = vmatprep.subr.mxu0 0.0
    %v4797 = vand.u32 %v4752, 4294901760
    %4798 = vmatpush1.msra.mxu0 %v4797
    %4799 = vmatprep.subr.mxu0 0.0
    %v4800 = vand.u32 %v4751, 4294901760
    %4801 = vmatpush1.msra.mxu0 %v4800
    %4802 = vmatprep.subr.mxu0 0.0
    %v4803 = vand.u32 %v4750, 4294901760
    %4804 = vmatpush1.msra.mxu0 %v4803
    %4805 = vmatprep.subr.mxu0 0.0
    %v4806 = vand.u32 %v4749, 4294901760
    %4807 = vmatpush1.msra.mxu0 %v4806
    %4808 = vmatprep.subr.mxu0 0.0
    %v4809 = vand.u32 %v4748, 4294901760
    %4810 = vmatpush1.msra.mxu0 %v4809
    %4811 = vmatprep.subr.mxu0 0.0
    %v4812 = vand.u32 %v4747, 4294901760
    %4813 = vmatpush1.msra.mxu0 %v4812
    %4814 = vmatprep.subr.mxu0 0.0
    %v4815 = vand.u32 %v4746, 4294901760
    %4816 = vmatpush1.msra.mxu0 %v4815
    %4817 = vmatprep.subr.mxu0 0.0
    %4818 = vmatpush2.msra.mxu0 0.0
    %4819 = vmatprep.subr.mxu0 0.0
    %4820 = vmatpush2.msra.mxu0 0.0
    %4821 = vmatprep.subr.mxu0 0.0
    %4822 = vmatpush2.msra.mxu0 0.0
    %4823 = vmatprep.subr.mxu0 0.0
    %4824 = vmatpush2.msra.mxu0 0.0
    %4825 = vmatprep.subr.mxu0 0.0
    %4826 = vmatpush2.msra.mxu0 0.0
    %4827 = vmatprep.subr.mxu0 0.0
    %4828 = vmatpush2.msra.mxu0 0.0
    %4829 = vmatprep.subr.mxu0 0.0
    %4830 = vmatpush2.msra.mxu0 0.0
    %4831 = vmatprep.subr.mxu0 0.0
    %4832 = vmatpush2.msra.mxu0 0.0
    %4833 = vmatprep.subr.mxu0 0.0
    %4834 = vmatpush2.msra.mxu0 0.0
    %4835 = vmatprep.subr.mxu0 0.0
    %4836 = vmatpush2.msra.mxu0 0.0
    %4837 = vmatprep.subr.mxu0 0.0
    %4838 = vmatpush2.msra.mxu0 0.0
    %4839 = vmatprep.subr.mxu0 0.0
    %4840 = vmatpush2.msra.mxu0 0.0
    %4841 = vmatprep.subr.mxu0 0.0
    %4842 = vmatpush2.msra.mxu0 0.0
    %4843 = vmatprep.subr.mxu0 0.0
    %4844 = vmatpush2.msra.mxu0 0.0
    %4845 = vmatprep.subr.mxu0 0.0
    %4846 = vmatpush2.msra.mxu0 0.0
    %4847 = vmatprep.subr.mxu0 0.0
    %4848 = vmatpush2.msra.mxu0 0.0
    %4849 = vmatprep.mubr.f32.mxu0 0.0
    %v4850 = vand.u32 %v4745, 4294901760
    %v4851 = vsub.f32 %v4745, %v4850
    %v4852 = vand.u32 %v4851, 4294901760
    %v4853 = vsub.f32 %v4851, %v4852
    %v4854 = vand.u32 %v4853, 4294901760
    %4855 = vmatmul.mubr.f32.gmra.mxu0 %v4854
    %v4856 = vpop.f32.mrf.mxu0
    %v4857 = vadd.f32 %v4767, %v4856
    %v4858 = vpop.f32.mrf.mxu0
    %4859 = vdwg.mxu0
    %4860 = vmatprep.subr.mxu0 0.0
    %v4861 = vand.u32 %v4761, 4294901760
    %v4862 = vsub.f32 %v4761, %v4861
    %v4863 = vand.u32 %v4862, 4294901760
    %v4864 = vsub.f32 %v4862, %v4863
    %v4865 = vand.u32 %v4864, 4294901760
    %4866 = vmatpush1.msra.mxu0 %v4865
    %4867 = vmatprep.subr.mxu0 0.0
    %v4868 = vand.u32 %v4760, 4294901760
    %v4869 = vsub.f32 %v4760, %v4868
    %v4870 = vand.u32 %v4869, 4294901760
    %v4871 = vsub.f32 %v4869, %v4870
    %v4872 = vand.u32 %v4871, 4294901760
    %4873 = vmatpush1.msra.mxu0 %v4872
    %4874 = vmatprep.subr.mxu0 0.0
    %v4875 = vand.u32 %v4759, 4294901760
    %v4876 = vsub.f32 %v4759, %v4875
    %v4877 = vand.u32 %v4876, 4294901760
    %v4878 = vsub.f32 %v4876, %v4877
    %v4879 = vand.u32 %v4878, 4294901760
    %4880 = vmatpush1.msra.mxu0 %v4879
    %4881 = vmatprep.subr.mxu0 0.0
    %v4882 = vand.u32 %v4758, 4294901760
    %v4883 = vsub.f32 %v4758, %v4882
    %v4884 = vand.u32 %v4883, 4294901760
    %v4885 = vsub.f32 %v4883, %v4884
    %v4886 = vand.u32 %v4885, 4294901760
    %4887 = vmatpush1.msra.mxu0 %v4886
    %4888 = vmatprep.subr.mxu0 0.0
    %v4889 = vand.u32 %v4757, 4294901760
    %v4890 = vsub.f32 %v4757, %v4889
    %v4891 = vand.u32 %v4890, 4294901760
    %v4892 = vsub.f32 %v4890, %v4891
    %v4893 = vand.u32 %v4892, 4294901760
    %4894 = vmatpush1.msra.mxu0 %v4893
    %4895 = vmatprep.subr.mxu0 0.0
    %v4896 = vand.u32 %v4756, 4294901760
    %v4897 = vsub.f32 %v4756, %v4896
    %v4898 = vand.u32 %v4897, 4294901760
    %v4899 = vsub.f32 %v4897, %v4898
    %v4900 = vand.u32 %v4899, 4294901760
    %4901 = vmatpush1.msra.mxu0 %v4900
    %4902 = vmatprep.subr.mxu0 0.0
    %v4903 = vand.u32 %v4755, 4294901760
    %v4904 = vsub.f32 %v4755, %v4903
    %v4905 = vand.u32 %v4904, 4294901760
    %v4906 = vsub.f32 %v4904, %v4905
    %v4907 = vand.u32 %v4906, 4294901760
    %4908 = vmatpush1.msra.mxu0 %v4907
    %4909 = vmatprep.subr.mxu0 0.0
    %v4910 = vand.u32 %v4754, 4294901760
    %v4911 = vsub.f32 %v4754, %v4910
    %v4912 = vand.u32 %v4911, 4294901760
    %v4913 = vsub.f32 %v4911, %v4912
    %v4914 = vand.u32 %v4913, 4294901760
    %4915 = vmatpush1.msra.mxu0 %v4914
    %4916 = vmatprep.subr.mxu0 0.0
    %v4917 = vand.u32 %v4753, 4294901760
    %v4918 = vsub.f32 %v4753, %v4917
    %v4919 = vand.u32 %v4918, 4294901760
    %v4920 = vsub.f32 %v4918, %v4919
    %v4921 = vand.u32 %v4920, 4294901760
    %4922 = vmatpush1.msra.mxu0 %v4921
    %4923 = vmatprep.subr.mxu0 0.0
    %v4924 = vand.u32 %v4752, 4294901760
    %v4925 = vsub.f32 %v4752, %v4924
    %v4926 = vand.u32 %v4925, 4294901760
    %v4927 = vsub.f32 %v4925, %v4926
    %v4928 = vand.u32 %v4927, 4294901760
    %4929 = vmatpush1.msra.mxu0 %v4928
    %4930 = vmatprep.subr.mxu0 0.0
    %v4931 = vand.u32 %v4751, 4294901760
    %v4932 = vsub.f32 %v4751, %v4931
    %v4933 = vand.u32 %v4932, 4294901760
    %v4934 = vsub.f32 %v4932, %v4933
    %v4935 = vand.u32 %v4934, 4294901760
    %4936 = vmatpush1.msra.mxu0 %v4935
    %4937 = vmatprep.subr.mxu0 0.0
    %v4938 = vand.u32 %v4750, 4294901760
    %v4939 = vsub.f32 %v4750, %v4938
    %v4940 = vand.u32 %v4939, 4294901760
    %v4941 = vsub.f32 %v4939, %v4940
    %v4942 = vand.u32 %v4941, 4294901760
    %4943 = vmatpush1.msra.mxu0 %v4942
    %4944 = vmatprep.subr.mxu0 0.0
    %v4945 = vand.u32 %v4749, 4294901760
    %v4946 = vsub.f32 %v4749, %v4945
    %v4947 = vand.u32 %v4946, 4294901760
    %v4948 = vsub.f32 %v4946, %v4947
    %v4949 = vand.u32 %v4948, 4294901760
    %4950 = vmatpush1.msra.mxu0 %v4949
    %4951 = vmatprep.subr.mxu0 0.0
    %v4952 = vand.u32 %v4748, 4294901760
    %v4953 = vsub.f32 %v4748, %v4952
    %v4954 = vand.u32 %v4953, 4294901760
    %v4955 = vsub.f32 %v4953, %v4954
    %v4956 = vand.u32 %v4955, 4294901760
    %4957 = vmatpush1.msra.mxu0 %v4956
    %4958 = vmatprep.subr.mxu0 0.0
    %v4959 = vand.u32 %v4747, 4294901760
    %v4960 = vsub.f32 %v4747, %v4959
    %v4961 = vand.u32 %v4960, 4294901760
    %v4962 = vsub.f32 %v4960, %v4961
    %v4963 = vand.u32 %v4962, 4294901760
    %4964 = vmatpush1.msra.mxu0 %v4963
    %4965 = vmatprep.subr.mxu0 0.0
    %v4966 = vand.u32 %v4746, 4294901760
    %v4967 = vsub.f32 %v4746, %v4966
    %v4968 = vand.u32 %v4967, 4294901760
    %v4969 = vsub.f32 %v4967, %v4968
    %v4970 = vand.u32 %v4969, 4294901760
    %4971 = vmatpush1.msra.mxu0 %v4970
    %4972 = vmatprep.subr.mxu0 0.0
    %4973 = vmatpush2.msra.mxu0 0.0
    %4974 = vmatprep.subr.mxu0 0.0
    %4975 = vmatpush2.msra.mxu0 0.0
    %4976 = vmatprep.subr.mxu0 0.0
    %4977 = vmatpush2.msra.mxu0 0.0
    %4978 = vmatprep.subr.mxu0 0.0
    %4979 = vmatpush2.msra.mxu0 0.0
    %4980 = vmatprep.subr.mxu0 0.0
    %4981 = vmatpush2.msra.mxu0 0.0
    %4982 = vmatprep.subr.mxu0 0.0
    %4983 = vmatpush2.msra.mxu0 0.0
    %4984 = vmatprep.subr.mxu0 0.0
    %4985 = vmatpush2.msra.mxu0 0.0
    %4986 = vmatprep.subr.mxu0 0.0
    %4987 = vmatpush2.msra.mxu0 0.0
    %4988 = vmatprep.subr.mxu0 0.0
    %4989 = vmatpush2.msra.mxu0 0.0
    %4990 = vmatprep.subr.mxu0 0.0
    %4991 = vmatpush2.msra.mxu0 0.0
    %4992 = vmatprep.subr.mxu0 0.0
    %4993 = vmatpush2.msra.mxu0 0.0
    %4994 = vmatprep.subr.mxu0 0.0
    %4995 = vmatpush2.msra.mxu0 0.0
    %4996 = vmatprep.subr.mxu0 0.0
    %4997 = vmatpush2.msra.mxu0 0.0
    %4998 = vmatprep.subr.mxu0 0.0
    %4999 = vmatpush2.msra.mxu0 0.0
    %5000 = vmatprep.subr.mxu0 0.0
    %5001 = vmatpush2.msra.mxu0 0.0
    %5002 = vmatprep.subr.mxu0 0.0
    %5003 = vmatpush2.msra.mxu0 0.0
    %5004 = vmatprep.mubr.f32.mxu0 0.0
    %v5005 = vand.u32 %v4745, 4294901760
    %5006 = vmatmul.mubr.f32.gmra.mxu0 %v5005
    %v5007 = vpop.f32.mrf.mxu0
    %v5008 = vadd.f32 %v4857, %v5007
    %v5009 = vpop.f32.mrf.mxu0
    %5010 = vdwg.mxu0
    %5011 = vmatprep.subr.mxu0 0.0
    %v5012 = vand.u32 %v4761, 4294901760
    %v5013 = vsub.f32 %v4761, %v5012
    %5014 = vmatpush1.msra.mxu0 %v5013
    %5015 = vmatprep.subr.mxu0 0.0
    %v5016 = vand.u32 %v4760, 4294901760
    %v5017 = vsub.f32 %v4760, %v5016
    %5018 = vmatpush1.msra.mxu0 %v5017
    %5019 = vmatprep.subr.mxu0 0.0
    %v5020 = vand.u32 %v4759, 4294901760
    %v5021 = vsub.f32 %v4759, %v5020
    %5022 = vmatpush1.msra.mxu0 %v5021
    %5023 = vmatprep.subr.mxu0 0.0
    %v5024 = vand.u32 %v4758, 4294901760
    %v5025 = vsub.f32 %v4758, %v5024
    %5026 = vmatpush1.msra.mxu0 %v5025
    %5027 = vmatprep.subr.mxu0 0.0
    %v5028 = vand.u32 %v4757, 4294901760
    %v5029 = vsub.f32 %v4757, %v5028
    %5030 = vmatpush1.msra.mxu0 %v5029
    %5031 = vmatprep.subr.mxu0 0.0
    %v5032 = vand.u32 %v4756, 4294901760
    %v5033 = vsub.f32 %v4756, %v5032
    %5034 = vmatpush1.msra.mxu0 %v5033
    %5035 = vmatprep.subr.mxu0 0.0
    %v5036 = vand.u32 %v4755, 4294901760
    %v5037 = vsub.f32 %v4755, %v5036
    %5038 = vmatpush1.msra.mxu0 %v5037
    %5039 = vmatprep.subr.mxu0 0.0
    %v5040 = vand.u32 %v4754, 4294901760
    %v5041 = vsub.f32 %v4754, %v5040
    %5042 = vmatpush1.msra.mxu0 %v5041
    %5043 = vmatprep.subr.mxu0 0.0
    %v5044 = vand.u32 %v4753, 4294901760
    %v5045 = vsub.f32 %v4753, %v5044
    %5046 = vmatpush1.msra.mxu0 %v5045
    %5047 = vmatprep.subr.mxu0 0.0
    %v5048 = vand.u32 %v4752, 4294901760
    %v5049 = vsub.f32 %v4752, %v5048
    %5050 = vmatpush1.msra.mxu0 %v5049
    %5051 = vmatprep.subr.mxu0 0.0
    %v5052 = vand.u32 %v4751, 4294901760
    %v5053 = vsub.f32 %v4751, %v5052
    %5054 = vmatpush1.msra.mxu0 %v5053
    %5055 = vmatprep.subr.mxu0 0.0
    %v5056 = vand.u32 %v4750, 4294901760
    %v5057 = vsub.f32 %v4750, %v5056
    %5058 = vmatpush1.msra.mxu0 %v5057
    %5059 = vmatprep.subr.mxu0 0.0
    %v5060 = vand.u32 %v4749, 4294901760
    %v5061 = vsub.f32 %v4749, %v5060
    %5062 = vmatpush1.msra.mxu0 %v5061
    %5063 = vmatprep.subr.mxu0 0.0
    %v5064 = vand.u32 %v4748, 4294901760
    %v5065 = vsub.f32 %v4748, %v5064
    %5066 = vmatpush1.msra.mxu0 %v5065
    %5067 = vmatprep.subr.mxu0 0.0
    %v5068 = vand.u32 %v4747, 4294901760
    %v5069 = vsub.f32 %v4747, %v5068
    %5070 = vmatpush1.msra.mxu0 %v5069
    %5071 = vmatprep.subr.mxu0 0.0
    %v5072 = vand.u32 %v4746, 4294901760
    %v5073 = vsub.f32 %v4746, %v5072
    %5074 = vmatpush1.msra.mxu0 %v5073
    %5075 = vmatprep.subr.mxu0 0.0
    %5076 = vmatpush2.msra.mxu0 0.0
    %5077 = vmatprep.subr.mxu0 0.0
    %5078 = vmatpush2.msra.mxu0 0.0
    %5079 = vmatprep.subr.mxu0 0.0
    %5080 = vmatpush2.msra.mxu0 0.0
    %5081 = vmatprep.subr.mxu0 0.0
    %5082 = vmatpush2.msra.mxu0 0.0
    %5083 = vmatprep.subr.mxu0 0.0
    %5084 = vmatpush2.msra.mxu0 0.0
    %5085 = vmatprep.subr.mxu0 0.0
    %5086 = vmatpush2.msra.mxu0 0.0
    %5087 = vmatprep.subr.mxu0 0.0
    %5088 = vmatpush2.msra.mxu0 0.0
    %5089 = vmatprep.subr.mxu0 0.0
    %5090 = vmatpush2.msra.mxu0 0.0
    %5091 = vmatprep.subr.mxu0 0.0
    %5092 = vmatpush2.msra.mxu0 0.0
    %5093 = vmatprep.subr.mxu0 0.0
    %5094 = vmatpush2.msra.mxu0 0.0
    %5095 = vmatprep.subr.mxu0 0.0
    %5096 = vmatpush2.msra.mxu0 0.0
    %5097 = vmatprep.subr.mxu0 0.0
    %5098 = vmatpush2.msra.mxu0 0.0
    %5099 = vmatprep.subr.mxu0 0.0
    %5100 = vmatpush2.msra.mxu0 0.0
    %5101 = vmatprep.subr.mxu0 0.0
    %5102 = vmatpush2.msra.mxu0 0.0
    %5103 = vmatprep.subr.mxu0 0.0
    %5104 = vmatpush2.msra.mxu0 0.0
    %5105 = vmatprep.subr.mxu0 0.0
    %5106 = vmatpush2.msra.mxu0 0.0
    %5107 = vmatprep.mubr.f32.mxu0 0.0
    %v5108 = vand.u32 %v4745, 4294901760
    %v5109 = vsub.f32 %v4745, %v5108
    %5110 = vmatmul.mubr.f32.gmra.mxu0 %v5109
    %v5111 = vpop.f32.mrf.mxu0
    %v5112 = vadd.f32 %v5008, %v5111
    %v5113 = vpop.f32.mrf.mxu0
    %5114 = vdwg.mxu0
    %5115 = vmatprep.subr.mxu0 0.0
    %v5116 = vand.u32 %v4761, 4294901760
    %5117 = vmatpush1.msra.mxu0 %v5116
    %5118 = vmatprep.subr.mxu0 0.0
    %v5119 = vand.u32 %v4760, 4294901760
    %5120 = vmatpush1.msra.mxu0 %v5119
    %5121 = vmatprep.subr.mxu0 0.0
    %v5122 = vand.u32 %v4759, 4294901760
    %5123 = vmatpush1.msra.mxu0 %v5122
    %5124 = vmatprep.subr.mxu0 0.0
    %v5125 = vand.u32 %v4758, 4294901760
    %5126 = vmatpush1.msra.mxu0 %v5125
    %5127 = vmatprep.subr.mxu0 0.0
    %v5128 = vand.u32 %v4757, 4294901760
    %5129 = vmatpush1.msra.mxu0 %v5128
    %5130 = vmatprep.subr.mxu0 0.0
    %v5131 = vand.u32 %v4756, 4294901760
    %5132 = vmatpush1.msra.mxu0 %v5131
    %5133 = vmatprep.subr.mxu0 0.0
    %v5134 = vand.u32 %v4755, 4294901760
    %5135 = vmatpush1.msra.mxu0 %v5134
    %5136 = vmatprep.subr.mxu0 0.0
    %v5137 = vand.u32 %v4754, 4294901760
    %5138 = vmatpush1.msra.mxu0 %v5137
    %5139 = vmatprep.subr.mxu0 0.0
    %v5140 = vand.u32 %v4753, 4294901760
    %5141 = vmatpush1.msra.mxu0 %v5140
    %5142 = vmatprep.subr.mxu0 0.0
    %v5143 = vand.u32 %v4752, 4294901760
    %5144 = vmatpush1.msra.mxu0 %v5143
    %5145 = vmatprep.subr.mxu0 0.0
    %v5146 = vand.u32 %v4751, 4294901760
    %5147 = vmatpush1.msra.mxu0 %v5146
    %5148 = vmatprep.subr.mxu0 0.0
    %v5149 = vand.u32 %v4750, 4294901760
    %5150 = vmatpush1.msra.mxu0 %v5149
    %5151 = vmatprep.subr.mxu0 0.0
    %v5152 = vand.u32 %v4749, 4294901760
    %5153 = vmatpush1.msra.mxu0 %v5152
    %5154 = vmatprep.subr.mxu0 0.0
    %v5155 = vand.u32 %v4748, 4294901760
    %5156 = vmatpush1.msra.mxu0 %v5155
    %5157 = vmatprep.subr.mxu0 0.0
    %v5158 = vand.u32 %v4747, 4294901760
    %5159 = vmatpush1.msra.mxu0 %v5158
    %5160 = vmatprep.subr.mxu0 0.0
    %v5161 = vand.u32 %v4746, 4294901760
    %5162 = vmatpush1.msra.mxu0 %v5161
    %5163 = vmatprep.subr.mxu0 0.0
    %5164 = vmatpush2.msra.mxu0 0.0
    %5165 = vmatprep.subr.mxu0 0.0
    %5166 = vmatpush2.msra.mxu0 0.0
    %5167 = vmatprep.subr.mxu0 0.0
    %5168 = vmatpush2.msra.mxu0 0.0
    %5169 = vmatprep.subr.mxu0 0.0
    %5170 = vmatpush2.msra.mxu0 0.0
    %5171 = vmatprep.subr.mxu0 0.0
    %5172 = vmatpush2.msra.mxu0 0.0
    %5173 = vmatprep.subr.mxu0 0.0
    %5174 = vmatpush2.msra.mxu0 0.0
    %5175 = vmatprep.subr.mxu0 0.0
    %5176 = vmatpush2.msra.mxu0 0.0
    %5177 = vmatprep.subr.mxu0 0.0
    %5178 = vmatpush2.msra.mxu0 0.0
    %5179 = vmatprep.subr.mxu0 0.0
    %5180 = vmatpush2.msra.mxu0 0.0
    %5181 = vmatprep.subr.mxu0 0.0
    %5182 = vmatpush2.msra.mxu0 0.0
    %5183 = vmatprep.subr.mxu0 0.0
    %5184 = vmatpush2.msra.mxu0 0.0
    %5185 = vmatprep.subr.mxu0 0.0
    %5186 = vmatpush2.msra.mxu0 0.0
    %5187 = vmatprep.subr.mxu0 0.0
    %5188 = vmatpush2.msra.mxu0 0.0
    %5189 = vmatprep.subr.mxu0 0.0
    %5190 = vmatpush2.msra.mxu0 0.0
    %5191 = vmatprep.subr.mxu0 0.0
    %5192 = vmatpush2.msra.mxu0 0.0
    %5193 = vmatprep.subr.mxu0 0.0
    %5194 = vmatpush2.msra.mxu0 0.0
    %5195 = vmatprep.mubr.f32.mxu0 0.0
    %v5196 = vand.u32 %v4745, 4294901760
    %v5197 = vsub.f32 %v4745, %v5196
    %v5198 = vand.u32 %v5197, 4294901760
    %5199 = vmatmul.mubr.f32.gmra.mxu0 %v5198
    %v5200 = vpop.f32.mrf.mxu0
    %v5201 = vadd.f32 %v5112, %v5200
    %v5202 = vpop.f32.mrf.mxu0
    %5203 = vdwg.mxu0
    %5204 = vmatprep.subr.mxu0 0.0
    %v5205 = vand.u32 %v4761, 4294901760
    %v5206 = vsub.f32 %v4761, %v5205
    %v5207 = vand.u32 %v5206, 4294901760
    %5208 = vmatpush1.msra.mxu0 %v5207
    %5209 = vmatprep.subr.mxu0 0.0
    %v5210 = vand.u32 %v4760, 4294901760
    %v5211 = vsub.f32 %v4760, %v5210
    %v5212 = vand.u32 %v5211, 4294901760
    %5213 = vmatpush1.msra.mxu0 %v5212
    %5214 = vmatprep.subr.mxu0 0.0
    %v5215 = vand.u32 %v4759, 4294901760
    %v5216 = vsub.f32 %v4759, %v5215
    %v5217 = vand.u32 %v5216, 4294901760
    %5218 = vmatpush1.msra.mxu0 %v5217
    %5219 = vmatprep.subr.mxu0 0.0
    %v5220 = vand.u32 %v4758, 4294901760
    %v5221 = vsub.f32 %v4758, %v5220
    %v5222 = vand.u32 %v5221, 4294901760
    %5223 = vmatpush1.msra.mxu0 %v5222
    %5224 = vmatprep.subr.mxu0 0.0
    %v5225 = vand.u32 %v4757, 4294901760
    %v5226 = vsub.f32 %v4757, %v5225
    %v5227 = vand.u32 %v5226, 4294901760
    %5228 = vmatpush1.msra.mxu0 %v5227
    %5229 = vmatprep.subr.mxu0 0.0
    %v5230 = vand.u32 %v4756, 4294901760
    %v5231 = vsub.f32 %v4756, %v5230
    %v5232 = vand.u32 %v5231, 4294901760
    %5233 = vmatpush1.msra.mxu0 %v5232
    %5234 = vmatprep.subr.mxu0 0.0
    %v5235 = vand.u32 %v4755, 4294901760
    %v5236 = vsub.f32 %v4755, %v5235
    %v5237 = vand.u32 %v5236, 4294901760
    %5238 = vmatpush1.msra.mxu0 %v5237
    %5239 = vmatprep.subr.mxu0 0.0
    %v5240 = vand.u32 %v4754, 4294901760
    %v5241 = vsub.f32 %v4754, %v5240
    %v5242 = vand.u32 %v5241, 4294901760
    %5243 = vmatpush1.msra.mxu0 %v5242
    %5244 = vmatprep.subr.mxu0 0.0
    %v5245 = vand.u32 %v4753, 4294901760
    %v5246 = vsub.f32 %v4753, %v5245
    %v5247 = vand.u32 %v5246, 4294901760
    %5248 = vmatpush1.msra.mxu0 %v5247
    %5249 = vmatprep.subr.mxu0 0.0
    %v5250 = vand.u32 %v4752, 4294901760
    %v5251 = vsub.f32 %v4752, %v5250
    %v5252 = vand.u32 %v5251, 4294901760
    %5253 = vmatpush1.msra.mxu0 %v5252
    %5254 = vmatprep.subr.mxu0 0.0
    %v5255 = vand.u32 %v4751, 4294901760
    %v5256 = vsub.f32 %v4751, %v5255
    %v5257 = vand.u32 %v5256, 4294901760
    %5258 = vmatpush1.msra.mxu0 %v5257
    %5259 = vmatprep.subr.mxu0 0.0
    %v5260 = vand.u32 %v4750, 4294901760
    %v5261 = vsub.f32 %v4750, %v5260
    %v5262 = vand.u32 %v5261, 4294901760
    %5263 = vmatpush1.msra.mxu0 %v5262
    %5264 = vmatprep.subr.mxu0 0.0
    %v5265 = vand.u32 %v4749, 4294901760
    %v5266 = vsub.f32 %v4749, %v5265
    %v5267 = vand.u32 %v5266, 4294901760
    %5268 = vmatpush1.msra.mxu0 %v5267
    %5269 = vmatprep.subr.mxu0 0.0
    %v5270 = vand.u32 %v4748, 4294901760
    %v5271 = vsub.f32 %v4748, %v5270
    %v5272 = vand.u32 %v5271, 4294901760
    %5273 = vmatpush1.msra.mxu0 %v5272
    %5274 = vmatprep.subr.mxu0 0.0
    %v5275 = vand.u32 %v4747, 4294901760
    %v5276 = vsub.f32 %v4747, %v5275
    %v5277 = vand.u32 %v5276, 4294901760
    %5278 = vmatpush1.msra.mxu0 %v5277
    %5279 = vmatprep.subr.mxu0 0.0
    %v5280 = vand.u32 %v4746, 4294901760
    %v5281 = vsub.f32 %v4746, %v5280
    %v5282 = vand.u32 %v5281, 4294901760
    %5283 = vmatpush1.msra.mxu0 %v5282
    %5284 = vmatprep.subr.mxu0 0.0
    %5285 = vmatpush2.msra.mxu0 0.0
    %5286 = vmatprep.subr.mxu0 0.0
    %5287 = vmatpush2.msra.mxu0 0.0
    %5288 = vmatprep.subr.mxu0 0.0
    %5289 = vmatpush2.msra.mxu0 0.0
    %5290 = vmatprep.subr.mxu0 0.0
    %5291 = vmatpush2.msra.mxu0 0.0
    %5292 = vmatprep.subr.mxu0 0.0
    %5293 = vmatpush2.msra.mxu0 0.0
    %5294 = vmatprep.subr.mxu0 0.0
    %5295 = vmatpush2.msra.mxu0 0.0
    %5296 = vmatprep.subr.mxu0 0.0
    %5297 = vmatpush2.msra.mxu0 0.0
    %5298 = vmatprep.subr.mxu0 0.0
    %5299 = vmatpush2.msra.mxu0 0.0
    %5300 = vmatprep.subr.mxu0 0.0
    %5301 = vmatpush2.msra.mxu0 0.0
    %5302 = vmatprep.subr.mxu0 0.0
    %5303 = vmatpush2.msra.mxu0 0.0
    %5304 = vmatprep.subr.mxu0 0.0
    %5305 = vmatpush2.msra.mxu0 0.0
    %5306 = vmatprep.subr.mxu0 0.0
    %5307 = vmatpush2.msra.mxu0 0.0
    %5308 = vmatprep.subr.mxu0 0.0
    %5309 = vmatpush2.msra.mxu0 0.0
    %5310 = vmatprep.subr.mxu0 0.0
    %5311 = vmatpush2.msra.mxu0 0.0
    %5312 = vmatprep.subr.mxu0 0.0
    %5313 = vmatpush2.msra.mxu0 0.0
    %5314 = vmatprep.subr.mxu0 0.0
    %5315 = vmatpush2.msra.mxu0 0.0
    %5316 = vmatprep.mubr.f32.mxu0 0.0
    %v5317 = vand.u32 %v4745, 4294901760
    %5318 = vmatmul.mubr.f32.gmra.mxu0 %v5317
    %v5319 = vpop.f32.mrf.mxu0
    %v5320 = vadd.f32 %v5201, %v5319
    %v5321 = vpop.f32.mrf.mxu0
    %5322 = vdwg.mxu0
    %5323 = vmatprep.subr.mxu0 0.0
    %v5324 = vand.u32 %v4761, 4294901760
    %5325 = vmatpush1.msra.mxu0 %v5324
    %5326 = vmatprep.subr.mxu0 0.0
    %v5327 = vand.u32 %v4760, 4294901760
    %5328 = vmatpush1.msra.mxu0 %v5327
    %5329 = vmatprep.subr.mxu0 0.0
    %v5330 = vand.u32 %v4759, 4294901760
    %5331 = vmatpush1.msra.mxu0 %v5330
    %5332 = vmatprep.subr.mxu0 0.0
    %v5333 = vand.u32 %v4758, 4294901760
    %5334 = vmatpush1.msra.mxu0 %v5333
    %5335 = vmatprep.subr.mxu0 0.0
    %v5336 = vand.u32 %v4757, 4294901760
    %5337 = vmatpush1.msra.mxu0 %v5336
    %5338 = vmatprep.subr.mxu0 0.0
    %v5339 = vand.u32 %v4756, 4294901760
    %5340 = vmatpush1.msra.mxu0 %v5339
    %5341 = vmatprep.subr.mxu0 0.0
    %v5342 = vand.u32 %v4755, 4294901760
    %5343 = vmatpush1.msra.mxu0 %v5342
    %5344 = vmatprep.subr.mxu0 0.0
    %v5345 = vand.u32 %v4754, 4294901760
    %5346 = vmatpush1.msra.mxu0 %v5345
    %5347 = vmatprep.subr.mxu0 0.0
    %v5348 = vand.u32 %v4753, 4294901760
    %5349 = vmatpush1.msra.mxu0 %v5348
    %5350 = vmatprep.subr.mxu0 0.0
    %v5351 = vand.u32 %v4752, 4294901760
    %5352 = vmatpush1.msra.mxu0 %v5351
    %5353 = vmatprep.subr.mxu0 0.0
    %v5354 = vand.u32 %v4751, 4294901760
    %5355 = vmatpush1.msra.mxu0 %v5354
    %5356 = vmatprep.subr.mxu0 0.0
    %v5357 = vand.u32 %v4750, 4294901760
    %5358 = vmatpush1.msra.mxu0 %v5357
    %5359 = vmatprep.subr.mxu0 0.0
    %v5360 = vand.u32 %v4749, 4294901760
    %5361 = vmatpush1.msra.mxu0 %v5360
    %5362 = vmatprep.subr.mxu0 0.0
    %v5363 = vand.u32 %v4748, 4294901760
    %5364 = vmatpush1.msra.mxu0 %v5363
    %5365 = vmatprep.subr.mxu0 0.0
    %v5366 = vand.u32 %v4747, 4294901760
    %5367 = vmatpush1.msra.mxu0 %v5366
    %5368 = vmatprep.subr.mxu0 0.0
    %v5369 = vand.u32 %v4746, 4294901760
    %5370 = vmatpush1.msra.mxu0 %v5369
    %5371 = vmatprep.subr.mxu0 0.0
    %5372 = vmatpush2.msra.mxu0 0.0
    %5373 = vmatprep.subr.mxu0 0.0
    %5374 = vmatpush2.msra.mxu0 0.0
    %5375 = vmatprep.subr.mxu0 0.0
    %5376 = vmatpush2.msra.mxu0 0.0
    %5377 = vmatprep.subr.mxu0 0.0
    %5378 = vmatpush2.msra.mxu0 0.0
    %5379 = vmatprep.subr.mxu0 0.0
    %5380 = vmatpush2.msra.mxu0 0.0
    %5381 = vmatprep.subr.mxu0 0.0
    %5382 = vmatpush2.msra.mxu0 0.0
    %5383 = vmatprep.subr.mxu0 0.0
    %5384 = vmatpush2.msra.mxu0 0.0
    %5385 = vmatprep.subr.mxu0 0.0
    %5386 = vmatpush2.msra.mxu0 0.0
    %5387 = vmatprep.subr.mxu0 0.0
    %5388 = vmatpush2.msra.mxu0 0.0
    %5389 = vmatprep.subr.mxu0 0.0
    %5390 = vmatpush2.msra.mxu0 0.0
    %5391 = vmatprep.subr.mxu0 0.0
    %5392 = vmatpush2.msra.mxu0 0.0
    %5393 = vmatprep.subr.mxu0 0.0
    %5394 = vmatpush2.msra.mxu0 0.0
    %5395 = vmatprep.subr.mxu0 0.0
    %5396 = vmatpush2.msra.mxu0 0.0
    %5397 = vmatprep.subr.mxu0 0.0
    %5398 = vmatpush2.msra.mxu0 0.0
    %5399 = vmatprep.subr.mxu0 0.0
    %5400 = vmatpush2.msra.mxu0 0.0
    %5401 = vmatprep.subr.mxu0 0.0
    %5402 = vmatpush2.msra.mxu0 0.0
    %5403 = vmatprep.mubr.f32.mxu0 0.0
    %v5404 = vand.u32 %v4745, 4294901760
    %5405 = vmatmul.mubr.f32.gmra.mxu0 %v5404
    %v5406 = vpop.f32.mrf.mxu0
    %v5407 = vadd.f32 %v5320, %v5406
    %v5408 = vpop.f32.mrf.mxu0
    %5409 = vdwg.mxu0
    %5410 = vst [vmem:[#allocation10] sm:$0xff] %v5407
    // Predicated region
    $region46: #{tpu_custom_call.1} parent=1 // pred_check
      _
    $region47: #{tpu_custom_call.1} parent=1 // pred_check_branch
      %5412 = sbr.rel (0) target = $region49
    $region48: #{tpu_custom_call.1} parent=1 // pred_region
      %s5414 = ssub.s32 128, 128
      %5415 = vsyncadd [#allocation4], %s5414
      %s5417 = sshll.u32 [#allocation10], 4
      %s5418 = int_to_ptr.vmem [resolvable:$true] %s5417
      %5420 = dma.vmem_to_hbm [thread:$0]  %s5418, 128, %s7, [#allocation4]
    $region49: #{tpu_custom_call.1} parent=1 // pred_fallthru
      _
    // Predicated region
    $region50: #{tpu_custom_call.1} parent=1 // pred_check
      _
    $region51: #{tpu_custom_call.1} parent=1 // pred_check_branch
      %5422 = sbr.rel (0) target = $region53
    $region52: #{tpu_custom_call.1} parent=1 // pred_region
      %5423 = dma.done [#allocation4], 128
    $region53: #{tpu_custom_call.1} parent=1 // pred_fallthru
      _
    %5424 = vsyncpa [#allocation3], 1
    %5425 = vsyncpa [#allocation6], 1
    %5426 = vsyncpa [#allocation9], 1
    %5427 = vsyncpa [#allocation4], 1

</llo_original>
